<compile_context>
chip_gen: v6e
topology: v6e:2x2x1
jax: 0.10.0
libtpu: 0.0.40
codegen_flags: <defaults>
</compile_context>

<pallas_src>
import functools

import jax
import jax.numpy as jnp
from jax import lax
from jax.experimental import pallas as pl
from jax.experimental.pallas import tpu as pltpu


# ----------------------------------------------------------------------------
# small helpers
# ----------------------------------------------------------------------------
def _round_up(x, m):
    return ((x + m - 1) // m) * m


def _row_tile(m, unit=8, target=256):
    """Largest multiple of `unit` that divides m and is <= max(target, unit)."""
    if unit <= 0 or m % unit != 0:
        return m
    best = m
    limit = min(m, max(target, unit))
    k = 1
    while k * unit <= limit:
        if m % (k * unit) == 0:
            best = k * unit
        k += 1
    return best


def _hidden_tile(dm, target=1024):
    """Largest multiple of 128 dividing dm, <= target (else full extent)."""
    best = dm
    k = 1
    while k * 128 <= min(dm, target):
        if dm % (k * 128) == 0:
            best = k * 128
        k += 1
    return best


def _head_group(H, Dh):
    """Smallest head group whose output width is a multiple of 128 lanes."""
    for g in range(1, H + 1):
        if H % g == 0 and (g * Dh) % 128 == 0:
            return g
    return H


@functools.lru_cache(maxsize=1)
def _vmem_limit_bytes():
    # Generation-aware scoped-VMEM request: ~3/4 of physical, capped at 96 MiB.
    # v7x (64 MiB physical) -> 48 MiB; v5e/v6e (128 MiB) -> 96 MiB.
    try:
        info = pltpu.get_tpu_info()
        cap = getattr(info, "vmem_capacity_bytes", None)
        if cap:
            return int(max(32 * 1024 * 1024, min(int(cap) * 3 // 4,
                                                 96 * 1024 * 1024)))
    except Exception:
        pass
    return 48 * 1024 * 1024   # conservative fallback, valid on all generations


# ----------------------------------------------------------------------------
# Pallas kernels (bf16 in, fp32 accumulation; LN / softmax / GELU math in fp32)
# ----------------------------------------------------------------------------
def _linear_kernel(x_ref, w_ref, b_ref, o_ref):
    # o = x @ w + b
    acc = jnp.dot(x_ref[...], w_ref[...], preferred_element_type=jnp.float32)
    o_ref[...] = (acc + b_ref[...]).astype(o_ref.dtype)


def _layernorm_kernel(x_ref, g_ref, b_ref, o_ref):
    # PyTorch LayerNorm semantics: biased variance, eps=1e-5, fp32 math.
    x = x_ref[...].astype(jnp.float32)
    mu = jnp.mean(x, axis=-1, keepdims=True)
    var = jnp.mean((x - mu) * (x - mu), axis=-1, keepdims=True)
    o_ref[...] = ((x - mu) * lax.rsqrt(var + 1e-5) * g_ref[...]
                  + b_ref[...]).astype(o_ref.dtype)


def _ln_linear_kernel(x_ref, g_ref, b_ref, w_ref, bias_ref, o_ref):
    # o = LayerNorm(x) @ w + bias   (LN fused into the QKV projection)
    x = x_ref[...].astype(jnp.float32)
    mu = jnp.mean(x, axis=-1, keepdims=True)
    var = jnp.mean((x - mu) * (x - mu), axis=-1, keepdims=True)
    h = (x - mu) * lax.rsqrt(var + 1e-5) * g_ref[...] + b_ref[...]
    acc = jnp.dot(h.astype(w_ref.dtype), w_ref[...],
                  preferred_element_type=jnp.float32)
    o_ref[...] = (acc + bias_ref[...]).astype(o_ref.dtype)


def _linear_residual_kernel(x_ref, w_ref, b_ref, res_ref, o_ref):
    # o = x @ w + b + res   (residual fused into the attention out-projection)
    acc = jnp.dot(x_ref[...], w_ref[...], preferred_element_type=jnp.float32)
    o_ref[...] = (acc + b_ref[...]
                  + res_ref[...].astype(jnp.float32)).astype(o_ref.dtype)


def _ln_mlp_residual_kernel(x_ref, g_ref, b_ref, w1_ref, b1_ref,
                            w2_ref, b2_ref, o_ref, acc_ref):
    # o = x + W2( QuickGELU( W1( LayerNorm(x) ) ) )
    # Hidden dim Dm is chunked along grid axis 1; acc_ref holds the fp32 partial
    # result so only one (D, tk)/(tk, D) weight slice is resident per step.
    k = pl.program_id(1)

    @pl.when(k == 0)
    def _():
        acc_ref[...] = jnp.zeros_like(acc_ref)

    x = x_ref[...].astype(jnp.float32)
    mu = jnp.mean(x, axis=-1, keepdims=True)
    var = jnp.mean((x - mu) * (x - mu), axis=-1, keepdims=True)
    h = (x - mu) * lax.rsqrt(var + 1e-5) * g_ref[...] + b_ref[...]
    h1 = jnp.dot(h.astype(w1_ref.dtype), w1_ref[...],
                 preferred_element_type=jnp.float32) + b1_ref[...]
    h1 = h1 * jax.nn.sigmoid(1.702 * h1)          # QuickGELU, fp32
    acc_ref[...] += jnp.dot(h1.astype(w2_ref.dtype), w2_ref[...],
                            preferred_element_type=jnp.float32)

    @pl.when(k == pl.num_programs(1) - 1)
    def _():
        o_ref[...] = (x + acc_ref[...] + b2_ref[...]).astype(o_ref.dtype)


def _attention_kernel(q_ref, k_ref, v_ref, o_ref, *, g, Dh, T_real, scale):
    # q/k/v refs: [Tp, g*Dh] column slices of the fused QKV slab for one batch
    # element and one head group.  Padded keys (>= T_real) are masked to -inf.
    Tp = q_ref.shape[0]
    q = q_ref[...]
    kk = k_ref[...]
    vv = v_ref[...]
    key_valid = lax.broadcasted_iota(jnp.int32, (Tp, Tp), 1) < T_real
    outs = []
    for h in range(g):                            # small trace-time unroll (g<=4)
        q_h = q[:, h * Dh:(h + 1) * Dh]
        k_h = kk[:, h * Dh:(h + 1) * Dh]
        v_h = vv[:, h * Dh:(h + 1) * Dh]
        s = lax.dot_general(q_h, k_h, (((1,), (1,)), ((), ())),
                            preferred_element_type=jnp.float32) * scale
        s = jnp.where(key_valid, s, -1e30)        # keep fp32: -1e30 mask value
        s = s - jnp.max(s, axis=-1, keepdims=True)
        p = jnp.exp(s)
        p = p / jnp.sum(p, axis=-1, keepdims=True)    # exact softmax division
        outs.append(jnp.dot(p.astype(v_h.dtype), v_h,
                            preferred_element_type=jnp.float32))
    out = outs[0] if g == 1 else jnp.concatenate(outs, axis=-1)
    o_ref[...] = out.astype(o_ref.dtype)          # lane-dense (g*Dh % 128 == 0)


# ----------------------------------------------------------------------------
# Wrappers
# ----------------------------------------------------------------------------
def pallas_linear(x, w, b, out_dtype=jnp.bfloat16, row_unit=8):
    M, K = x.shape
    _, N = w.shape
    tm = _row_tile(M, unit=row_unit)
    bytes_acc = (x.size * x.dtype.itemsize + w.size * w.dtype.itemsize
                 + M * N * jnp.dtype(out_dtype).itemsize)
    return pl.pallas_call(
        _linear_kernel,
        out_shape=jax.ShapeDtypeStruct((M, N), out_dtype),
        grid=(M // tm,),
        in_specs=[
            pl.BlockSpec((tm, K), lambda i: (i, 0)),
            pl.BlockSpec((K, N), lambda i: (0, 0)),    # weight resident
            pl.BlockSpec((1, N), lambda i: (0, 0)),
        ],
        out_specs=pl.BlockSpec((tm, N), lambda i: (i, 0)),
        compiler_params=pltpu.CompilerParams(
            dimension_semantics=("parallel",),
            vmem_limit_bytes=_vmem_limit_bytes()),
        cost_estimate=pl.CostEstimate(
            flops=2 * M * N * K, transcendentals=0, bytes_accessed=bytes_acc),
    )(x, w, b.reshape(1, N))


def pallas_layernorm(x, g, b, out_dtype=jnp.bfloat16, row_unit=8):
    M, D = x.shape
    tm = _row_tile(M, unit=row_unit)
    return pl.pallas_call(
        _layernorm_kernel,
        out_shape=jax.ShapeDtypeStruct((M, D), out_dtype),
        grid=(M // tm,),
        in_specs=[
            pl.BlockSpec((tm, D), lambda i: (i, 0)),
            pl.BlockSpec((1, D), lambda i: (0, 0)),
            pl.BlockSpec((1, D), lambda i: (0, 0)),
        ],
        out_specs=pl.BlockSpec((tm, D), lambda i: (i, 0)),
        compiler_params=pltpu.CompilerParams(
            dimension_semantics=("parallel",),
            vmem_limit_bytes=_vmem_limit_bytes()),
    )(x, g.reshape(1, D), b.reshape(1, D))


def pallas_ln_linear(x, g, b, w, bias, out_dtype=jnp.bfloat16, row_unit=8):
    # LN + QKV projection; 1-D row grid keeps the [D, 3D] weight resident, no
    # per-column-tile LN recompute, no weight re-streaming per row tile.
    M, K = x.shape
    _, N = w.shape
    tm = _row_tile(M, unit=row_unit)
    bytes_acc = (x.size * x.dtype.itemsize + w.size * w.dtype.itemsize
                 + M * N * jnp.dtype(out_dtype).itemsize)
    return pl.pallas_call(
        _ln_linear_kernel,
        out_shape=jax.ShapeDtypeStruct((M, N), out_dtype),
        grid=(M // tm,),
        in_specs=[
            pl.BlockSpec((tm, K), lambda i: (i, 0)),
            pl.BlockSpec((1, K), lambda i: (0, 0)),
            pl.BlockSpec((1, K), lambda i: (0, 0)),
            pl.BlockSpec((K, N), lambda i: (0, 0)),    # weight resident
            pl.BlockSpec((1, N), lambda i: (0, 0)),
        ],
        out_specs=pl.BlockSpec((tm, N), lambda i: (i, 0)),
        compiler_params=pltpu.CompilerParams(
            dimension_semantics=("parallel",),
            vmem_limit_bytes=_vmem_limit_bytes()),
        cost_estimate=pl.CostEstimate(
            flops=2 * M * N * K, transcendentals=0, bytes_accessed=bytes_acc),
    )(x, g.reshape(1, K), b.reshape(1, K), w, bias.reshape(1, N))


def pallas_linear_residual(x, w, b, res, out_dtype=jnp.bfloat16, row_unit=8):
    M, K = x.shape
    _, N = w.shape
    tm = _row_tile(M, unit=row_unit)
    bytes_acc = (x.size * x.dtype.itemsize + w.size * w.dtype.itemsize
                 + res.size * res.dtype.itemsize
                 + M * N * jnp.dtype(out_dtype).itemsize)
    return pl.pallas_call(
        _linear_residual_kernel,
        out_shape=jax.ShapeDtypeStruct((M, N), out_dtype),
        grid=(M // tm,),
        in_specs=[
            pl.BlockSpec((tm, K), lambda i: (i, 0)),
            pl.BlockSpec((K, N), lambda i: (0, 0)),    # weight resident
            pl.BlockSpec((1, N), lambda i: (0, 0)),
            pl.BlockSpec((tm, N), lambda i: (i, 0)),
        ],
        out_specs=pl.BlockSpec((tm, N), lambda i: (i, 0)),
        compiler_params=pltpu.CompilerParams(
            dimension_semantics=("parallel",),
            vmem_limit_bytes=_vmem_limit_bytes()),
        cost_estimate=pl.CostEstimate(
            flops=2 * M * N * K, transcendentals=0, bytes_accessed=bytes_acc),
    )(x, w, b.reshape(1, N), res)


def pallas_ln_mlp_residual(x, g, b, w1, b1, w2, b2,
                           out_dtype=jnp.bfloat16, row_unit=8):
    # LN2 + MLP + residual, hidden dim chunked on an "arbitrary" grid axis so
    # only a (D, tk)+(tk, D) weight slice is resident per step (v7x VMEM).
    M, D = x.shape
    _, Dm = w1.shape
    tm = _row_tile(M, unit=row_unit)
    tk = _hidden_tile(Dm)
    rows, nk = M // tm, Dm // tk
    bytes_acc = (x.size * x.dtype.itemsize
                 + rows * (w1.size * w1.dtype.itemsize
                           + w2.size * w2.dtype.itemsize)
                 + M * D * jnp.dtype(out_dtype).itemsize)
    return pl.pallas_call(
        _ln_mlp_residual_kernel,
        out_shape=jax.ShapeDtypeStruct((M, D), out_dtype),
        grid=(rows, nk),
        in_specs=[
            pl.BlockSpec((tm, D), lambda i, k: (i, 0)),
            pl.BlockSpec((1, D), lambda i, k: (0, 0)),
            pl.BlockSpec((1, D), lambda i, k: (0, 0)),
            pl.BlockSpec((D, tk), lambda i, k: (0, k)),   # w1 hidden chunk
            pl.BlockSpec((1, tk), lambda i, k: (0, k)),
            pl.BlockSpec((tk, D), lambda i, k: (k, 0)),   # w2 hidden chunk
            pl.BlockSpec((1, D), lambda i, k: (0, 0)),
        ],
        out_specs=pl.BlockSpec((tm, D), lambda i, k: (i, 0)),
        scratch_shapes=[pltpu.VMEM((tm, D), jnp.float32)],
        compiler_params=pltpu.CompilerParams(
            dimension_semantics=("parallel", "arbitrary"),
            vmem_limit_bytes=_vmem_limit_bytes()),
        cost_estimate=pl.CostEstimate(
            flops=4 * M * D * Dm, transcendentals=M * Dm,
            bytes_accessed=bytes_acc),
    )(x, g.reshape(1, D), b.reshape(1, D), w1, b1.reshape(1, Dm),
      w2, b2.reshape(1, D))


def pallas_attention(qkv, *, B, Tp, H, Dh, T_real, scale,
                     out_dtype=jnp.bfloat16):
    # Grid (B, H/g): more parallel grid points for megacore; the QKV slab is
    # consumed via three column-sliced BlockSpecs (q / k / v head-group blocks),
    # so no full [Tp, 3D] slab is ever resident and output stores are 128-lane
    # dense.
    D = H * Dh
    g = _head_group(H, Dh)
    Hg = H // g
    W = g * Dh
    kern = functools.partial(_attention_kernel, g=g, Dh=Dh,
                             T_real=T_real, scale=scale)
    bytes_acc = (qkv.size * qkv.dtype.itemsize
                 + B * Tp * D * jnp.dtype(out_dtype).itemsize)
    return pl.pallas_call(
        kern,
        out_shape=jax.ShapeDtypeStruct((B * Tp, D), out_dtype),
        grid=(B, Hg),
        in_specs=[
            pl.BlockSpec((Tp, W), lambda b, hp: (b, hp)),             # q group
            pl.BlockSpec((Tp, W), lambda b, hp: (b, Hg + hp)),        # k group
            pl.BlockSpec((Tp, W), lambda b, hp: (b, 2 * Hg + hp)),    # v group
        ],
        out_specs=pl.BlockSpec((Tp, W), lambda b, hp: (b, hp)),
        compiler_params=pltpu.CompilerParams(
            dimension_semantics=("parallel", "parallel"),
            vmem_limit_bytes=_vmem_limit_bytes()),
        cost_estimate=pl.CostEstimate(
            flops=4 * B * H * Tp * Tp * Dh,
            transcendentals=B * H * Tp * Tp,
            bytes_accessed=bytes_acc),
    )(qkv, qkv, qkv)


# ----------------------------------------------------------------------------
# CLIP VisionTransformer forward (image -> embeds) + ln_vision
# ----------------------------------------------------------------------------
def image_encoder_forward(image, params, cfg):
    B, C, S, _ = image.shape
    P, D, H = cfg["patch"], cfg["width"], cfg["heads"]
    G = S // P
    T = G * G
    T1 = T + 1
    Dh = D // H
    scale = 1.0 / (Dh ** 0.5)
    Tp = _round_up(T1, 16)         # bf16 sublane packing: pad tokens to mult of 16

    # --- patch embed (Conv2d kernel=stride=P) as a matmul ---------------------
    K = C * P * P
    Kp = _round_up(K, 128)         # pad contraction dim for clean MXU feed
    patches = (image.reshape(B, C, G, P, G, P)
               .transpose(0, 2, 4, 1, 3, 5)
               .reshape(B * T, K)
               .astype(jnp.bfloat16))
    patches = jnp.pad(patches, ((0, 0), (0, Kp - K)))
    x = pallas_linear(patches, params["conv_w"], params["conv_b"])   # [B*T, D]
    x = x.reshape(B, T, D)

    # --- class token + positional embedding (cheap JAX glue) -----------------
    cls = jnp.broadcast_to(params["class_embedding"].reshape(1, 1, D),
                           (B, 1, D)).astype(x.dtype)
    x = jnp.concatenate([cls, x], axis=1)                            # [B, T1, D]
    x = (x.astype(jnp.float32) + params["pos_embedding"][None]).astype(jnp.bfloat16)

    # pad tokens to Tp; padded KEY positions are masked inside attention so
    # results for the real T1 tokens are unchanged; padded rows are sliced off.
    x = jnp.pad(x, ((0, 0), (0, Tp - T1), (0, 0)))
    x2 = x.reshape(B * Tp, D)

    # --- ln_pre ---------------------------------------------------------------
    x2 = pallas_layernorm(x2, params["ln_pre_g"], params["ln_pre_b"], row_unit=Tp)

    # --- transformer blocks (pre-LN, MHA + QuickGELU MLP), fused kernels ------
    for lp in params["layers"]:
        # LN1 + QKV projection fused; output [B*Tp, 3D]
        qkv = pallas_ln_linear(x2, lp["ln1_g"], lp["ln1_b"],
                               lp["in_proj_w_t"], lp["in_proj_b"], row_unit=Tp)
        # multi-head attention straight off the fused QKV slab
        attn = pallas_attention(qkv, B=B, Tp=Tp, H=H, Dh=Dh,
                                T_real=T1, scale=scale)              # [B*Tp, D]
        # out-projection with fused residual add
        x2 = pallas_linear_residual(attn, lp["out_proj_w_t"],
                                    lp["out_proj_b"], x2, row_unit=Tp)
        # LN2 + MLP + residual, hidden-dim-chunked
        x2 = pallas_ln_mlp_residual(x2, lp["ln2_g"], lp["ln2_b"],
                                    lp["fc_w_t"], lp["fc_b"],
                                    lp["proj_w_t"], lp["proj_b"], row_unit=Tp)

    # --- ln_vision (external LayerNorm, as in ImageEncoder.forward) ----------
    out = pallas_layernorm(x2, params["ln_vis_g"], params["ln_vis_b"],
                           out_dtype=jnp.float32, row_unit=Tp)
    out = out.reshape(B, Tp, D)[:, :T1, :]
    return out


# ----------------------------------------------------------------------------
# Deterministic parameter init (shapes implied by the CLIP ViT __init__;
# real model uses width=1024, layers=23, heads=16, patch=14 -- scaled down).
# Weights in bf16, biases / LN params / embeddings in fp32.
# ----------------------------------------------------------------------------
def init_params(key, cfg):
    C, P, D, L = cfg["channels"], cfg["patch"], cfg["width"], cfg["layers"]
    S = cfg["image_size"]
    T1 = (S // P) ** 2 + 1
    Dm = 4 * D
    K = C * P * P
    Kp = _round_up(K, 128)

    def nrm(k, shape, s=0.02):
        return jax.random.normal(k, shape, dtype=jnp.float32) * s

    keys = jax.random.split(key, 4 + L)
    # Conv2d(C, D, kernel=P, stride=P, bias=False) flattened to [K, D], then
    # zero-padded along the contraction dim to Kp.
    conv_w = nrm(keys[0], (D, C, P, P)).reshape(D, K).T
    conv_w = jnp.pad(conv_w, ((0, Kp - K), (0, 0)))
    params = {
        "conv_w": conv_w.astype(jnp.bfloat16),
        "conv_b": jnp.zeros((D,), jnp.float32),
        "class_embedding": nrm(keys[1], (D,)),
        "pos_embedding": nrm(keys[2], (T1, D)),
        "ln_pre_g": jnp.ones((D,), jnp.float32),
        "ln_pre_b": jnp.zeros((D,), jnp.float32),
        "ln_vis_g": jnp.ones((D,), jnp.float32),
        "ln_vis_b": jnp.zeros((D,), jnp.float32),
        "layers": [],
    }
    for li in range(L):
        lk = jax.random.split(keys[4 + li], 4)
        params["layers"].append({
            "ln1_g": jnp.ones((D,), jnp.float32),
            "ln1_b": jnp.zeros((D,), jnp.float32),
            # nn.MultiheadAttention: in_proj_weight [3D, D] -> pre-transposed
            "in_proj_w_t": nrm(lk[0], (3 * D, D)).T.astype(jnp.bfloat16),
            "in_proj_b": jnp.zeros((3 * D,), jnp.float32),
            "out_proj_w_t": nrm(lk[1], (D, D)).T.astype(jnp.bfloat16),
            "out_proj_b": jnp.zeros((D,), jnp.float32),
            "ln2_g": jnp.ones((D,), jnp.float32),
            "ln2_b": jnp.zeros((D,), jnp.float32),
            # mlp: c_fc [4D, D], c_proj [D, 4D] -> pre-transposed
            "fc_w_t": nrm(lk[2], (Dm, D)).T.astype(jnp.bfloat16),
            "fc_b": jnp.zeros((Dm,), jnp.float32),
            "proj_w_t": nrm(lk[3], (D, Dm)).T.astype(jnp.bfloat16),
            "proj_b": jnp.zeros((D,), jnp.float32),
        })
    return params


if __name__ == "__main__":
    # Small config consistent with the CLIP ViT structure (patch conv, CLS
    # token, pre-LN transformer, external ln_vision).
    cfg = {
        "image_size": 28,   # -> 2x2 = 4 patches, 5 tokens incl. CLS (padded to 16)
        "patch": 14,
        "channels": 3,
        "width": 128,
        "heads": 4,
        "layers": 2,
    }
    key = jax.random.PRNGKey(0)
    pkey, xkey = jax.random.split(key)
    params = init_params(pkey, cfg)

    # NCHW image input, same convention as the PyTorch module.
    image = jax.random.normal(
        xkey, (2, cfg["channels"], cfg["image_size"], cfg["image_size"]),
        dtype=jnp.float32)

    fwd = jax.jit(functools.partial(image_encoder_forward, cfg=cfg))
    out = fwd(image, params)
    out = jax.block_until_ready(out)

    B = image.shape[0]
    T1 = (cfg["image_size"] // cfg["patch"]) ** 2 + 1
    assert out.shape == (B, T1, cfg["width"]), out.shape
    assert out.dtype == jnp.float32
    assert bool(jnp.all(jnp.isfinite(out)))
    print("KERNEL_OK")
</pallas_src>

<mosaic_0001>
module attributes {stable_mosaic.version = 11 : i64} {
  func.func @_linear_kernel(%arg0: i32, %arg1: memref<8x640xbf16, #tpu.memory_space<vmem>>, %arg2: memref<640x128xbf16, #tpu.memory_space<vmem>>, %arg3: memref<1x128xf32, #tpu.memory_space<vmem>>, %arg4: memref<8x128xbf16, #tpu.memory_space<vmem>>) attributes {dimension_semantics = [#tpu.dimension_semantics<parallel>], iteration_bounds = array<i64: 1>, scalar_prefetch = 0 : i64, scratch_operands = 0 : i64, tpu.core_type = #tpu.core_type<tc>, window_params = [{transform_indices = @transform_0, window_bounds = array<i64: 8, 640>}, {pipeline_mode = #tpu.pipeline_mode<synchronous>, transform_indices = @transform_1, window_bounds = array<i64: 640, 128>}, {pipeline_mode = #tpu.pipeline_mode<synchronous>, transform_indices = @transform_2, window_bounds = array<i64: 1, 128>}, {transform_indices = @transform_3, window_bounds = array<i64: 8, 128>}]} {
    %c0 = arith.constant 0 : index
    %c0_0 = arith.constant 0 : index
    %0 = vector.load %arg1[%c0, %c0_0] : memref<8x640xbf16, #tpu.memory_space<vmem>>, vector<8x640xbf16>
    %c0_1 = arith.constant 0 : index
    %c0_2 = arith.constant 0 : index
    %1 = vector.load %arg2[%c0_1, %c0_2] : memref<640x128xbf16, #tpu.memory_space<vmem>>, vector<640x128xbf16>
    %cst = arith.constant dense<0.000000e+00> : vector<8x128xf32>
    %2 = tpu.matmul %0, %1, %cst {dimension_numbers = #tpu.dot_dimension_numbers<[1], [0], [0], [1], [0, 0, 1, 1], [], []>} : vector<8x640xbf16>, vector<640x128xbf16>, vector<8x128xf32> -> vector<8x128xf32>
    %c0_3 = arith.constant 0 : index
    %c0_4 = arith.constant 0 : index
    %3 = vector.load %arg3[%c0_3, %c0_4] : memref<1x128xf32, #tpu.memory_space<vmem>>, vector<1x128xf32>
    %4 = vector.broadcast %3 : vector<1x128xf32> to vector<8x128xf32>
    %5 = arith.addf %2, %4 : vector<8x128xf32>
    %6 = arith.truncf %5 : vector<8x128xf32> to vector<8x128xbf16>
    %c0_5 = arith.constant 0 : index
    %c0_6 = arith.constant 0 : index
    %7 = vector.load %arg4[%c0_5, %c0_6] : memref<8x128xbf16, #tpu.memory_space<vmem>>, vector<8x128xbf16>
    tpu.vector_store %arg4[%c0_5, %c0_6], %6 {strides = array<i32>} : memref<8x128xbf16, #tpu.memory_space<vmem>>, vector<8x128xbf16>,
    return
  }
  func.func @transform_0(%arg0: i32) -> (i32, i32) {
    %c0_i32 = arith.constant 0 : i32
    %c0_i32_0 = arith.constant 0 : i32
    return %arg0, %c0_i32 : i32, i32
  }
  func.func @transform_1(%arg0: i32) -> (i32, i32) {
    %c0_i32 = arith.constant 0 : i32
    %c0_i32_0 = arith.constant 0 : i32
    %c0_i32_1 = arith.constant 0 : i32
    return %c0_i32, %c0_i32_0 : i32, i32
  }
  func.func @transform_2(%arg0: i32) -> (i32, i32) {
    %c0_i32 = arith.constant 0 : i32
    %c0_i32_0 = arith.constant 0 : i32
    %c0_i32_1 = arith.constant 0 : i32
    return %c0_i32, %c0_i32_0 : i32, i32
  }
  func.func @transform_3(%arg0: i32) -> (i32, i32) {
    %c0_i32 = arith.constant 0 : i32
    %c0_i32_0 = arith.constant 0 : i32
    return %arg0, %c0_i32 : i32, i32
  }
}

module attributes {stable_mosaic.version = 11 : i64} {
  func.func @_layernorm_kernel(%arg0: i32, %arg1: memref<32x128xbf16, #tpu.memory_space<vmem>>, %arg2: memref<1x128xf32, #tpu.memory_space<vmem>>, %arg3: memref<1x128xf32, #tpu.memory_space<vmem>>, %arg4: memref<32x128xbf16, #tpu.memory_space<vmem>>) attributes {dimension_semantics = [#tpu.dimension_semantics<parallel>], iteration_bounds = array<i64: 1>, scalar_prefetch = 0 : i64, scratch_operands = 0 : i64, tpu.core_type = #tpu.core_type<tc>, window_params = [{transform_indices = @transform_0, window_bounds = array<i64: 32, 128>}, {pipeline_mode = #tpu.pipeline_mode<synchronous>, transform_indices = @transform_1, window_bounds = array<i64: 1, 128>}, {pipeline_mode = #tpu.pipeline_mode<synchronous>, transform_indices = @transform_2, window_bounds = array<i64: 1, 128>}, {transform_indices = @transform_3, window_bounds = array<i64: 32, 128>}]} {
    %c0 = arith.constant 0 : index
    %c0_0 = arith.constant 0 : index
    %0 = vector.load %arg1[%c0, %c0_0] : memref<32x128xbf16, #tpu.memory_space<vmem>>, vector<32x128xbf16>
    %1 = arith.extf %0 : vector<32x128xbf16> to vector<32x128xf32>
    %cst = arith.constant dense<0.000000e+00> : vector<32xf32>
    %2 = vector.multi_reduction <add>, %1, %cst [1] : vector<32x128xf32> to vector<32xf32>
    %3 = vector.shape_cast %2 : vector<32xf32> to vector<32x1xf32>
    %cst_1 = arith.constant 1.280000e+02 : f32
    %4 = vector.broadcast %cst_1 : f32 to vector<32x1xf32>
    %5 = arith.divf %3, %4 : vector<32x1xf32>
    %6 = vector.broadcast %5 : vector<32x1xf32> to vector<32x128xf32>
    %7 = arith.subf %1, %6 : vector<32x128xf32>
    %8 = vector.broadcast %5 : vector<32x1xf32> to vector<32x128xf32>
    %9 = arith.subf %1, %8 : vector<32x128xf32>
    %10 = arith.mulf %7, %9 : vector<32x128xf32>
    %cst_2 = arith.constant dense<0.000000e+00> : vector<32xf32>
    %11 = vector.multi_reduction <add>, %10, %cst_2 [1] : vector<32x128xf32> to vector<32xf32>
    %12 = vector.shape_cast %11 : vector<32xf32> to vector<32x1xf32>
    %cst_3 = arith.constant 1.280000e+02 : f32
    %13 = vector.broadcast %cst_3 : f32 to vector<32x1xf32>
    %14 = arith.divf %12, %13 : vector<32x1xf32>
    %15 = vector.broadcast %5 : vector<32x1xf32> to vector<32x128xf32>
    %16 = arith.subf %1, %15 : vector<32x128xf32>
    %cst_4 = arith.constant 9.99999974E-6 : f32
    %17 = vector.broadcast %cst_4 : f32 to vector<32x1xf32>
    %18 = arith.addf %14, %17 : vector<32x1xf32>
    %19 = math.rsqrt %18 : vector<32x1xf32>
    %20 = vector.broadcast %19 : vector<32x1xf32> to vector<32x128xf32>
    %21 = arith.mulf %16, %20 : vector<32x128xf32>
    %c0_5 = arith.constant 0 : index
    %c0_6 = arith.constant 0 : index
    %22 = vector.load %arg2[%c0_5, %c0_6] : memref<1x128xf32, #tpu.memory_space<vmem>>, vector<1x128xf32>
    %23 = vector.broadcast %22 : vector<1x128xf32> to vector<32x128xf32>
    %24 = arith.mulf %21, %23 : vector<32x128xf32>
    %c0_7 = arith.constant 0 : index
    %c0_8 = arith.constant 0 : index
    %25 = vector.load %arg3[%c0_7, %c0_8] : memref<1x128xf32, #tpu.memory_space<vmem>>, vector<1x128xf32>
    %26 = vector.broadcast %25 : vector<1x128xf32> to vector<32x128xf32>
    %27 = arith.addf %24, %26 : vector<32x128xf32>
    %28 = arith.truncf %27 : vector<32x128xf32> to vector<32x128xbf16>
    %c0_9 = arith.constant 0 : index
    %c0_10 = arith.constant 0 : index
    %29 = vector.load %arg4[%c0_9, %c0_10] : memref<32x128xbf16, #tpu.memory_space<vmem>>, vector<32x128xbf16>
    tpu.vector_store %arg4[%c0_9, %c0_10], %28 {strides = array<i32>} : memref<32x128xbf16, #tpu.memory_space<vmem>>, vector<32x128xbf16>,
    return
  }
  func.func @transform_0(%arg0: i32) -> (i32, i32) {
    %c0_i32 = arith.constant 0 : i32
    %c0_i32_0 = arith.constant 0 : i32
    return %arg0, %c0_i32 : i32, i32
  }
  func.func @transform_1(%arg0: i32) -> (i32, i32) {
    %c0_i32 = arith.constant 0 : i32
    %c0_i32_0 = arith.constant 0 : i32
    %c0_i32_1 = arith.constant 0 : i32
    return %c0_i32, %c0_i32_0 : i32, i32
  }
  func.func @transform_2(%arg0: i32) -> (i32, i32) {
    %c0_i32 = arith.constant 0 : i32
    %c0_i32_0 = arith.constant 0 : i32
    %c0_i32_1 = arith.constant 0 : i32
    return %c0_i32, %c0_i32_0 : i32, i32
  }
  func.func @transform_3(%arg0: i32) -> (i32, i32) {
    %c0_i32 = arith.constant 0 : i32
    %c0_i32_0 = arith.constant 0 : i32
    return %arg0, %c0_i32 : i32, i32
  }
}

module attributes {stable_mosaic.version = 11 : i64} {
  func.func @_ln_linear_kernel(%arg0: i32, %arg1: memref<32x128xbf16, #tpu.memory_space<vmem>>, %arg2: memref<1x128xf32, #tpu.memory_space<vmem>>, %arg3: memref<1x128xf32, #tpu.memory_space<vmem>>, %arg4: memref<128x384xbf16, #tpu.memory_space<vmem>>, %arg5: memref<1x384xf32, #tpu.memory_space<vmem>>, %arg6: memref<32x384xbf16, #tpu.memory_space<vmem>>) attributes {dimension_semantics = [#tpu.dimension_semantics<parallel>], iteration_bounds = array<i64: 1>, scalar_prefetch = 0 : i64, scratch_operands = 0 : i64, tpu.core_type = #tpu.core_type<tc>, window_params = [{transform_indices = @transform_0, window_bounds = array<i64: 32, 128>}, {pipeline_mode = #tpu.pipeline_mode<synchronous>, transform_indices = @transform_1, window_bounds = array<i64: 1, 128>}, {pipeline_mode = #tpu.pipeline_mode<synchronous>, transform_indices = @transform_2, window_bounds = array<i64: 1, 128>}, {pipeline_mode = #tpu.pipeline_mode<synchronous>, transform_indices = @transform_3, window_bounds = array<i64: 128, 384>}, {pipeline_mode = #tpu.pipeline_mode<synchronous>, transform_indices = @transform_4, window_bounds = array<i64: 1, 384>}, {transform_indices = @transform_5, window_bounds = array<i64: 32, 384>}]} {
    %c0 = arith.constant 0 : index
    %c0_0 = arith.constant 0 : index
    %0 = vector.load %arg1[%c0, %c0_0] : memref<32x128xbf16, #tpu.memory_space<vmem>>, vector<32x128xbf16>
    %1 = arith.extf %0 : vector<32x128xbf16> to vector<32x128xf32>
    %cst = arith.constant dense<0.000000e+00> : vector<32xf32>
    %2 = vector.multi_reduction <add>, %1, %cst [1] : vector<32x128xf32> to vector<32xf32>
    %3 = vector.shape_cast %2 : vector<32xf32> to vector<32x1xf32>
    %cst_1 = arith.constant 1.280000e+02 : f32
    %4 = vector.broadcast %cst_1 : f32 to vector<32x1xf32>
    %5 = arith.divf %3, %4 : vector<32x1xf32>
    %6 = vector.broadcast %5 : vector<32x1xf32> to vector<32x128xf32>
    %7 = arith.subf %1, %6 : vector<32x128xf32>
    %8 = vector.broadcast %5 : vector<32x1xf32> to vector<32x128xf32>
    %9 = arith.subf %1, %8 : vector<32x128xf32>
    %10 = arith.mulf %7, %9 : vector<32x128xf32>
    %cst_2 = arith.constant dense<0.000000e+00> : vector<32xf32>
    %11 = vector.multi_reduction <add>, %10, %cst_2 [1] : vector<32x128xf32> to vector<32xf32>
    %12 = vector.shape_cast %11 : vector<32xf32> to vector<32x1xf32>
    %cst_3 = arith.constant 1.280000e+02 : f32
    %13 = vector.broadcast %cst_3 : f32 to vector<32x1xf32>
    %14 = arith.divf %12, %13 : vector<32x1xf32>
    %15 = vector.broadcast %5 : vector<32x1xf32> to vector<32x128xf32>
    %16 = arith.subf %1, %15 : vector<32x128xf32>
    %cst_4 = arith.constant 9.99999974E-6 : f32
    %17 = vector.broadcast %cst_4 : f32 to vector<32x1xf32>
    %18 = arith.addf %14, %17 : vector<32x1xf32>
    %19 = math.rsqrt %18 : vector<32x1xf32>
    %20 = vector.broadcast %19 : vector<32x1xf32> to vector<32x128xf32>
    %21 = arith.mulf %16, %20 : vector<32x128xf32>
    %c0_5 = arith.constant 0 : index
    %c0_6 = arith.constant 0 : index
    %22 = vector.load %arg2[%c0_5, %c0_6] : memref<1x128xf32, #tpu.memory_space<vmem>>, vector<1x128xf32>
    %23 = vector.broadcast %22 : vector<1x128xf32> to vector<32x128xf32>
    %24 = arith.mulf %21, %23 : vector<32x128xf32>
    %c0_7 = arith.constant 0 : index
    %c0_8 = arith.constant 0 : index
    %25 = vector.load %arg3[%c0_7, %c0_8] : memref<1x128xf32, #tpu.memory_space<vmem>>, vector<1x128xf32>
    %26 = vector.broadcast %25 : vector<1x128xf32> to vector<32x128xf32>
    %27 = arith.addf %24, %26 : vector<32x128xf32>
    %28 = arith.truncf %27 : vector<32x128xf32> to vector<32x128xbf16>
    %c0_9 = arith.constant 0 : index
    %c0_10 = arith.constant 0 : index
    %29 = vector.load %arg4[%c0_9, %c0_10] : memref<128x384xbf16, #tpu.memory_space<vmem>>, vector<128x384xbf16>
    %cst_11 = arith.constant dense<0.000000e+00> : vector<32x384xf32>
    %30 = tpu.matmul %28, %29, %cst_11 {dimension_numbers = #tpu.dot_dimension_numbers<[1], [0], [0], [1], [0, 0, 1, 1], [], []>} : vector<32x128xbf16>, vector<128x384xbf16>, vector<32x384xf32> -> vector<32x384xf32>
    %c0_12 = arith.constant 0 : index
    %c0_13 = arith.constant 0 : index
    %31 = vector.load %arg5[%c0_12, %c0_13] : memref<1x384xf32, #tpu.memory_space<vmem>>, vector<1x384xf32>
    %32 = vector.broadcast %31 : vector<1x384xf32> to vector<32x384xf32>
    %33 = arith.addf %30, %32 : vector<32x384xf32>
    %34 = arith.truncf %33 : vector<32x384xf32> to vector<32x384xbf16>
    %c0_14 = arith.constant 0 : index
    %c0_15 = arith.constant 0 : index
    %35 = vector.load %arg6[%c0_14, %c0_15] : memref<32x384xbf16, #tpu.memory_space<vmem>>, vector<32x384xbf16>
    tpu.vector_store %arg6[%c0_14, %c0_15], %34 {strides = array<i32>} : memref<32x384xbf16, #tpu.memory_space<vmem>>, vector<32x384xbf16>,
    return
  }
  func.func @transform_0(%arg0: i32) -> (i32, i32) {
    %c0_i32 = arith.constant 0 : i32
    %c0_i32_0 = arith.constant 0 : i32
    return %arg0, %c0_i32 : i32, i32
  }
  func.func @transform_1(%arg0: i32) -> (i32, i32) {
    %c0_i32 = arith.constant 0 : i32
    %c0_i32_0 = arith.constant 0 : i32
    %c0_i32_1 = arith.constant 0 : i32
    return %c0_i32, %c0_i32_0 : i32, i32
  }
  func.func @transform_2(%arg0: i32) -> (i32, i32) {
    %c0_i32 = arith.constant 0 : i32
    %c0_i32_0 = arith.constant 0 : i32
    %c0_i32_1 = arith.constant 0 : i32
    return %c0_i32, %c0_i32_0 : i32, i32
  }
  func.func @transform_3(%arg0: i32) -> (i32, i32) {
    %c0_i32 = arith.constant 0 : i32
    %c0_i32_0 = arith.constant 0 : i32
    %c0_i32_1 = arith.constant 0 : i32
    return %c0_i32, %c0_i32_0 : i32, i32
  }
  func.func @transform_4(%arg0: i32) -> (i32, i32) {
    %c0_i32 = arith.constant 0 : i32
    %c0_i32_0 = arith.constant 0 : i32
    %c0_i32_1 = arith.constant 0 : i32
    return %c0_i32, %c0_i32_0 : i32, i32
  }
  func.func @transform_5(%arg0: i32) -> (i32, i32) {
    %c0_i32 = arith.constant 0 : i32
    %c0_i32_0 = arith.constant 0 : i32
    return %arg0, %c0_i32 : i32, i32
  }
}

module attributes {stable_mosaic.version = 11 : i64} {
  func.func @_attention_kernel(%arg0: i32, %arg1: i32, %arg2: memref<16x128xbf16, #tpu.memory_space<vmem>>, %arg3: memref<16x128xbf16, #tpu.memory_space<vmem>>, %arg4: memref<16x128xbf16, #tpu.memory_space<vmem>>, %arg5: memref<16x128xbf16, #tpu.memory_space<vmem>>) attributes {dimension_semantics = [#tpu.dimension_semantics<parallel>, #tpu.dimension_semantics<parallel>], iteration_bounds = array<i64: 2, 1>, scalar_prefetch = 0 : i64, scratch_operands = 0 : i64, tpu.core_type = #tpu.core_type<tc>, window_params = [{transform_indices = @transform_0, window_bounds = array<i64: 16, 128>}, {transform_indices = @transform_1, window_bounds = array<i64: 16, 128>}, {transform_indices = @transform_2, window_bounds = array<i64: 16, 128>}, {transform_indices = @transform_3, window_bounds = array<i64: 16, 128>}]} {
    %c0 = arith.constant 0 : index
    %c0_0 = arith.constant 0 : index
    %0 = vector.load %arg2[%c0, %c0_0] : memref<16x128xbf16, #tpu.memory_space<vmem>>, vector<16x128xbf16>
    %c0_1 = arith.constant 0 : index
    %c0_2 = arith.constant 0 : index
    %1 = vector.load %arg3[%c0_1, %c0_2] : memref<16x128xbf16, #tpu.memory_space<vmem>>, vector<16x128xbf16>
    %c0_3 = arith.constant 0 : index
    %c0_4 = arith.constant 0 : index
    %2 = vector.load %arg4[%c0_3, %c0_4] : memref<16x128xbf16, #tpu.memory_space<vmem>>, vector<16x128xbf16>
    %3 = tpu.iota {dimensions = array<i32: 1>} : vector<16x16xi32>
    %c5_i32 = arith.constant 5 : i32
    %4 = vector.broadcast %c5_i32 : i32 to vector<16x16xi32>
    %5 = arith.cmpi slt, %3, %4 : vector<16x16xi32>
    %6 = vector.extract_strided_slice %0 {offsets = [0, 0], sizes = [16, 32], strides = [1, 1]} : vector<16x128xbf16> to vector<16x32xbf16>
    %7 = vector.extract_strided_slice %1 {offsets = [0, 0], sizes = [16, 32], strides = [1, 1]} : vector<16x128xbf16> to vector<16x32xbf16>
    %8 = vector.extract_strided_slice %2 {offsets = [0, 0], sizes = [16, 32], strides = [1, 1]} : vector<16x128xbf16> to vector<16x32xbf16>
    %cst = arith.constant dense<0.000000e+00> : vector<16x16xf32>
    %9 = tpu.matmul %6, %7, %cst {dimension_numbers = #tpu.dot_dimension_numbers<[1], [1], [0], [0], [0, 0, 1, 0], [], []>} : vector<16x32xbf16>, vector<16x32xbf16>, vector<16x16xf32> -> vector<16x16xf32>
    %cst_5 = arith.constant 0.176776692 : f32
    %10 = vector.broadcast %cst_5 : f32 to vector<16x16xf32>
    %11 = arith.mulf %9, %10 : vector<16x16xf32>
    %cst_6 = arith.constant -1.000000e+30 : f32
    %12 = vector.broadcast %cst_6 : f32 to vector<16x16xf32>
    %13 = arith.select %5, %11, %12 : vector<16x16xi1>, vector<16x16xf32>
    %cst_7 = arith.constant dense<0xFF800000> : vector<16xf32>
    %14 = vector.multi_reduction <maximumf>, %13, %cst_7 [1] : vector<16x16xf32> to vector<16xf32>
    %15 = vector.shape_cast %14 : vector<16xf32> to vector<16x1xf32>
    %16 = vector.broadcast %15 : vector<16x1xf32> to vector<16x16xf32>
    %17 = arith.subf %13, %16 : vector<16x16xf32>
    %18 = math.exp %17 : vector<16x16xf32>
    %cst_8 = arith.constant dense<0.000000e+00> : vector<16xf32>
    %19 = vector.multi_reduction <add>, %18, %cst_8 [1] : vector<16x16xf32> to vector<16xf32>
    %20 = vector.shape_cast %19 : vector<16xf32> to vector<16x1xf32>
    %21 = vector.broadcast %20 : vector<16x1xf32> to vector<16x16xf32>
    %22 = arith.divf %18, %21 : vector<16x16xf32>
    %23 = arith.truncf %22 : vector<16x16xf32> to vector<16x16xbf16>
    %cst_9 = arith.constant dense<0.000000e+00> : vector<16x32xf32>
    %24 = tpu.matmul %23, %8, %cst_9 {dimension_numbers = #tpu.dot_dimension_numbers<[1], [0], [0], [1], [0, 0, 1, 1], [], []>} : vector<16x16xbf16>, vector<16x32xbf16>, vector<16x32xf32> -> vector<16x32xf32>
    %25 = vector.extract_strided_slice %0 {offsets = [0, 32], sizes = [16, 32], strides = [1, 1]} : vector<16x128xbf16> to vector<16x32xbf16>
    %26 = vector.extract_strided_slice %1 {offsets = [0, 32], sizes = [16, 32], strides = [1, 1]} : vector<16x128xbf16> to vector<16x32xbf16>
    %27 = vector.extract_strided_slice %2 {offsets = [0, 32], sizes = [16, 32], strides = [1, 1]} : vector<16x128xbf16> to vector<16x32xbf16>
    %cst_10 = arith.constant dense<0.000000e+00> : vector<16x16xf32>
    %28 = tpu.matmul %25, %26, %cst_10 {dimension_numbers = #tpu.dot_dimension_numbers<[1], [1], [0], [0], [0, 0, 1, 0], [], []>} : vector<16x32xbf16>, vector<16x32xbf16>, vector<16x16xf32> -> vector<16x16xf32>
    %cst_11 = arith.constant 0.176776692 : f32
    %29 = vector.broadcast %cst_11 : f32 to vector<16x16xf32>
    %30 = arith.mulf %28, %29 : vector<16x16xf32>
    %cst_12 = arith.constant -1.000000e+30 : f32
    %31 = vector.broadcast %cst_12 : f32 to vector<16x16xf32>
    %32 = arith.select %5, %30, %31 : vector<16x16xi1>, vector<16x16xf32>
    %cst_13 = arith.constant dense<0xFF800000> : vector<16xf32>
    %33 = vector.multi_reduction <maximumf>, %32, %cst_13 [1] : vector<16x16xf32> to vector<16xf32>
    %34 = vector.shape_cast %33 : vector<16xf32> to vector<16x1xf32>
    %35 = vector.broadcast %34 : vector<16x1xf32> to vector<16x16xf32>
    %36 = arith.subf %32, %35 : vector<16x16xf32>
    %37 = math.exp %36 : vector<16x16xf32>
    %cst_14 = arith.constant dense<0.000000e+00> : vector<16xf32>
    %38 = vector.multi_reduction <add>, %37, %cst_14 [1] : vector<16x16xf32> to vector<16xf32>
    %39 = vector.shape_cast %38 : vector<16xf32> to vector<16x1xf32>
    %40 = vector.broadcast %39 : vector<16x1xf32> to vector<16x16xf32>
    %41 = arith.divf %37, %40 : vector<16x16xf32>
    %42 = arith.truncf %41 : vector<16x16xf32> to vector<16x16xbf16>
    %cst_15 = arith.constant dense<0.000000e+00> : vector<16x32xf32>
    %43 = tpu.matmul %42, %27, %cst_15 {dimension_numbers = #tpu.dot_dimension_numbers<[1], [0], [0], [1], [0, 0, 1, 1], [], []>} : vector<16x16xbf16>, vector<16x32xbf16>, vector<16x32xf32> -> vector<16x32xf32>
    %44 = vector.extract_strided_slice %0 {offsets = [0, 64], sizes = [16, 32], strides = [1, 1]} : vector<16x128xbf16> to vector<16x32xbf16>
    %45 = vector.extract_strided_slice %1 {offsets = [0, 64], sizes = [16, 32], strides = [1, 1]} : vector<16x128xbf16> to vector<16x32xbf16>
    %46 = vector.extract_strided_slice %2 {offsets = [0, 64], sizes = [16, 32], strides = [1, 1]} : vector<16x128xbf16> to vector<16x32xbf16>
    %cst_16 = arith.constant dense<0.000000e+00> : vector<16x16xf32>
    %47 = tpu.matmul %44, %45, %cst_16 {dimension_numbers = #tpu.dot_dimension_numbers<[1], [1], [0], [0], [0, 0, 1, 0], [], []>} : vector<16x32xbf16>, vector<16x32xbf16>, vector<16x16xf32> -> vector<16x16xf32>
    %cst_17 = arith.constant 0.176776692 : f32
    %48 = vector.broadcast %cst_17 : f32 to vector<16x16xf32>
    %49 = arith.mulf %47, %48 : vector<16x16xf32>
    %cst_18 = arith.constant -1.000000e+30 : f32
    %50 = vector.broadcast %cst_18 : f32 to vector<16x16xf32>
    %51 = arith.select %5, %49, %50 : vector<16x16xi1>, vector<16x16xf32>
    %cst_19 = arith.constant dense<0xFF800000> : vector<16xf32>
    %52 = vector.multi_reduction <maximumf>, %51, %cst_19 [1] : vector<16x16xf32> to vector<16xf32>
    %53 = vector.shape_cast %52 : vector<16xf32> to vector<16x1xf32>
    %54 = vector.broadcast %53 : vector<16x1xf32> to vector<16x16xf32>
    %55 = arith.subf %51, %54 : vector<16x16xf32>
    %56 = math.exp %55 : vector<16x16xf32>
    %cst_20 = arith.constant dense<0.000000e+00> : vector<16xf32>
    %57 = vector.multi_reduction <add>, %56, %cst_20 [1] : vector<16x16xf32> to vector<16xf32>
    %58 = vector.shape_cast %57 : vector<16xf32> to vector<16x1xf32>
    %59 = vector.broadcast %58 : vector<16x1xf32> to vector<16x16xf32>
    %60 = arith.divf %56, %59 : vector<16x16xf32>
    %61 = arith.truncf %60 : vector<16x16xf32> to vector<16x16xbf16>
    %cst_21 = arith.constant dense<0.000000e+00> : vector<16x32xf32>
    %62 = tpu.matmul %61, %46, %cst_21 {dimension_numbers = #tpu.dot_dimension_numbers<[1], [0], [0], [1], [0, 0, 1, 1], [], []>} : vector<16x16xbf16>, vector<16x32xbf16>, vector<16x32xf32> -> vector<16x32xf32>
    %63 = vector.extract_strided_slice %0 {offsets = [0, 96], sizes = [16, 32], strides = [1, 1]} : vector<16x128xbf16> to vector<16x32xbf16>
    %64 = vector.extract_strided_slice %1 {offsets = [0, 96], sizes = [16, 32], strides = [1, 1]} : vector<16x128xbf16> to vector<16x32xbf16>
    %65 = vector.extract_strided_slice %2 {offsets = [0, 96], sizes = [16, 32], strides = [1, 1]} : vector<16x128xbf16> to vector<16x32xbf16>
    %cst_22 = arith.constant dense<0.000000e+00> : vector<16x16xf32>
    %66 = tpu.matmul %63, %64, %cst_22 {dimension_numbers = #tpu.dot_dimension_numbers<[1], [1], [0], [0], [0, 0, 1, 0], [], []>} : vector<16x32xbf16>, vector<16x32xbf16>, vector<16x16xf32> -> vector<16x16xf32>
    %cst_23 = arith.constant 0.176776692 : f32
    %67 = vector.broadcast %cst_23 : f32 to vector<16x16xf32>
    %68 = arith.mulf %66, %67 : vector<16x16xf32>
    %cst_24 = arith.constant -1.000000e+30 : f32
    %69 = vector.broadcast %cst_24 : f32 to vector<16x16xf32>
    %70 = arith.select %5, %68, %69 : vector<16x16xi1>, vector<16x16xf32>
    %cst_25 = arith.constant dense<0xFF800000> : vector<16xf32>
    %71 = vector.multi_reduction <maximumf>, %70, %cst_25 [1] : vector<16x16xf32> to vector<16xf32>
    %72 = vector.shape_cast %71 : vector<16xf32> to vector<16x1xf32>
    %73 = vector.broadcast %72 : vector<16x1xf32> to vector<16x16xf32>
    %74 = arith.subf %70, %73 : vector<16x16xf32>
    %75 = math.exp %74 : vector<16x16xf32>
    %cst_26 = arith.constant dense<0.000000e+00> : vector<16xf32>
    %76 = vector.multi_reduction <add>, %75, %cst_26 [1] : vector<16x16xf32> to vector<16xf32>
    %77 = vector.shape_cast %76 : vector<16xf32> to vector<16x1xf32>
    %78 = vector.broadcast %77 : vector<16x1xf32> to vector<16x16xf32>
    %79 = arith.divf %75, %78 : vector<16x16xf32>
    %80 = arith.truncf %79 : vector<16x16xf32> to vector<16x16xbf16>
    %cst_27 = arith.constant dense<0.000000e+00> : vector<16x32xf32>
    %81 = tpu.matmul %80, %65, %cst_27 {dimension_numbers = #tpu.dot_dimension_numbers<[1], [0], [0], [1], [0, 0, 1, 1], [], []>} : vector<16x16xbf16>, vector<16x32xbf16>, vector<16x32xf32> -> vector<16x32xf32>
    %82 = tpu.concatenate %24, %43, %62, %81 in 1 : vector<16x32xf32>, vector<16x32xf32>, vector<16x32xf32>, vector<16x32xf32> -> vector<16x128xf32>
    %83 = arith.truncf %82 : vector<16x128xf32> to vector<16x128xbf16>
    %c0_28 = arith.constant 0 : index
    %c0_29 = arith.constant 0 : index
    %84 = vector.load %arg5[%c0_28, %c0_29] : memref<16x128xbf16, #tpu.memory_space<vmem>>, vector<16x128xbf16>
    tpu.vector_store %arg5[%c0_28, %c0_29], %83 {strides = array<i32>} : memref<16x128xbf16, #tpu.memory_space<vmem>>, vector<16x128xbf16>,
    return
  }
  func.func @transform_0(%arg0: i32, %arg1: i32) -> (i32, i32) {
    %c0_i32 = arith.constant 0 : i32
    return %arg0, %arg1 : i32, i32
  }
  func.func @transform_1(%arg0: i32, %arg1: i32) -> (i32, i32) {
    %c1_i32 = arith.constant 1 : i32
    %0 = arith.addi %c1_i32, %arg1 : i32
    %c0_i32 = arith.constant 0 : i32
    return %arg0, %0 : i32, i32
  }
  func.func @transform_2(%arg0: i32, %arg1: i32) -> (i32, i32) {
    %c2_i32 = arith.constant 2 : i32
    %0 = arith.addi %c2_i32, %arg1 : i32
    %c0_i32 = arith.constant 0 : i32
    return %arg0, %0 : i32, i32
  }
  func.func @transform_3(%arg0: i32, %arg1: i32) -> (i32, i32) {
    %c0_i32 = arith.constant 0 : i32
    return %arg0, %arg1 : i32, i32
  }
}

module attributes {stable_mosaic.version = 11 : i64} {
  func.func @_linear_residual_kernel(%arg0: i32, %arg1: memref<32x128xbf16, #tpu.memory_space<vmem>>, %arg2: memref<128x128xbf16, #tpu.memory_space<vmem>>, %arg3: memref<1x128xf32, #tpu.memory_space<vmem>>, %arg4: memref<32x128xbf16, #tpu.memory_space<vmem>>, %arg5: memref<32x128xbf16, #tpu.memory_space<vmem>>) attributes {dimension_semantics = [#tpu.dimension_semantics<parallel>], iteration_bounds = array<i64: 1>, scalar_prefetch = 0 : i64, scratch_operands = 0 : i64, tpu.core_type = #tpu.core_type<tc>, window_params = [{transform_indices = @transform_0, window_bounds = array<i64: 32, 128>}, {pipeline_mode = #tpu.pipeline_mode<synchronous>, transform_indices = @transform_1, window_bounds = array<i64: 128, 128>}, {pipeline_mode = #tpu.pipeline_mode<synchronous>, transform_indices = @transform_2, window_bounds = array<i64: 1, 128>}, {transform_indices = @transform_3, window_bounds = array<i64: 32, 128>}, {transform_indices = @transform_4, window_bounds = array<i64: 32, 128>}]} {
    %c0 = arith.constant 0 : index
    %c0_0 = arith.constant 0 : index
    %0 = vector.load %arg1[%c0, %c0_0] : memref<32x128xbf16, #tpu.memory_space<vmem>>, vector<32x128xbf16>
    %c0_1 = arith.constant 0 : index
    %c0_2 = arith.constant 0 : index
    %1 = vector.load %arg2[%c0_1, %c0_2] : memref<128x128xbf16, #tpu.memory_space<vmem>>, vector<128x128xbf16>
    %cst = arith.constant dense<0.000000e+00> : vector<32x128xf32>
    %2 = tpu.matmul %0, %1, %cst {dimension_numbers = #tpu.dot_dimension_numbers<[1], [0], [0], [1], [0, 0, 1, 1], [], []>} : vector<32x128xbf16>, vector<128x128xbf16>, vector<32x128xf32> -> vector<32x128xf32>
    %c0_3 = arith.constant 0 : index
    %c0_4 = arith.constant 0 : index
    %3 = vector.load %arg3[%c0_3, %c0_4] : memref<1x128xf32, #tpu.memory_space<vmem>>, vector<1x128xf32>
    %4 = vector.broadcast %3 : vector<1x128xf32> to vector<32x128xf32>
    %5 = arith.addf %2, %4 : vector<32x128xf32>
    %c0_5 = arith.constant 0 : index
    %c0_6 = arith.constant 0 : index
    %6 = vector.load %arg4[%c0_5, %c0_6] : memref<32x128xbf16, #tpu.memory_space<vmem>>, vector<32x128xbf16>
    %7 = arith.extf %6 : vector<32x128xbf16> to vector<32x128xf32>
    %8 = arith.addf %5, %7 : vector<32x128xf32>
    %9 = arith.truncf %8 : vector<32x128xf32> to vector<32x128xbf16>
    %c0_7 = arith.constant 0 : index
    %c0_8 = arith.constant 0 : index
    %10 = vector.load %arg5[%c0_7, %c0_8] : memref<32x128xbf16, #tpu.memory_space<vmem>>, vector<32x128xbf16>
    tpu.vector_store %arg5[%c0_7, %c0_8], %9 {strides = array<i32>} : memref<32x128xbf16, #tpu.memory_space<vmem>>, vector<32x128xbf16>,
    return
  }
  func.func @transform_0(%arg0: i32) -> (i32, i32) {
    %c0_i32 = arith.constant 0 : i32
    %c0_i32_0 = arith.constant 0 : i32
    return %arg0, %c0_i32 : i32, i32
  }
  func.func @transform_1(%arg0: i32) -> (i32, i32) {
    %c0_i32 = arith.constant 0 : i32
    %c0_i32_0 = arith.constant 0 : i32
    %c0_i32_1 = arith.constant 0 : i32
    return %c0_i32, %c0_i32_0 : i32, i32
  }
  func.func @transform_2(%arg0: i32) -> (i32, i32) {
    %c0_i32 = arith.constant 0 : i32
    %c0_i32_0 = arith.constant 0 : i32
    %c0_i32_1 = arith.constant 0 : i32
    return %c0_i32, %c0_i32_0 : i32, i32
  }
  func.func @transform_3(%arg0: i32) -> (i32, i32) {
    %c0_i32 = arith.constant 0 : i32
    %c0_i32_0 = arith.constant 0 : i32
    return %arg0, %c0_i32 : i32, i32
  }
  func.func @transform_4(%arg0: i32) -> (i32, i32) {
    %c0_i32 = arith.constant 0 : i32
    %c0_i32_0 = arith.constant 0 : i32
    return %arg0, %c0_i32 : i32, i32
  }
}

module attributes {stable_mosaic.version = 11 : i64} {
  func.func @_layernorm_kernel(%arg0: i32, %arg1: memref<32x128xbf16, #tpu.memory_space<vmem>>, %arg2: memref<1x128xf32, #tpu.memory_space<vmem>>, %arg3: memref<1x128xf32, #tpu.memory_space<vmem>>, %arg4: memref<32x128xf32, #tpu.memory_space<vmem>>) attributes {dimension_semantics = [#tpu.dimension_semantics<parallel>], iteration_bounds = array<i64: 1>, scalar_prefetch = 0 : i64, scratch_operands = 0 : i64, tpu.core_type = #tpu.core_type<tc>, window_params = [{transform_indices = @transform_0, window_bounds = array<i64: 32, 128>}, {pipeline_mode = #tpu.pipeline_mode<synchronous>, transform_indices = @transform_1, window_bounds = array<i64: 1, 128>}, {pipeline_mode = #tpu.pipeline_mode<synchronous>, transform_indices = @transform_2, window_bounds = array<i64: 1, 128>}, {transform_indices = @transform_3, window_bounds = array<i64: 32, 128>}]} {
    %c0 = arith.constant 0 : index
    %c0_0 = arith.constant 0 : index
    %0 = vector.load %arg1[%c0, %c0_0] : memref<32x128xbf16, #tpu.memory_space<vmem>>, vector<32x128xbf16>
    %1 = arith.extf %0 : vector<32x128xbf16> to vector<32x128xf32>
    %cst = arith.constant dense<0.000000e+00> : vector<32xf32>
    %2 = vector.multi_reduction <add>, %1, %cst [1] : vector<32x128xf32> to vector<32xf32>
    %3 = vector.shape_cast %2 : vector<32xf32> to vector<32x1xf32>
    %cst_1 = arith.constant 1.280000e+02 : f32
    %4 = vector.broadcast %cst_1 : f32 to vector<32x1xf32>
    %5 = arith.divf %3, %4 : vector<32x1xf32>
    %6 = vector.broadcast %5 : vector<32x1xf32> to vector<32x128xf32>
    %7 = arith.subf %1, %6 : vector<32x128xf32>
    %8 = vector.broadcast %5 : vector<32x1xf32> to vector<32x128xf32>
    %9 = arith.subf %1, %8 : vector<32x128xf32>
    %10 = arith.mulf %7, %9 : vector<32x128xf32>
    %cst_2 = arith.constant dense<0.000000e+00> : vector<32xf32>
    %11 = vector.multi_reduction <add>, %10, %cst_2 [1] : vector<32x128xf32> to vector<32xf32>
    %12 = vector.shape_cast %11 : vector<32xf32> to vector<32x1xf32>
    %cst_3 = arith.constant 1.280000e+02 : f32
    %13 = vector.broadcast %cst_3 : f32 to vector<32x1xf32>
    %14 = arith.divf %12, %13 : vector<32x1xf32>
    %15 = vector.broadcast %5 : vector<32x1xf32> to vector<32x128xf32>
    %16 = arith.subf %1, %15 : vector<32x128xf32>
    %cst_4 = arith.constant 9.99999974E-6 : f32
    %17 = vector.broadcast %cst_4 : f32 to vector<32x1xf32>
    %18 = arith.addf %14, %17 : vector<32x1xf32>
    %19 = math.rsqrt %18 : vector<32x1xf32>
    %20 = vector.broadcast %19 : vector<32x1xf32> to vector<32x128xf32>
    %21 = arith.mulf %16, %20 : vector<32x128xf32>
    %c0_5 = arith.constant 0 : index
    %c0_6 = arith.constant 0 : index
    %22 = vector.load %arg2[%c0_5, %c0_6] : memref<1x128xf32, #tpu.memory_space<vmem>>, vector<1x128xf32>
    %23 = vector.broadcast %22 : vector<1x128xf32> to vector<32x128xf32>
    %24 = arith.mulf %21, %23 : vector<32x128xf32>
    %c0_7 = arith.constant 0 : index
    %c0_8 = arith.constant 0 : index
    %25 = vector.load %arg3[%c0_7, %c0_8] : memref<1x128xf32, #tpu.memory_space<vmem>>, vector<1x128xf32>
    %26 = vector.broadcast %25 : vector<1x128xf32> to vector<32x128xf32>
    %27 = arith.addf %24, %26 : vector<32x128xf32>
    %c0_9 = arith.constant 0 : index
    %c0_10 = arith.constant 0 : index
    %28 = vector.load %arg4[%c0_9, %c0_10] : memref<32x128xf32, #tpu.memory_space<vmem>>, vector<32x128xf32>
    tpu.vector_store %arg4[%c0_9, %c0_10], %27 {strides = array<i32>} : memref<32x128xf32, #tpu.memory_space<vmem>>, vector<32x128xf32>,
    return
  }
  func.func @transform_0(%arg0: i32) -> (i32, i32) {
    %c0_i32 = arith.constant 0 : i32
    %c0_i32_0 = arith.constant 0 : i32
    return %arg0, %c0_i32 : i32, i32
  }
  func.func @transform_1(%arg0: i32) -> (i32, i32) {
    %c0_i32 = arith.constant 0 : i32
    %c0_i32_0 = arith.constant 0 : i32
    %c0_i32_1 = arith.constant 0 : i32
    return %c0_i32, %c0_i32_0 : i32, i32
  }
  func.func @transform_2(%arg0: i32) -> (i32, i32) {
    %c0_i32 = arith.constant 0 : i32
    %c0_i32_0 = arith.constant 0 : i32
    %c0_i32_1 = arith.constant 0 : i32
    return %c0_i32, %c0_i32_0 : i32, i32
  }
  func.func @transform_3(%arg0: i32) -> (i32, i32) {
    %c0_i32 = arith.constant 0 : i32
    %c0_i32_0 = arith.constant 0 : i32
    return %arg0, %c0_i32 : i32, i32
  }
}

module attributes {stable_mosaic.version = 11 : i64} {
  func.func @_ln_mlp_residual_kernel(%arg0: i32, %arg1: i32, %arg2: memref<32x128xbf16, #tpu.memory_space<vmem>>, %arg3: memref<1x128xf32, #tpu.memory_space<vmem>>, %arg4: memref<1x128xf32, #tpu.memory_space<vmem>>, %arg5: memref<128x512xbf16, #tpu.memory_space<vmem>>, %arg6: memref<1x512xf32, #tpu.memory_space<vmem>>, %arg7: memref<512x128xbf16, #tpu.memory_space<vmem>>, %arg8: memref<1x128xf32, #tpu.memory_space<vmem>>, %arg9: memref<32x128xbf16, #tpu.memory_space<vmem>>, %arg10: memref<32x128xf32, #tpu.memory_space<vmem>>) attributes {dimension_semantics = [#tpu.dimension_semantics<parallel>, #tpu.dimension_semantics<arbitrary>], iteration_bounds = array<i64: 1, 1>, scalar_prefetch = 0 : i64, scratch_operands = 1 : i64, tpu.core_type = #tpu.core_type<tc>, window_params = [{transform_indices = @transform_0, window_bounds = array<i64: 32, 128>}, {pipeline_mode = #tpu.pipeline_mode<synchronous>, transform_indices = @transform_1, window_bounds = array<i64: 1, 128>}, {pipeline_mode = #tpu.pipeline_mode<synchronous>, transform_indices = @transform_2, window_bounds = array<i64: 1, 128>}, {transform_indices = @transform_3, window_bounds = array<i64: 128, 512>}, {transform_indices = @transform_4, window_bounds = array<i64: 1, 512>}, {transform_indices = @transform_5, window_bounds = array<i64: 512, 128>}, {pipeline_mode = #tpu.pipeline_mode<synchronous>, transform_indices = @transform_6, window_bounds = array<i64: 1, 128>}, {transform_indices = @transform_7, window_bounds = array<i64: 32, 128>}]} {
    %c0_i32 = arith.constant 0 : i32
    %0 = arith.cmpi eq, %arg1, %c0_i32 : i32
    %1 = arith.extui %0 : i1 to i32
    %c0_i32_0 = arith.constant 0 : i32
    %2 = arith.cmpi ne, %1, %c0_i32_0 : i32
    scf.if %2 {
      %cst_26 = arith.constant 0.000000e+00 : f32
      %54 = vector.broadcast %cst_26 : f32 to vector<32x128xf32>
      %c0_27 = arith.constant 0 : index
      %c0_28 = arith.constant 0 : index
      %55 = vector.load %arg10[%c0_27, %c0_28] : memref<32x128xf32, #tpu.memory_space<vmem>>, vector<32x128xf32>
      tpu.vector_store %arg10[%c0_27, %c0_28], %54 {strides = array<i32>} : memref<32x128xf32, #tpu.memory_space<vmem>>, vector<32x128xf32>,
    } else {
    }
    %c0 = arith.constant 0 : index
    %c0_1 = arith.constant 0 : index
    %3 = vector.load %arg2[%c0, %c0_1] : memref<32x128xbf16, #tpu.memory_space<vmem>>, vector<32x128xbf16>
    %4 = arith.extf %3 : vector<32x128xbf16> to vector<32x128xf32>
    %cst = arith.constant dense<0.000000e+00> : vector<32xf32>
    %5 = vector.multi_reduction <add>, %4, %cst [1] : vector<32x128xf32> to vector<32xf32>
    %6 = vector.shape_cast %5 : vector<32xf32> to vector<32x1xf32>
    %cst_2 = arith.constant 1.280000e+02 : f32
    %7 = vector.broadcast %cst_2 : f32 to vector<32x1xf32>
    %8 = arith.divf %6, %7 : vector<32x1xf32>
    %9 = vector.broadcast %8 : vector<32x1xf32> to vector<32x128xf32>
    %10 = arith.subf %4, %9 : vector<32x128xf32>
    %11 = vector.broadcast %8 : vector<32x1xf32> to vector<32x128xf32>
    %12 = arith.subf %4, %11 : vector<32x128xf32>
    %13 = arith.mulf %10, %12 : vector<32x128xf32>
    %cst_3 = arith.constant dense<0.000000e+00> : vector<32xf32>
    %14 = vector.multi_reduction <add>, %13, %cst_3 [1] : vector<32x128xf32> to vector<32xf32>
    %15 = vector.shape_cast %14 : vector<32xf32> to vector<32x1xf32>
    %cst_4 = arith.constant 1.280000e+02 : f32
    %16 = vector.broadcast %cst_4 : f32 to vector<32x1xf32>
    %17 = arith.divf %15, %16 : vector<32x1xf32>
    %18 = vector.broadcast %8 : vector<32x1xf32> to vector<32x128xf32>
    %19 = arith.subf %4, %18 : vector<32x128xf32>
    %cst_5 = arith.constant 9.99999974E-6 : f32
    %20 = vector.broadcast %cst_5 : f32 to vector<32x1xf32>
    %21 = arith.addf %17, %20 : vector<32x1xf32>
    %22 = math.rsqrt %21 : vector<32x1xf32>
    %23 = vector.broadcast %22 : vector<32x1xf32> to vector<32x128xf32>
    %24 = arith.mulf %19, %23 : vector<32x128xf32>
    %c0_6 = arith.constant 0 : index
    %c0_7 = arith.constant 0 : index
    %25 = vector.load %arg3[%c0_6, %c0_7] : memref<1x128xf32, #tpu.memory_space<vmem>>, vector<1x128xf32>
    %26 = vector.broadcast %25 : vector<1x128xf32> to vector<32x128xf32>
    %27 = arith.mulf %24, %26 : vector<32x128xf32>
    %c0_8 = arith.constant 0 : index
    %c0_9 = arith.constant 0 : index
    %28 = vector.load %arg4[%c0_8, %c0_9] : memref<1x128xf32, #tpu.memory_space<vmem>>, vector<1x128xf32>
    %29 = vector.broadcast %28 : vector<1x128xf32> to vector<32x128xf32>
    %30 = arith.addf %27, %29 : vector<32x128xf32>
    %31 = arith.truncf %30 : vector<32x128xf32> to vector<32x128xbf16>
    %c0_10 = arith.constant 0 : index
    %c0_11 = arith.constant 0 : index
    %32 = vector.load %arg5[%c0_10, %c0_11] : memref<128x512xbf16, #tpu.memory_space<vmem>>, vector<128x512xbf16>
    %cst_12 = arith.constant dense<0.000000e+00> : vector<32x512xf32>
    %33 = tpu.matmul %31, %32, %cst_12 {dimension_numbers = #tpu.dot_dimension_numbers<[1], [0], [0], [1], [0, 0, 1, 1], [], []>} : vector<32x128xbf16>, vector<128x512xbf16>, vector<32x512xf32> -> vector<32x512xf32>
    %c0_13 = arith.constant 0 : index
    %c0_14 = arith.constant 0 : index
    %34 = vector.load %arg6[%c0_13, %c0_14] : memref<1x512xf32, #tpu.memory_space<vmem>>, vector<1x512xf32>
    %35 = vector.broadcast %34 : vector<1x512xf32> to vector<32x512xf32>
    %36 = arith.addf %33, %35 : vector<32x512xf32>
    %cst_15 = arith.constant 1.702000e+00 : f32
    %37 = vector.broadcast %cst_15 : f32 to vector<32x512xf32>
    %38 = arith.mulf %37, %36 : vector<32x512xf32>
    %39 = arith.negf %38 : vector<32x512xf32>
    %40 = math.exp %39 : vector<32x512xf32>
    %cst_16 = arith.constant 1.000000e+00 : f32
    %41 = vector.broadcast %cst_16 : f32 to vector<32x512xf32>
    %42 = arith.addf %41, %40 : vector<32x512xf32>
    %43 = arith.divf %41, %42 : vector<32x512xf32>
    %44 = arith.mulf %36, %43 : vector<32x512xf32>
    %c0_17 = arith.constant 0 : index
    %c0_18 = arith.constant 0 : index
    %45 = vector.load %arg10[%c0_17, %c0_18] : memref<32x128xf32, #tpu.memory_space<vmem>>, vector<32x128xf32>
    %46 = arith.truncf %44 : vector<32x512xf32> to vector<32x512xbf16>
    %c0_19 = arith.constant 0 : index
    %c0_20 = arith.constant 0 : index
    %47 = vector.load %arg7[%c0_19, %c0_20] : memref<512x128xbf16, #tpu.memory_space<vmem>>, vector<512x128xbf16>
    %cst_21 = arith.constant dense<0.000000e+00> : vector<32x128xf32>
    %48 = tpu.matmul %46, %47, %cst_21 {dimension_numbers = #tpu.dot_dimension_numbers<[1], [0], [0], [1], [0, 0, 1, 1], [], []>} : vector<32x512xbf16>, vector<512x128xbf16>, vector<32x128xf32> -> vector<32x128xf32>
    %49 = arith.addf %45, %48 : vector<32x128xf32>
    %c0_22 = arith.constant 0 : index
    %c0_23 = arith.constant 0 : index
    %50 = vector.load %arg10[%c0_22, %c0_23] : memref<32x128xf32, #tpu.memory_space<vmem>>, vector<32x128xf32>
    tpu.vector_store %arg10[%c0_22, %c0_23], %49 {strides = array<i32>} : memref<32x128xf32, #tpu.memory_space<vmem>>, vector<32x128xf32>,
    %c0_i32_24 = arith.constant 0 : i32
    %51 = arith.cmpi eq, %arg1, %c0_i32_24 : i32
    %52 = arith.extui %51 : i1 to i32
    %c0_i32_25 = arith.constant 0 : i32
    %53 = arith.cmpi ne, %52, %c0_i32_25 : i32
    scf.if %53 {
      %c0_26 = arith.constant 0 : index
      %c0_27 = arith.constant 0 : index
      %54 = vector.load %arg10[%c0_26, %c0_27] : memref<32x128xf32, #tpu.memory_space<vmem>>, vector<32x128xf32>
      %55 = arith.addf %4, %54 : vector<32x128xf32>
      %c0_28 = arith.constant 0 : index
      %c0_29 = arith.constant 0 : index
      %56 = vector.load %arg8[%c0_28, %c0_29] : memref<1x128xf32, #tpu.memory_space<vmem>>, vector<1x128xf32>
      %57 = vector.broadcast %56 : vector<1x128xf32> to vector<32x128xf32>
      %58 = arith.addf %55, %57 : vector<32x128xf32>
      %59 = arith.truncf %58 : vector<32x128xf32> to vector<32x128xbf16>
      %c0_30 = arith.constant 0 : index
      %c0_31 = arith.constant 0 : index
      %60 = vector.load %arg9[%c0_30, %c0_31] : memref<32x128xbf16, #tpu.memory_space<vmem>>, vector<32x128xbf16>
      tpu.vector_store %arg9[%c0_30, %c0_31], %59 {strides = array<i32>} : memref<32x128xbf16, #tpu.memory_space<vmem>>, vector<32x128xbf16>,
    } else {
    }
    return
  }
  func.func @transform_0(%arg0: i32, %arg1: i32) -> (i32, i32) {
    %c0_i32 = arith.constant 0 : i32
    %c0_i32_0 = arith.constant 0 : i32
    return %arg0, %c0_i32 : i32, i32
  }
  func.func @transform_1(%arg0: i32, %arg1: i32) -> (i32, i32) {
    %c0_i32 = arith.constant 0 : i32
    %c0_i32_0 = arith.constant 0 : i32
    %c0_i32_1 = arith.constant 0 : i32
    return %c0_i32, %c0_i32_0 : i32, i32
  }
  func.func @transform_2(%arg0: i32, %arg1: i32) -> (i32, i32) {
    %c0_i32 = arith.constant 0 : i32
    %c0_i32_0 = arith.constant 0 : i32
    %c0_i32_1 = arith.constant 0 : i32
    return %c0_i32, %c0_i32_0 : i32, i32
  }
  func.func @transform_3(%arg0: i32, %arg1: i32) -> (i32, i32) {
    %c0_i32 = arith.constant 0 : i32
    %c0_i32_0 = arith.constant 0 : i32
    return %c0_i32, %arg1 : i32, i32
  }
  func.func @transform_4(%arg0: i32, %arg1: i32) -> (i32, i32) {
    %c0_i32 = arith.constant 0 : i32
    %c0_i32_0 = arith.constant 0 : i32
    return %c0_i32, %arg1 : i32, i32
  }
  func.func @transform_5(%arg0: i32, %arg1: i32) -> (i32, i32) {
    %c0_i32 = arith.constant 0 : i32
    %c0_i32_0 = arith.constant 0 : i32
    return %arg1, %c0_i32 : i32, i32
  }
  func.func @transform_6(%arg0: i32, %arg1: i32) -> (i32, i32) {
    %c0_i32 = arith.constant 0 : i32
    %c0_i32_0 = arith.constant 0 : i32
    %c0_i32_1 = arith.constant 0 : i32
    return %c0_i32, %c0_i32_0 : i32, i32
  }
  func.func @transform_7(%arg0: i32, %arg1: i32) -> (i32, i32) {
    %c0_i32 = arith.constant 0 : i32
    %c0_i32_0 = arith.constant 0 : i32
    return %arg0, %c0_i32 : i32, i32
  }
}

</mosaic_0001>

<llo_original>
// kernel: image_encoder_forward.12
$region0: #{image_encoder_forward.12}
  #allocation0 [shape = 'u32[]', space=smem, size = 0x4, offset = 0x4, fixed_abs, tag = 'smem constant byte address 0x4 - core index']
  #allocation1 [shape = 'u32[144,128]{1,0:T(1,128)}', space=vmem, size = 0x12000, scoped, tag = 'internal scratch']
  %s0 = inlined_call_operand.vmem [shape: bf16[32,128], index: 0, kind: input, shape index: {}]
  %s1 = inlined_call_operand.vmem [shape: f32[1,128], index: 1, kind: input, shape index: {}]
  %s2 = inlined_call_operand.vmem [shape: f32[1,128], index: 2, kind: input, shape index: {}]
  %s3 = inlined_call_operand.vmem [shape: bf16[32,128], index: 3, kind: output, shape index: {}]
  %s4 = sld [smem:[#allocation0]]
  $region22: #{image_encoder_forward.12} parent=0
    _
  %s6 = ssub.s32 1, %s4
  %s7 = scalar_select 0, %s6, %s4
  // Predicated region
  $region2: #{image_encoder_forward.12} parent=0 // pred_check
    _
  $region3: #{image_encoder_forward.12} parent=0 // pred_check_branch
    %9 = sbr.rel (0) target = $region5
  $region4: #{image_encoder_forward.12} parent=0 // pred_region
    _
  $region5: #{image_encoder_forward.12} parent=0 // pred_fallthru
    _
  // Predicated region
  $region6: #{image_encoder_forward.12} parent=0 // pred_check
    _
  $region7: #{image_encoder_forward.12} parent=0 // pred_check_branch
    %11 = sbr.rel (0) target = $region9
  $region8: #{image_encoder_forward.12} parent=0 // pred_region
    _
  $region9: #{image_encoder_forward.12} parent=0 // pred_fallthru
    _
  // Predicated region
  $region10: #{image_encoder_forward.12} parent=0 // pred_check
    _
  $region11: #{image_encoder_forward.12} parent=0 // pred_check_branch
    %13 = sbr.rel (0) target = $region13
  $region12: #{image_encoder_forward.12} parent=0 // pred_region
    _
  $region13: #{image_encoder_forward.12} parent=0 // pred_fallthru
    _
  %v14 = vld [vmem:[%s0] sm:$0xf]
  %v15 = vld [vmem:[%s0 + $0x4] sm:$0xf]
  %v16 = vld [vmem:[%s0 + $0x8] sm:$0xf]
  %v17 = vld [vmem:[%s0 + $0xc] sm:$0xf]
  %v18 = vunpack.c.l.bf16 %v14
  %v19 = vunpack.c.l.bf16 %v15
  %v20 = vunpack.c.l.bf16 %v16
  %v21 = vunpack.c.l.bf16 %v17
  %22 = vadd.xlane.f32.xlu0 %v18
  %v23 = vpop.xlane.xlu0 %22
  %24 = vadd.xlane.f32.xlu0 %v19
  %v25 = vpop.xlane.xlu0 %24
  %26 = vadd.xlane.f32.xlu0 %v20
  %v27 = vpop.xlane.xlu0 %26
  %28 = vadd.xlane.f32.xlu0 %v21
  %v29 = vpop.xlane.xlu0 %28
  %v30 = vrcp.pop 128.0
  %v31 = vmul.f32 %v23, %v30
  %v32 = vmul.f32 %v25, %v30
  %v33 = vmul.f32 %v27, %v30
  %v34 = vmul.f32 %v29, %v30
  %v35 = vsub.f32 %v18, %v31
  %v36 = vsub.f32 %v19, %v32
  %v37 = vsub.f32 %v20, %v33
  %v38 = vsub.f32 %v21, %v34
  %v39 = vmul.f32 %v35, %v35
  %v40 = vmul.f32 %v36, %v36
  %v41 = vmul.f32 %v37, %v37
  %v42 = vmul.f32 %v38, %v38
  %43 = vadd.xlane.f32.xlu0 %v39
  %v44 = vpop.xlane.xlu0 %43
  %45 = vadd.xlane.f32.xlu0 %v40
  %v46 = vpop.xlane.xlu0 %45
  %47 = vadd.xlane.f32.xlu0 %v41
  %v48 = vpop.xlane.xlu0 %47
  %49 = vadd.xlane.f32.xlu0 %v42
  %v50 = vpop.xlane.xlu0 %49
  %v51 = vmul.f32 %v44, %v30
  %v52 = vmul.f32 %v46, %v30
  %v53 = vmul.f32 %v48, %v30
  %v54 = vmul.f32 %v50, %v30
  %v55 = vadd.f32 %v51, 1e-05
  %v56 = vadd.f32 %v52, 1e-05
  %v57 = vadd.f32 %v53, 1e-05
  %v58 = vadd.f32 %v54, 1e-05
  %v59 = vrsqrt.pop %v55
  %v60 = vrsqrt.pop %v56
  %v61 = vrsqrt.pop %v57
  %v62 = vrsqrt.pop %v58
  %v63 = vmul.f32 %v35, %v59
  %v64 = vmul.f32 %v36, %v60
  %v65 = vmul.f32 %v37, %v61
  %v66 = vmul.f32 %v38, %v62
  %v67 = vld [vmem:[%s1] sm:$0x1]
  %v69 = vlaneseq
  %v70 = vshrl.u32 %v69, 7
  %v71 = vsub.s32 0, %v70
  %v72 = vrot.slane %v67, %v71
  %v74 = vmul.f32 %v63, %v72
  %v75 = vmul.f32 %v64, %v72
  %v76 = vmul.f32 %v65, %v72
  %v77 = vmul.f32 %v66, %v72
  %v78 = vld [vmem:[%s2] sm:$0x1]
  %v80 = vlaneseq
  %v81 = vshrl.u32 %v80, 7
  %v82 = vsub.s32 0, %v81
  %v83 = vrot.slane %v78, %v82
  %v85 = vadd.f32 %v74, %v83
  %v86 = vadd.f32 %v75, %v83
  %v87 = vadd.f32 %v76, %v83
  %v88 = vadd.f32 %v77, %v83
  %v89 = vpack.c.bf16 %v86, %v85
  %v90 = vpack.c.bf16 %v88, %v87
  %v93 = vunpack.c.l.b16 %v89
  %v94 = vunpack.c.h.b16 %v89
  %v95 = vunpack.c.l.b16 %v90
  %v96 = vunpack.c.h.b16 %v90
  %v97 = vpack.c.b16 %v93, %v93
  %v98 = vpack.c.b16 %v94, %v94
  %v99 = vpack.c.b16 %v95, %v95
  %v100 = vpack.c.b16 %v96, %v96
  %105 = vst [vmem:[%s3] sm:$0xf] %v97
  %106 = vst [vmem:[%s3 + $0x4] sm:$0xf] %v98
  %107 = vst [vmem:[%s3 + $0x8] sm:$0xf] %v99
  %108 = vst [vmem:[%s3 + $0xc] sm:$0xf] %v100
  // Predicated region
  $region14: #{image_encoder_forward.12} parent=0 // pred_check
    _
  $region15: #{image_encoder_forward.12} parent=0 // pred_check_branch
    %110 = sbr.rel (0) target = $region17
  $region16: #{image_encoder_forward.12} parent=0 // pred_region
    _
  $region17: #{image_encoder_forward.12} parent=0 // pred_fallthru
    _
  // Predicated region
  $region18: #{image_encoder_forward.12} parent=0 // pred_check
    _
  $region19: #{image_encoder_forward.12} parent=0 // pred_check_branch
    %112 = sbr.rel (0) target = $region21
  $region20: #{image_encoder_forward.12} parent=0 // pred_region
    _
  $region21: #{image_encoder_forward.12} parent=0 // pred_fallthru
    _

// kernel: image_encoder_forward.13
$region0: #{image_encoder_forward.13}
  #allocation0 [shape = 'u32[]', space=smem, size = 0x4, offset = 0x4, fixed_abs, tag = 'smem constant byte address 0x4 - core index']
  #allocation1 [shape = 'u32[144,128]{1,0:T(1,128)}', space=vmem, size = 0x12000, scoped, tag = 'internal scratch']
  %s0 = inlined_call_operand.vmem [shape: bf16[32,128], index: 0, kind: input, shape index: {}]
  %s1 = inlined_call_operand.vmem [shape: f32[1,128], index: 1, kind: input, shape index: {}]
  %s2 = inlined_call_operand.vmem [shape: f32[1,128], index: 2, kind: input, shape index: {}]
  %s3 = inlined_call_operand.vmem [shape: bf16[128,384], index: 3, kind: input, shape index: {}]
  %s4 = inlined_call_operand.vmem [shape: f32[1,384], index: 4, kind: input, shape index: {}]
  %s5 = inlined_call_operand.vmem [shape: bf16[32,384], index: 5, kind: output, shape index: {}]
  %s6 = sld [smem:[#allocation0]]
  $region30: #{image_encoder_forward.13} parent=0
    _
  %s8 = ssub.s32 1, %s6
  %s9 = scalar_select 0, %s8, %s6
  // Predicated region
  $region2: #{image_encoder_forward.13} parent=0 // pred_check
    _
  $region3: #{image_encoder_forward.13} parent=0 // pred_check_branch
    %11 = sbr.rel (0) target = $region5
  $region4: #{image_encoder_forward.13} parent=0 // pred_region
    _
  $region5: #{image_encoder_forward.13} parent=0 // pred_fallthru
    _
  // Predicated region
  $region6: #{image_encoder_forward.13} parent=0 // pred_check
    _
  $region7: #{image_encoder_forward.13} parent=0 // pred_check_branch
    %13 = sbr.rel (0) target = $region9
  $region8: #{image_encoder_forward.13} parent=0 // pred_region
    _
  $region9: #{image_encoder_forward.13} parent=0 // pred_fallthru
    _
  // Predicated region
  $region10: #{image_encoder_forward.13} parent=0 // pred_check
    _
  $region11: #{image_encoder_forward.13} parent=0 // pred_check_branch
    %15 = sbr.rel (0) target = $region13
  $region12: #{image_encoder_forward.13} parent=0 // pred_region
    _
  $region13: #{image_encoder_forward.13} parent=0 // pred_fallthru
    _
  // Predicated region
  $region14: #{image_encoder_forward.13} parent=0 // pred_check
    _
  $region15: #{image_encoder_forward.13} parent=0 // pred_check_branch
    %17 = sbr.rel (0) target = $region17
  $region16: #{image_encoder_forward.13} parent=0 // pred_region
    _
  $region17: #{image_encoder_forward.13} parent=0 // pred_fallthru
    _
  // Predicated region
  $region18: #{image_encoder_forward.13} parent=0 // pred_check
    _
  $region19: #{image_encoder_forward.13} parent=0 // pred_check_branch
    %19 = sbr.rel (0) target = $region21
  $region20: #{image_encoder_forward.13} parent=0 // pred_region
    _
  $region21: #{image_encoder_forward.13} parent=0 // pred_fallthru
    _
  %v21 = vld [vmem:[%s0] sm:$0xf]
  %v22 = vld [vmem:[%s0 + $0x4] sm:$0xf]
  %v23 = vld [vmem:[%s0 + $0x8] sm:$0xf]
  %v24 = vld [vmem:[%s0 + $0xc] sm:$0xf]
  %v25 = vunpack.c.l.bf16 %v21
  %v26 = vunpack.c.l.bf16 %v22
  %v27 = vunpack.c.l.bf16 %v23
  %v28 = vunpack.c.l.bf16 %v24
  %29 = vadd.xlane.f32.xlu0 %v25
  %v30 = vpop.xlane.xlu0 %29
  %31 = vadd.xlane.f32.xlu0 %v26
  %v32 = vpop.xlane.xlu0 %31
  %33 = vadd.xlane.f32.xlu0 %v27
  %v34 = vpop.xlane.xlu0 %33
  %35 = vadd.xlane.f32.xlu0 %v28
  %v36 = vpop.xlane.xlu0 %35
  %v37 = vrcp.pop 128.0
  %v38 = vmul.f32 %v30, %v37
  %v39 = vmul.f32 %v32, %v37
  %v40 = vmul.f32 %v34, %v37
  %v41 = vmul.f32 %v36, %v37
  %v42 = vsub.f32 %v25, %v38
  %v43 = vsub.f32 %v26, %v39
  %v44 = vsub.f32 %v27, %v40
  %v45 = vsub.f32 %v28, %v41
  %v46 = vmul.f32 %v42, %v42
  %v47 = vmul.f32 %v43, %v43
  %v48 = vmul.f32 %v44, %v44
  %v49 = vmul.f32 %v45, %v45
  %50 = vadd.xlane.f32.xlu0 %v46
  %v51 = vpop.xlane.xlu0 %50
  %52 = vadd.xlane.f32.xlu0 %v47
  %v53 = vpop.xlane.xlu0 %52
  %54 = vadd.xlane.f32.xlu0 %v48
  %v55 = vpop.xlane.xlu0 %54
  %56 = vadd.xlane.f32.xlu0 %v49
  %v57 = vpop.xlane.xlu0 %56
  %v58 = vmul.f32 %v51, %v37
  %v59 = vmul.f32 %v53, %v37
  %v60 = vmul.f32 %v55, %v37
  %v61 = vmul.f32 %v57, %v37
  %v62 = vadd.f32 %v58, 1e-05
  %v63 = vadd.f32 %v59, 1e-05
  %v64 = vadd.f32 %v60, 1e-05
  %v65 = vadd.f32 %v61, 1e-05
  %v66 = vrsqrt.pop %v62
  %v67 = vrsqrt.pop %v63
  %v68 = vrsqrt.pop %v64
  %v69 = vrsqrt.pop %v65
  %v70 = vmul.f32 %v42, %v66
  %v71 = vmul.f32 %v43, %v67
  %v72 = vmul.f32 %v44, %v68
  %v73 = vmul.f32 %v45, %v69
  %v74 = vld [vmem:[%s1] sm:$0x1]
  %v76 = vlaneseq
  %v77 = vshrl.u32 %v76, 7
  %v78 = vsub.s32 0, %v77
  %v79 = vrot.slane %v74, %v78
  %v81 = vmul.f32 %v70, %v79
  %v82 = vmul.f32 %v71, %v79
  %v83 = vmul.f32 %v72, %v79
  %v84 = vmul.f32 %v73, %v79
  %v85 = vld [vmem:[%s2] sm:$0x1]
  %v87 = vlaneseq
  %v88 = vshrl.u32 %v87, 7
  %v89 = vsub.s32 0, %v88
  %v90 = vrot.slane %v85, %v89
  %v92 = vadd.f32 %v81, %v90
  %v93 = vadd.f32 %v82, %v90
  %v94 = vadd.f32 %v83, %v90
  %v95 = vadd.f32 %v84, %v90
  %v96 = vpack.c.bf16 %v93, %v92
  %v97 = vpack.c.bf16 %v95, %v94
  %v98 = vld [vmem:[%s3] sm:$0xff]
  %v99 = vld [vmem:[%s3 + $0x8] sm:$0xf]
  %v100 = vld [vmem:[%s3 + $0xc] sm:$0xff]
  %v101 = vld [vmem:[%s3 + $0x14] sm:$0xf]
  %v102 = vld [vmem:[%s3 + $0x18] sm:$0xff]
  %v103 = vld [vmem:[%s3 + $0x20] sm:$0xf]
  %v104 = vld [vmem:[%s3 + $0x24] sm:$0xff]
  %v105 = vld [vmem:[%s3 + $0x2c] sm:$0xf]
  %v106 = vld [vmem:[%s3 + $0x30] sm:$0xff]
  %v107 = vld [vmem:[%s3 + $0x38] sm:$0xf]
  %v108 = vld [vmem:[%s3 + $0x3c] sm:$0xff]
  %v109 = vld [vmem:[%s3 + $0x44] sm:$0xf]
  %v110 = vld [vmem:[%s3 + $0x48] sm:$0xff]
  %v111 = vld [vmem:[%s3 + $0x50] sm:$0xf]
  %v112 = vld [vmem:[%s3 + $0x54] sm:$0xff]
  %v113 = vld [vmem:[%s3 + $0x5c] sm:$0xf]
  %v114 = vld [vmem:[%s3 + $0x60] sm:$0xff]
  %v115 = vld [vmem:[%s3 + $0x68] sm:$0xf]
  %v116 = vld [vmem:[%s3 + $0x6c] sm:$0xff]
  %v117 = vld [vmem:[%s3 + $0x74] sm:$0xf]
  %v118 = vld [vmem:[%s3 + $0x78] sm:$0xff]
  %v119 = vld [vmem:[%s3 + $0x80] sm:$0xf]
  %v120 = vld [vmem:[%s3 + $0x84] sm:$0xff]
  %v121 = vld [vmem:[%s3 + $0x8c] sm:$0xf]
  %v122 = vld [vmem:[%s3 + $0x90] sm:$0xff]
  %v123 = vld [vmem:[%s3 + $0x98] sm:$0xf]
  %v124 = vld [vmem:[%s3 + $0x9c] sm:$0xff]
  %v125 = vld [vmem:[%s3 + $0xa4] sm:$0xf]
  %v126 = vld [vmem:[%s3 + $0xa8] sm:$0xff]
  %v127 = vld [vmem:[%s3 + $0xb0] sm:$0xf]
  %v128 = vld [vmem:[%s3 + $0xb4] sm:$0xff]
  %v129 = vld [vmem:[%s3 + $0xbc] sm:$0xf]
  %v130 = vld [vmem:[%s4] sm:$0x7]
  %v132 = vlaneseq
  %v133 = vshrl.u32 %v132, 7
  %v134 = vsub.s32 0, %v133
  %v135 = vrot.slane %v130, %v134
  %v136 = vlaneseq
  %v137 = vshrl.u32 %v136, 7
  %v138 = vsub.s32 1, %v137
  %v139 = vrot.slane %v130, %v138
  %v140 = vlaneseq
  %v141 = vshrl.u32 %v140, 7
  %v142 = vsub.s32 2, %v141
  %v143 = vrot.slane %v130, %v142
  %v179 = vunpack.c.l.b16 %v98
  %v180 = vunpack.c.h.b16 %v98
  %v181 = vunpack.c.l.b16 %v99
  %v182 = vunpack.c.l.b16 %v100
  %v183 = vunpack.c.h.b16 %v100
  %v184 = vunpack.c.l.b16 %v101
  %v185 = vunpack.c.l.b16 %v102
  %v186 = vunpack.c.h.b16 %v102
  %v187 = vunpack.c.l.b16 %v103
  %v188 = vunpack.c.l.b16 %v104
  %v189 = vunpack.c.h.b16 %v104
  %v190 = vunpack.c.l.b16 %v105
  %v191 = vunpack.c.l.b16 %v106
  %v192 = vunpack.c.h.b16 %v106
  %v193 = vunpack.c.l.b16 %v107
  %v194 = vunpack.c.l.b16 %v108
  %v195 = vunpack.c.h.b16 %v108
  %v196 = vunpack.c.l.b16 %v109
  %v197 = vunpack.c.l.b16 %v110
  %v198 = vunpack.c.h.b16 %v110
  %v199 = vunpack.c.l.b16 %v111
  %v200 = vunpack.c.l.b16 %v112
  %v201 = vunpack.c.h.b16 %v112
  %v202 = vunpack.c.l.b16 %v113
  %v203 = vunpack.c.l.b16 %v114
  %v204 = vunpack.c.h.b16 %v114
  %v205 = vunpack.c.l.b16 %v115
  %v206 = vunpack.c.l.b16 %v116
  %v207 = vunpack.c.h.b16 %v116
  %v208 = vunpack.c.l.b16 %v117
  %v209 = vunpack.c.l.b16 %v118
  %v210 = vunpack.c.h.b16 %v118
  %v211 = vunpack.c.l.b16 %v119
  %v212 = vunpack.c.l.b16 %v120
  %v213 = vunpack.c.h.b16 %v120
  %v214 = vunpack.c.l.b16 %v121
  %v215 = vunpack.c.l.b16 %v122
  %v216 = vunpack.c.h.b16 %v122
  %v217 = vunpack.c.l.b16 %v123
  %v218 = vunpack.c.l.b16 %v124
  %v219 = vunpack.c.h.b16 %v124
  %v220 = vunpack.c.l.b16 %v125
  %v221 = vunpack.c.l.b16 %v126
  %v222 = vunpack.c.h.b16 %v126
  %v223 = vunpack.c.l.b16 %v127
  %v224 = vunpack.c.l.b16 %v128
  %v225 = vunpack.c.h.b16 %v128
  %v226 = vunpack.c.l.b16 %v129
  %v227 = vpack.c.b16 %v182, %v179
  %v228 = vpack.c.b16 %v183, %v180
  %v229 = vpack.c.b16 %v184, %v181
  %v230 = vpack.c.b16 %v188, %v185
  %v231 = vpack.c.b16 %v189, %v186
  %v232 = vpack.c.b16 %v190, %v187
  %v233 = vpack.c.b16 %v194, %v191
  %v234 = vpack.c.b16 %v195, %v192
  %v235 = vpack.c.b16 %v196, %v193
  %v236 = vpack.c.b16 %v200, %v197
  %v237 = vpack.c.b16 %v201, %v198
  %v238 = vpack.c.b16 %v202, %v199
  %v239 = vpack.c.b16 %v206, %v203
  %v240 = vpack.c.b16 %v207, %v204
  %v241 = vpack.c.b16 %v208, %v205
  %v242 = vpack.c.b16 %v212, %v209
  %v243 = vpack.c.b16 %v213, %v210
  %v244 = vpack.c.b16 %v214, %v211
  %v245 = vpack.c.b16 %v218, %v215
  %v246 = vpack.c.b16 %v219, %v216
  %v247 = vpack.c.b16 %v220, %v217
  %v248 = vpack.c.b16 %v224, %v221
  %v249 = vpack.c.b16 %v225, %v222
  %v250 = vpack.c.b16 %v226, %v223
  %275 = vmatprep.subr.bf16.mxu0 %v249
  %276 = vmatpush1.bf16.msra.mxu0 %v248
  %277 = vmatprep.subr.bf16.mxu0 %v246
  %278 = vmatpush1.bf16.msra.mxu0 %v245
  %279 = vmatprep.subr.bf16.mxu0 %v243
  %280 = vmatpush1.bf16.msra.mxu0 %v242
  %281 = vmatprep.subr.bf16.mxu0 %v240
  %282 = vmatpush1.bf16.msra.mxu0 %v239
  %283 = vmatprep.subr.bf16.mxu0 %v237
  %284 = vmatpush1.bf16.msra.mxu0 %v236
  %285 = vmatprep.subr.bf16.mxu0 %v234
  %286 = vmatpush1.bf16.msra.mxu0 %v233
  %287 = vmatprep.subr.bf16.mxu0 %v231
  %288 = vmatpush1.bf16.msra.mxu0 %v230
  %289 = vmatprep.subr.bf16.mxu0 %v228
  %290 = vmatpush1.bf16.msra.mxu0 %v227
  %291 = vmatprep.subr.bf16.mxu0 0
  %292 = vmatpush2.bf16.msra.mxu0 0
  %293 = vmatprep.subr.bf16.mxu0 0
  %294 = vmatpush2.bf16.msra.mxu0 0
  %295 = vmatprep.subr.bf16.mxu0 0
  %296 = vmatpush2.bf16.msra.mxu0 0
  %297 = vmatprep.subr.bf16.mxu0 0
  %298 = vmatpush2.bf16.msra.mxu0 0
  %299 = vmatprep.subr.bf16.mxu0 0
  %300 = vmatpush2.bf16.msra.mxu0 0
  %301 = vmatprep.subr.bf16.mxu0 0
  %302 = vmatpush2.bf16.msra.mxu0 0
  %303 = vmatprep.subr.bf16.mxu0 0
  %304 = vmatpush2.bf16.msra.mxu0 0
  %305 = vmatprep.subr.bf16.mxu0 0
  %306 = vmatpush2.bf16.msra.mxu0 0
  %307 = vmatprep.mubr.bf16.mxu0 0
  %308 = vmatmul.mubr.bf16.gmra.mxu0 %v96
  %v309 = vpop.f32.mrf.mxu0
  %v310 = vadd.f32 %v135, %v309
  %v311 = vpop.f32.mrf.mxu0
  %v312 = vadd.f32 %v139, %v311
  %v313 = vpop.f32.mrf.mxu0
  %v314 = vadd.f32 %v135, %v313
  %v315 = vpop.f32.mrf.mxu0
  %v316 = vadd.f32 %v139, %v315
  %317 = vmatprep.mubr.bf16.mxu0 0
  %318 = vmatmul.mubr.bf16.gmra.mxu0 %v97
  %v319 = vpop.f32.mrf.mxu0
  %v320 = vadd.f32 %v135, %v319
  %v321 = vpop.f32.mrf.mxu0
  %v322 = vadd.f32 %v139, %v321
  %v323 = vpop.f32.mrf.mxu0
  %v324 = vadd.f32 %v135, %v323
  %v325 = vpop.f32.mrf.mxu0
  %v326 = vadd.f32 %v139, %v325
  %327 = vdwg.mxu0
  %328 = vmatprep.subr.bf16.mxu0 0
  %329 = vmatpush1.bf16.msra.mxu0 %v250
  %330 = vmatprep.subr.bf16.mxu0 0
  %331 = vmatpush1.bf16.msra.mxu0 %v247
  %332 = vmatprep.subr.bf16.mxu0 0
  %333 = vmatpush1.bf16.msra.mxu0 %v244
  %334 = vmatprep.subr.bf16.mxu0 0
  %335 = vmatpush1.bf16.msra.mxu0 %v241
  %336 = vmatprep.subr.bf16.mxu0 0
  %337 = vmatpush1.bf16.msra.mxu0 %v238
  %338 = vmatprep.subr.bf16.mxu0 0
  %339 = vmatpush1.bf16.msra.mxu0 %v235
  %340 = vmatprep.subr.bf16.mxu0 0
  %341 = vmatpush1.bf16.msra.mxu0 %v232
  %342 = vmatprep.subr.bf16.mxu0 0
  %343 = vmatpush1.bf16.msra.mxu0 %v229
  %344 = vmatprep.subr.bf16.mxu0 0
  %345 = vmatpush2.bf16.msra.mxu0 0
  %346 = vmatprep.subr.bf16.mxu0 0
  %347 = vmatpush2.bf16.msra.mxu0 0
  %348 = vmatprep.subr.bf16.mxu0 0
  %349 = vmatpush2.bf16.msra.mxu0 0
  %350 = vmatprep.subr.bf16.mxu0 0
  %351 = vmatpush2.bf16.msra.mxu0 0
  %352 = vmatprep.subr.bf16.mxu0 0
  %353 = vmatpush2.bf16.msra.mxu0 0
  %354 = vmatprep.subr.bf16.mxu0 0
  %355 = vmatpush2.bf16.msra.mxu0 0
  %356 = vmatprep.subr.bf16.mxu0 0
  %357 = vmatpush2.bf16.msra.mxu0 0
  %358 = vmatprep.subr.bf16.mxu0 0
  %359 = vmatpush2.bf16.msra.mxu0 0
  %360 = vmatprep.mubr.bf16.mxu0 0
  %361 = vmatmul.mubr.bf16.gmra.mxu0 %v96
  %v362 = vpop.f32.mrf.mxu0
  %v363 = vadd.f32 %v143, %v362
  %v364 = vpop.f32.mrf.mxu0
  %v365 = vpop.f32.mrf.mxu0
  %v366 = vadd.f32 %v143, %v365
  %v367 = vpop.f32.mrf.mxu0
  %368 = vmatprep.mubr.bf16.mxu0 0
  %369 = vmatmul.mubr.bf16.gmra.mxu0 %v97
  %v370 = vpop.f32.mrf.mxu0
  %v371 = vadd.f32 %v143, %v370
  %v372 = vpop.f32.mrf.mxu0
  %v373 = vpop.f32.mrf.mxu0
  %v374 = vadd.f32 %v143, %v373
  %v375 = vpop.f32.mrf.mxu0
  %376 = vdwg.mxu0
  %v377 = vpack.c.bf16 %v314, %v310
  %v378 = vpack.c.bf16 %v316, %v312
  %v379 = vpack.c.bf16 %v366, %v363
  %v380 = vpack.c.bf16 %v324, %v320
  %v381 = vpack.c.bf16 %v326, %v322
  %v382 = vpack.c.bf16 %v374, %v371
  %v389 = vunpack.c.l.b16 %v377
  %v390 = vunpack.c.l.b16 %v378
  %v391 = vunpack.c.l.b16 %v379
  %v392 = vunpack.c.h.b16 %v377
  %v393 = vunpack.c.h.b16 %v378
  %v394 = vunpack.c.h.b16 %v379
  %v395 = vunpack.c.l.b16 %v380
  %v396 = vunpack.c.l.b16 %v381
  %v397 = vunpack.c.l.b16 %v382
  %v398 = vunpack.c.h.b16 %v380
  %v399 = vunpack.c.h.b16 %v381
  %v400 = vunpack.c.h.b16 %v382
  %v401 = vpack.c.b16 %v390, %v389
  %v402 = vpack.c.b16 %v391, %v391
  %v403 = vpack.c.b16 %v393, %v392
  %v404 = vpack.c.b16 %v394, %v394
  %v405 = vpack.c.b16 %v396, %v395
  %v406 = vpack.c.b16 %v397, %v397
  %v407 = vpack.c.b16 %v399, %v398
  %v408 = vpack.c.b16 %v400, %v400
  %417 = vst [vmem:[%s5] sm:$0xff] %v401
  %418 = vst [vmem:[%s5 + $0x8] sm:$0xf] %v402
  %419 = vst [vmem:[%s5 + $0xc] sm:$0xff] %v403
  %420 = vst [vmem:[%s5 + $0x14] sm:$0xf] %v404
  %421 = vst [vmem:[%s5 + $0x18] sm:$0xff] %v405
  %422 = vst [vmem:[%s5 + $0x20] sm:$0xf] %v406
  %423 = vst [vmem:[%s5 + $0x24] sm:$0xff] %v407
  %424 = vst [vmem:[%s5 + $0x2c] sm:$0xf] %v408
  // Predicated region
  $region22: #{image_encoder_forward.13} parent=0 // pred_check
    _
  $region23: #{image_encoder_forward.13} parent=0 // pred_check_branch
    %426 = sbr.rel (0) target = $region25
  $region24: #{image_encoder_forward.13} parent=0 // pred_region
    _
  $region25: #{image_encoder_forward.13} parent=0 // pred_fallthru
    _
  // Predicated region
  $region26: #{image_encoder_forward.13} parent=0 // pred_check
    _
  $region27: #{image_encoder_forward.13} parent=0 // pred_check_branch
    %428 = sbr.rel (0) target = $region29
  $region28: #{image_encoder_forward.13} parent=0 // pred_region
    _
  $region29: #{image_encoder_forward.13} parent=0 // pred_fallthru
    _

// kernel: image_encoder_forward.11
$region0: #{image_encoder_forward.11}
  #allocation0 [shape = 'u32[]', space=smem, size = 0x4, offset = 0x4, fixed_abs, tag = 'smem constant byte address 0x4 - core index']
  #allocation1 [shape = 'u32[144,128]{1,0:T(1,128)}', space=vmem, size = 0x12000, scoped, tag = 'internal scratch']
  %s0 = inlined_call_operand.vmem [shape: bf16[8,640], index: 0, kind: input, shape index: {}]
  %s1 = inlined_call_operand.vmem [shape: bf16[640,128], index: 1, kind: input, shape index: {}]
  %s2 = inlined_call_operand.vmem [shape: f32[1,128], index: 2, kind: input, shape index: {}]
  %s3 = inlined_call_operand.vmem [shape: bf16[8,128], index: 3, kind: output, shape index: {}]
  %s4 = sld [smem:[#allocation0]]
  $region22: #{image_encoder_forward.11} parent=0
    _
  %s6 = ssub.s32 1, %s4
  %s7 = scalar_select 0, %s6, %s4
  // Predicated region
  $region2: #{image_encoder_forward.11} parent=0 // pred_check
    _
  $region3: #{image_encoder_forward.11} parent=0 // pred_check_branch
    %9 = sbr.rel (0) target = $region5
  $region4: #{image_encoder_forward.11} parent=0 // pred_region
    _
  $region5: #{image_encoder_forward.11} parent=0 // pred_fallthru
    _
  // Predicated region
  $region6: #{image_encoder_forward.11} parent=0 // pred_check
    _
  $region7: #{image_encoder_forward.11} parent=0 // pred_check_branch
    %11 = sbr.rel (0) target = $region9
  $region8: #{image_encoder_forward.11} parent=0 // pred_region
    _
  $region9: #{image_encoder_forward.11} parent=0 // pred_fallthru
    _
  // Predicated region
  $region10: #{image_encoder_forward.11} parent=0 // pred_check
    _
  $region11: #{image_encoder_forward.11} parent=0 // pred_check_branch
    %13 = sbr.rel (0) target = $region13
  $region12: #{image_encoder_forward.11} parent=0 // pred_region
    _
  $region13: #{image_encoder_forward.11} parent=0 // pred_fallthru
    _
  %v15 = vld [vmem:[%s0] sm:$0xff]
  %v16 = vld [vmem:[%s0 + $0x8] sm:$0xff]
  %v17 = vld [vmem:[%s0 + $0x10] sm:$0xf]
  %v18 = vld [vmem:[%s1] sm:$0xf]
  %v19 = vld [vmem:[%s1 + $0x4] sm:$0xf]
  %v20 = vld [vmem:[%s1 + $0x8] sm:$0xf]
  %v21 = vld [vmem:[%s1 + $0xc] sm:$0xf]
  %v22 = vld [vmem:[%s1 + $0x10] sm:$0xf]
  %v23 = vld [vmem:[%s1 + $0x14] sm:$0xf]
  %v24 = vld [vmem:[%s1 + $0x18] sm:$0xf]
  %v25 = vld [vmem:[%s1 + $0x1c] sm:$0xf]
  %v26 = vld [vmem:[%s1 + $0x20] sm:$0xf]
  %v27 = vld [vmem:[%s1 + $0x24] sm:$0xf]
  %v28 = vld [vmem:[%s1 + $0x28] sm:$0xf]
  %v29 = vld [vmem:[%s1 + $0x2c] sm:$0xf]
  %v30 = vld [vmem:[%s1 + $0x30] sm:$0xf]
  %v31 = vld [vmem:[%s1 + $0x34] sm:$0xf]
  %v32 = vld [vmem:[%s1 + $0x38] sm:$0xf]
  %v33 = vld [vmem:[%s1 + $0x3c] sm:$0xf]
  %v34 = vld [vmem:[%s1 + $0x40] sm:$0xf]
  %v35 = vld [vmem:[%s1 + $0x44] sm:$0xf]
  %v36 = vld [vmem:[%s1 + $0x48] sm:$0xf]
  %v37 = vld [vmem:[%s1 + $0x4c] sm:$0xf]
  %v38 = vld [vmem:[%s1 + $0x50] sm:$0xf]
  %v39 = vld [vmem:[%s1 + $0x54] sm:$0xf]
  %v40 = vld [vmem:[%s1 + $0x58] sm:$0xf]
  %v41 = vld [vmem:[%s1 + $0x5c] sm:$0xf]
  %v42 = vld [vmem:[%s1 + $0x60] sm:$0xf]
  %v43 = vld [vmem:[%s1 + $0x64] sm:$0xf]
  %v44 = vld [vmem:[%s1 + $0x68] sm:$0xf]
  %v45 = vld [vmem:[%s1 + $0x6c] sm:$0xf]
  %v46 = vld [vmem:[%s1 + $0x70] sm:$0xf]
  %v47 = vld [vmem:[%s1 + $0x74] sm:$0xf]
  %v48 = vld [vmem:[%s1 + $0x78] sm:$0xf]
  %v49 = vld [vmem:[%s1 + $0x7c] sm:$0xf]
  %v50 = vld [vmem:[%s1 + $0x80] sm:$0xf]
  %v51 = vld [vmem:[%s1 + $0x84] sm:$0xf]
  %v52 = vld [vmem:[%s1 + $0x88] sm:$0xf]
  %v53 = vld [vmem:[%s1 + $0x8c] sm:$0xf]
  %v54 = vld [vmem:[%s1 + $0x90] sm:$0xf]
  %v55 = vld [vmem:[%s1 + $0x94] sm:$0xf]
  %v56 = vld [vmem:[%s1 + $0x98] sm:$0xf]
  %v57 = vld [vmem:[%s1 + $0x9c] sm:$0xf]
  %v58 = vld [vmem:[%s1 + $0xa0] sm:$0xf]
  %v59 = vld [vmem:[%s1 + $0xa4] sm:$0xf]
  %v60 = vld [vmem:[%s1 + $0xa8] sm:$0xf]
  %v61 = vld [vmem:[%s1 + $0xac] sm:$0xf]
  %v62 = vld [vmem:[%s1 + $0xb0] sm:$0xf]
  %v63 = vld [vmem:[%s1 + $0xb4] sm:$0xf]
  %v64 = vld [vmem:[%s1 + $0xb8] sm:$0xf]
  %v65 = vld [vmem:[%s1 + $0xbc] sm:$0xf]
  %v66 = vld [vmem:[%s1 + $0xc0] sm:$0xf]
  %v67 = vld [vmem:[%s1 + $0xc4] sm:$0xf]
  %v68 = vld [vmem:[%s1 + $0xc8] sm:$0xf]
  %v69 = vld [vmem:[%s1 + $0xcc] sm:$0xf]
  %v70 = vld [vmem:[%s1 + $0xd0] sm:$0xf]
  %v71 = vld [vmem:[%s1 + $0xd4] sm:$0xf]
  %v72 = vld [vmem:[%s1 + $0xd8] sm:$0xf]
  %v73 = vld [vmem:[%s1 + $0xdc] sm:$0xf]
  %v74 = vld [vmem:[%s1 + $0xe0] sm:$0xf]
  %v75 = vld [vmem:[%s1 + $0xe4] sm:$0xf]
  %v76 = vld [vmem:[%s1 + $0xe8] sm:$0xf]
  %v77 = vld [vmem:[%s1 + $0xec] sm:$0xf]
  %v78 = vld [vmem:[%s1 + $0xf0] sm:$0xf]
  %v79 = vld [vmem:[%s1 + $0xf4] sm:$0xf]
  %v80 = vld [vmem:[%s1 + $0xf8] sm:$0xf]
  %v81 = vld [vmem:[%s1 + $0xfc] sm:$0xf]
  %v82 = vld [vmem:[%s1 + $0x100] sm:$0xf]
  %v83 = vld [vmem:[%s1 + $0x104] sm:$0xf]
  %v84 = vld [vmem:[%s1 + $0x108] sm:$0xf]
  %v85 = vld [vmem:[%s1 + $0x10c] sm:$0xf]
  %v86 = vld [vmem:[%s1 + $0x110] sm:$0xf]
  %v87 = vld [vmem:[%s1 + $0x114] sm:$0xf]
  %v88 = vld [vmem:[%s1 + $0x118] sm:$0xf]
  %v89 = vld [vmem:[%s1 + $0x11c] sm:$0xf]
  %v90 = vld [vmem:[%s1 + $0x120] sm:$0xf]
  %v91 = vld [vmem:[%s1 + $0x124] sm:$0xf]
  %v92 = vld [vmem:[%s1 + $0x128] sm:$0xf]
  %v93 = vld [vmem:[%s1 + $0x12c] sm:$0xf]
  %v94 = vld [vmem:[%s1 + $0x130] sm:$0xf]
  %v95 = vld [vmem:[%s1 + $0x134] sm:$0xf]
  %v96 = vld [vmem:[%s1 + $0x138] sm:$0xf]
  %v97 = vld [vmem:[%s1 + $0x13c] sm:$0xf]
  %v98 = vld [vmem:[%s2] sm:$0x1]
  %v100 = vlaneseq
  %v101 = vshrl.u32 %v100, 7
  %v102 = vsub.s32 0, %v101
  %v103 = vrot.slane %v98, %v102
  %v108 = vunpack.c.l.b16 %v15
  %v109 = vunpack.c.h.b16 %v15
  %v110 = vunpack.c.l.b16 %v16
  %v111 = vunpack.c.h.b16 %v16
  %v112 = vunpack.c.l.b16 %v17
  %v113 = vpack.c.b16 %v108, %v108
  %v114 = vpack.c.b16 %v109, %v109
  %v115 = vpack.c.b16 %v110, %v110
  %v116 = vpack.c.b16 %v111, %v111
  %v117 = vpack.c.b16 %v112, %v112
  %v203 = vunpack.c.l.b16 %v18
  %v204 = vunpack.c.l.b16 %v19
  %v205 = vunpack.c.l.b16 %v20
  %v206 = vunpack.c.l.b16 %v21
  %v207 = vunpack.c.l.b16 %v22
  %v208 = vunpack.c.l.b16 %v23
  %v209 = vunpack.c.l.b16 %v24
  %v210 = vunpack.c.l.b16 %v25
  %v211 = vunpack.c.l.b16 %v26
  %v212 = vunpack.c.l.b16 %v27
  %v213 = vunpack.c.l.b16 %v28
  %v214 = vunpack.c.l.b16 %v29
  %v215 = vunpack.c.l.b16 %v30
  %v216 = vunpack.c.l.b16 %v31
  %v217 = vunpack.c.l.b16 %v32
  %v218 = vunpack.c.l.b16 %v33
  %v219 = vunpack.c.l.b16 %v34
  %v220 = vunpack.c.l.b16 %v35
  %v221 = vunpack.c.l.b16 %v36
  %v222 = vunpack.c.l.b16 %v37
  %v223 = vunpack.c.l.b16 %v38
  %v224 = vunpack.c.l.b16 %v39
  %v225 = vunpack.c.l.b16 %v40
  %v226 = vunpack.c.l.b16 %v41
  %v227 = vunpack.c.l.b16 %v42
  %v228 = vunpack.c.l.b16 %v43
  %v229 = vunpack.c.l.b16 %v44
  %v230 = vunpack.c.l.b16 %v45
  %v231 = vunpack.c.l.b16 %v46
  %v232 = vunpack.c.l.b16 %v47
  %v233 = vunpack.c.l.b16 %v48
  %v234 = vunpack.c.l.b16 %v49
  %v235 = vunpack.c.l.b16 %v50
  %v236 = vunpack.c.l.b16 %v51
  %v237 = vunpack.c.l.b16 %v52
  %v238 = vunpack.c.l.b16 %v53
  %v239 = vunpack.c.l.b16 %v54
  %v240 = vunpack.c.l.b16 %v55
  %v241 = vunpack.c.l.b16 %v56
  %v242 = vunpack.c.l.b16 %v57
  %v243 = vunpack.c.l.b16 %v58
  %v244 = vunpack.c.l.b16 %v59
  %v245 = vunpack.c.l.b16 %v60
  %v246 = vunpack.c.l.b16 %v61
  %v247 = vunpack.c.l.b16 %v62
  %v248 = vunpack.c.l.b16 %v63
  %v249 = vunpack.c.l.b16 %v64
  %v250 = vunpack.c.l.b16 %v65
  %v251 = vunpack.c.l.b16 %v66
  %v252 = vunpack.c.l.b16 %v67
  %v253 = vunpack.c.l.b16 %v68
  %v254 = vunpack.c.l.b16 %v69
  %v255 = vunpack.c.l.b16 %v70
  %v256 = vunpack.c.l.b16 %v71
  %v257 = vunpack.c.l.b16 %v72
  %v258 = vunpack.c.l.b16 %v73
  %v259 = vunpack.c.l.b16 %v74
  %v260 = vunpack.c.l.b16 %v75
  %v261 = vunpack.c.l.b16 %v76
  %v262 = vunpack.c.l.b16 %v77
  %v263 = vunpack.c.l.b16 %v78
  %v264 = vunpack.c.l.b16 %v79
  %v265 = vunpack.c.l.b16 %v80
  %v266 = vunpack.c.l.b16 %v81
  %v267 = vunpack.c.l.b16 %v82
  %v268 = vunpack.c.l.b16 %v83
  %v269 = vunpack.c.l.b16 %v84
  %v270 = vunpack.c.l.b16 %v85
  %v271 = vunpack.c.l.b16 %v86
  %v272 = vunpack.c.l.b16 %v87
  %v273 = vunpack.c.l.b16 %v88
  %v274 = vunpack.c.l.b16 %v89
  %v275 = vunpack.c.l.b16 %v90
  %v276 = vunpack.c.l.b16 %v91
  %v277 = vunpack.c.l.b16 %v92
  %v278 = vunpack.c.l.b16 %v93
  %v279 = vunpack.c.l.b16 %v94
  %v280 = vunpack.c.l.b16 %v95
  %v281 = vunpack.c.l.b16 %v96
  %v282 = vunpack.c.l.b16 %v97
  %v283 = vpack.c.b16 %v204, %v203
  %v284 = vpack.c.b16 %v206, %v205
  %v285 = vpack.c.b16 %v208, %v207
  %v286 = vpack.c.b16 %v210, %v209
  %v287 = vpack.c.b16 %v212, %v211
  %v288 = vpack.c.b16 %v214, %v213
  %v289 = vpack.c.b16 %v216, %v215
  %v290 = vpack.c.b16 %v218, %v217
  %v291 = vpack.c.b16 %v220, %v219
  %v292 = vpack.c.b16 %v222, %v221
  %v293 = vpack.c.b16 %v224, %v223
  %v294 = vpack.c.b16 %v226, %v225
  %v295 = vpack.c.b16 %v228, %v227
  %v296 = vpack.c.b16 %v230, %v229
  %v297 = vpack.c.b16 %v232, %v231
  %v298 = vpack.c.b16 %v234, %v233
  %v299 = vpack.c.b16 %v236, %v235
  %v300 = vpack.c.b16 %v238, %v237
  %v301 = vpack.c.b16 %v240, %v239
  %v302 = vpack.c.b16 %v242, %v241
  %v303 = vpack.c.b16 %v244, %v243
  %v304 = vpack.c.b16 %v246, %v245
  %v305 = vpack.c.b16 %v248, %v247
  %v306 = vpack.c.b16 %v250, %v249
  %v307 = vpack.c.b16 %v252, %v251
  %v308 = vpack.c.b16 %v254, %v253
  %v309 = vpack.c.b16 %v256, %v255
  %v310 = vpack.c.b16 %v258, %v257
  %v311 = vpack.c.b16 %v260, %v259
  %v312 = vpack.c.b16 %v262, %v261
  %v313 = vpack.c.b16 %v264, %v263
  %v314 = vpack.c.b16 %v266, %v265
  %v315 = vpack.c.b16 %v268, %v267
  %v316 = vpack.c.b16 %v270, %v269
  %v317 = vpack.c.b16 %v272, %v271
  %v318 = vpack.c.b16 %v274, %v273
  %v319 = vpack.c.b16 %v276, %v275
  %v320 = vpack.c.b16 %v278, %v277
  %v321 = vpack.c.b16 %v280, %v279
  %v322 = vpack.c.b16 %v282, %v281
  %363 = vmatprep.subr.bf16.mxu0 0
  %364 = vmatpush1.bf16.msra.mxu0 %v290
  %365 = vmatprep.subr.bf16.mxu0 0
  %366 = vmatpush1.bf16.msra.mxu0 %v289
  %367 = vmatprep.subr.bf16.mxu0 0
  %368 = vmatpush1.bf16.msra.mxu0 %v288
  %369 = vmatprep.subr.bf16.mxu0 0
  %370 = vmatpush1.bf16.msra.mxu0 %v287
  %371 = vmatprep.subr.bf16.mxu0 0
  %372 = vmatpush1.bf16.msra.mxu0 %v286
  %373 = vmatprep.subr.bf16.mxu0 0
  %374 = vmatpush1.bf16.msra.mxu0 %v285
  %375 = vmatprep.subr.bf16.mxu0 0
  %376 = vmatpush1.bf16.msra.mxu0 %v284
  %377 = vmatprep.subr.bf16.mxu0 0
  %378 = vmatpush1.bf16.msra.mxu0 %v283
  %379 = vmatprep.subr.bf16.mxu0 0
  %380 = vmatpush2.bf16.msra.mxu0 %v298
  %381 = vmatprep.subr.bf16.mxu0 0
  %382 = vmatpush2.bf16.msra.mxu0 %v297
  %383 = vmatprep.subr.bf16.mxu0 0
  %384 = vmatpush2.bf16.msra.mxu0 %v296
  %385 = vmatprep.subr.bf16.mxu0 0
  %386 = vmatpush2.bf16.msra.mxu0 %v295
  %387 = vmatprep.subr.bf16.mxu0 0
  %388 = vmatpush2.bf16.msra.mxu0 %v294
  %389 = vmatprep.subr.bf16.mxu0 0
  %390 = vmatpush2.bf16.msra.mxu0 %v293
  %391 = vmatprep.subr.bf16.mxu0 0
  %392 = vmatpush2.bf16.msra.mxu0 %v292
  %393 = vmatprep.subr.bf16.mxu0 0
  %394 = vmatpush2.bf16.msra.mxu0 %v291
  %395 = vmatprep.mubr.bf16.mxu0 %v114
  %396 = vmatmul.mubr.bf16.gmra.mxu0 %v113
  %v397 = vpop.f32.mrf.mxu0
  %v398 = vadd.f32 %v103, %v397
  %v399 = vpop.f32.mrf.mxu0
  %v400 = vpop.f32.mrf.mxu0
  %v401 = vpop.f32.mrf.mxu0
  %402 = vdwg.mxu0
  %403 = vmatprep.subr.bf16.mxu0 0
  %404 = vmatpush1.bf16.msra.mxu0 %v306
  %405 = vmatprep.subr.bf16.mxu0 0
  %406 = vmatpush1.bf16.msra.mxu0 %v305
  %407 = vmatprep.subr.bf16.mxu0 0
  %408 = vmatpush1.bf16.msra.mxu0 %v304
  %409 = vmatprep.subr.bf16.mxu0 0
  %410 = vmatpush1.bf16.msra.mxu0 %v303
  %411 = vmatprep.subr.bf16.mxu0 0
  %412 = vmatpush1.bf16.msra.mxu0 %v302
  %413 = vmatprep.subr.bf16.mxu0 0
  %414 = vmatpush1.bf16.msra.mxu0 %v301
  %415 = vmatprep.subr.bf16.mxu0 0
  %416 = vmatpush1.bf16.msra.mxu0 %v300
  %417 = vmatprep.subr.bf16.mxu0 0
  %418 = vmatpush1.bf16.msra.mxu0 %v299
  %419 = vmatprep.subr.bf16.mxu0 0
  %420 = vmatpush2.bf16.msra.mxu0 %v314
  %421 = vmatprep.subr.bf16.mxu0 0
  %422 = vmatpush2.bf16.msra.mxu0 %v313
  %423 = vmatprep.subr.bf16.mxu0 0
  %424 = vmatpush2.bf16.msra.mxu0 %v312
  %425 = vmatprep.subr.bf16.mxu0 0
  %426 = vmatpush2.bf16.msra.mxu0 %v311
  %427 = vmatprep.subr.bf16.mxu0 0
  %428 = vmatpush2.bf16.msra.mxu0 %v310
  %429 = vmatprep.subr.bf16.mxu0 0
  %430 = vmatpush2.bf16.msra.mxu0 %v309
  %431 = vmatprep.subr.bf16.mxu0 0
  %432 = vmatpush2.bf16.msra.mxu0 %v308
  %433 = vmatprep.subr.bf16.mxu0 0
  %434 = vmatpush2.bf16.msra.mxu0 %v307
  %435 = vmatprep.mubr.bf16.mxu0 %v116
  %436 = vmatmul.mubr.bf16.gmra.mxu0 %v115
  %v437 = vpop.f32.mrf.mxu0
  %v438 = vadd.f32 %v398, %v437
  %v439 = vpop.f32.mrf.mxu0
  %v440 = vpop.f32.mrf.mxu0
  %v441 = vpop.f32.mrf.mxu0
  %442 = vdwg.mxu0
  %443 = vmatprep.subr.bf16.mxu0 0
  %444 = vmatpush1.bf16.msra.mxu0 %v322
  %445 = vmatprep.subr.bf16.mxu0 0
  %446 = vmatpush1.bf16.msra.mxu0 %v321
  %447 = vmatprep.subr.bf16.mxu0 0
  %448 = vmatpush1.bf16.msra.mxu0 %v320
  %449 = vmatprep.subr.bf16.mxu0 0
  %450 = vmatpush1.bf16.msra.mxu0 %v319
  %451 = vmatprep.subr.bf16.mxu0 0
  %452 = vmatpush1.bf16.msra.mxu0 %v318
  %453 = vmatprep.subr.bf16.mxu0 0
  %454 = vmatpush1.bf16.msra.mxu0 %v317
  %455 = vmatprep.subr.bf16.mxu0 0
  %456 = vmatpush1.bf16.msra.mxu0 %v316
  %457 = vmatprep.subr.bf16.mxu0 0
  %458 = vmatpush1.bf16.msra.mxu0 %v315
  %459 = vmatprep.subr.bf16.mxu0 0
  %460 = vmatpush2.bf16.msra.mxu0 0
  %461 = vmatprep.subr.bf16.mxu0 0
  %462 = vmatpush2.bf16.msra.mxu0 0
  %463 = vmatprep.subr.bf16.mxu0 0
  %464 = vmatpush2.bf16.msra.mxu0 0
  %465 = vmatprep.subr.bf16.mxu0 0
  %466 = vmatpush2.bf16.msra.mxu0 0
  %467 = vmatprep.subr.bf16.mxu0 0
  %468 = vmatpush2.bf16.msra.mxu0 0
  %469 = vmatprep.subr.bf16.mxu0 0
  %470 = vmatpush2.bf16.msra.mxu0 0
  %471 = vmatprep.subr.bf16.mxu0 0
  %472 = vmatpush2.bf16.msra.mxu0 0
  %473 = vmatprep.subr.bf16.mxu0 0
  %474 = vmatpush2.bf16.msra.mxu0 0
  %475 = vmatprep.mubr.bf16.mxu0 0
  %476 = vmatmul.mubr.bf16.gmra.mxu0 %v117
  %v477 = vpop.f32.mrf.mxu0
  %v478 = vadd.f32 %v438, %v477
  %v479 = vpop.f32.mrf.mxu0
  %v480 = vpop.f32.mrf.mxu0
  %v481 = vpop.f32.mrf.mxu0
  %482 = vdwg.mxu0
  %v483 = vpack.c.bf16 %v478, %v478
  %484 = vst [vmem:[%s3] sm:$0xf] %v483
  // Predicated region
  $region14: #{image_encoder_forward.11} parent=0 // pred_check
    _
  $region15: #{image_encoder_forward.11} parent=0 // pred_check_branch
    %486 = sbr.rel (0) target = $region17
  $region16: #{image_encoder_forward.11} parent=0 // pred_region
    _
  $region17: #{image_encoder_forward.11} parent=0 // pred_fallthru
    _
  // Predicated region
  $region18: #{image_encoder_forward.11} parent=0 // pred_check
    _
  $region19: #{image_encoder_forward.11} parent=0 // pred_check_branch
    %488 = sbr.rel (0) target = $region21
  $region20: #{image_encoder_forward.11} parent=0 // pred_region
    _
  $region21: #{image_encoder_forward.11} parent=0 // pred_fallthru
    _

// kernel: image_encoder_forward.14
$region0: #{image_encoder_forward.14}
  #allocation0 [shape = 'u32[]', space=smem, size = 0x4, offset = 0x4, fixed_abs, tag = 'smem constant byte address 0x4 - core index']
  #allocation1 [shape = 'u32[144,128]{1,0:T(1,128)}', space=vmem, size = 0x12000, scoped, tag = 'internal scratch']
  %s0 = inlined_call_operand.vmem [shape: bf16[32,384], index: 0, kind: input, shape index: {}, may-alias: {0,1,2}]
  %s1 = inlined_call_operand.vmem [shape: bf16[32,384], index: 1, kind: input, shape index: {}, may-alias: {0,1,2}]
  %s2 = inlined_call_operand.vmem [shape: bf16[32,384], index: 2, kind: input, shape index: {}, may-alias: {0,1,2}]
  %s3 = inlined_call_operand.vmem [shape: bf16[32,128], index: 3, kind: output, shape index: {}]
  %s4 = sld [smem:[#allocation0]]
  $region168: #{image_encoder_forward.14} parent=0
    _
  %s6 = ssub.s32 1, %s4
  %s7 = scalar_select 0, %s6, %s4
  $region1: #{image_encoder_forward.14} parent=0
    #allocation2 [shape = 'u8[8192]{0}', space=vmem, size = 0x2000, scoped, tag = 'input window, operand 0']
    #allocation3 [shape = 'u8[8192]{0}', space=vmem, size = 0x2000, scoped, tag = 'input window, operand 1']
    #allocation4 [shape = 'u8[8192]{0}', space=vmem, size = 0x2000, scoped, tag = 'input window, operand 2']
    loop: start=0, step=1, limit=4
    $region2: #{image_encoder_forward.14} parent=1 // loop_pre_header
      _
    $region3: #{image_encoder_forward.14} parent=1 // loop_header
      %s9 = sphi 0, %s13
      %p10 = scmp.ge.s32.totalorder %s9, 4
      %s16 = sphi 0, %s28
      %s17 = sphi 0, %s24
      %s18 = sphi 0, %s16
      %s19 = sphi 0, %s17
      %s20 = sphi 0, %s18
      %s21 = sphi 0, %s19
      %s33 = sphi 0, %s35
      %s36 = sphi 0, %s33
      %s37 = sphi 0, %s36
      %s53 = sphi 0, %s37
      %s63 = sphi 0, %s65
      %s66 = sphi 0, %s63
      %s67 = sphi 0, %s66
      %s83 = sphi 0, %s67
      %s93 = sphi 0, %s95
      %s96 = sphi 0, %s93
      %s97 = sphi 0, %s96
      %s113 = sphi 0, %s97
      %s121 = sphi 0, %s123
      %s124 = sphi 0, %s121
      %s125 = sphi 0, %s124
      %s141 = sphi 0, %s125
    $region4: #{image_encoder_forward.14} parent=1 // loop_header_branch
      %12 = sbr.rel (%p10) target = $region8
    $region5: #{image_encoder_forward.14} parent=1 // loop_body
      %s14 = ssub.s32 %s9, 1
      %s15 = ssub.s32 %s9, 2
      %s22 = sadd.s32 1, %s17
      %p23 = scmp.ge.s32.totalorder %s22, 1
      %s24 = scalar_select %p23, 0, %s22
      %s25 = sadd.s32 1, %s16
      %s26 = scalar_select %p23, %s25, %s16
      %p27 = scmp.ge.s32.totalorder %s26, 2
      %s28 = scalar_select %p27, 0, %s26
      %s29 = ssub.s32 %s16, %s28
      %s30 = ssub.s32 %s17, %s24
      %s31 = sor.u32 %s29, %s30
      %p32 = scmp.eq.s32.totalorder %s31, 0
      %s34 = sadd.s32 %s33, 1
      %s35 = scalar_select %p32, %s33, %s34
      %p38 = pneg %p32
      %p39 = scmp.eq.s32.totalorder %s9, 1
      %p40 = por %p38, %p39
      %p41 = scmp.ne.s32.totalorder %s33, %s36
      %p42 = scmp.eq.s32.totalorder %s9, 0
      %p43 = por %p41, %p42
      %p44 = scmp.ne.s32.totalorder %s33, %s36
      %p45 = scmp.eq.s32.totalorder %s14, 1
      %p46 = por %p44, %p45
      %p47 = scmp.ne.s32.totalorder %s36, %s37
      %p48 = scmp.eq.s32.totalorder %s14, 0
      %p49 = por %p47, %p48
      %p50 = scmp.ne.s32.totalorder %s36, %s37
      %p51 = scmp.eq.s32.totalorder %s15, 1
      %p52 = por %p50, %p51
      %p54 = scmp.ne.s32.totalorder %s37, %s53
      %p55 = scmp.eq.s32.totalorder %s15, 0
      %p56 = por %p54, %p55
      %s57 = sadd.s32 %s17, 1
      %s58 = sadd.s32 %s24, 1
      %s59 = ssub.s32 %s16, %s28
      %s60 = ssub.s32 %s57, %s58
      %s61 = sor.u32 %s59, %s60
      %p62 = scmp.eq.s32.totalorder %s61, 0
      %s64 = sadd.s32 %s63, 1
      %s65 = scalar_select %p62, %s63, %s64
      %p68 = pneg %p62
      %p69 = scmp.eq.s32.totalorder %s9, 1
      %p70 = por %p68, %p69
      %p71 = scmp.ne.s32.totalorder %s63, %s66
      %p72 = scmp.eq.s32.totalorder %s9, 0
      %p73 = por %p71, %p72
      %p74 = scmp.ne.s32.totalorder %s63, %s66
      %p75 = scmp.eq.s32.totalorder %s14, 1
      %p76 = por %p74, %p75
      %p77 = scmp.ne.s32.totalorder %s66, %s67
      %p78 = scmp.eq.s32.totalorder %s14, 0
      %p79 = por %p77, %p78
      %p80 = scmp.ne.s32.totalorder %s66, %s67
      %p81 = scmp.eq.s32.totalorder %s15, 1
      %p82 = por %p80, %p81
      %p84 = scmp.ne.s32.totalorder %s67, %s83
      %p85 = scmp.eq.s32.totalorder %s15, 0
      %p86 = por %p84, %p85
      %s87 = sadd.s32 %s17, 2
      %s88 = sadd.s32 %s24, 2
      %s89 = ssub.s32 %s16, %s28
      %s90 = ssub.s32 %s87, %s88
      %s91 = sor.u32 %s89, %s90
      %p92 = scmp.eq.s32.totalorder %s91, 0
      %s94 = sadd.s32 %s93, 1
      %s95 = scalar_select %p92, %s93, %s94
      %p98 = pneg %p92
      %p99 = scmp.eq.s32.totalorder %s9, 1
      %p100 = por %p98, %p99
      %p101 = scmp.ne.s32.totalorder %s93, %s96
      %p102 = scmp.eq.s32.totalorder %s9, 0
      %p103 = por %p101, %p102
      %p104 = scmp.ne.s32.totalorder %s93, %s96
      %p105 = scmp.eq.s32.totalorder %s14, 1
      %p106 = por %p104, %p105
      %p107 = scmp.ne.s32.totalorder %s96, %s97
      %p108 = scmp.eq.s32.totalorder %s14, 0
      %p109 = por %p107, %p108
      %p110 = scmp.ne.s32.totalorder %s96, %s97
      %p111 = scmp.eq.s32.totalorder %s15, 1
      %p112 = por %p110, %p111
      %p114 = scmp.ne.s32.totalorder %s97, %s113
      %p115 = scmp.eq.s32.totalorder %s15, 0
      %p116 = por %p114, %p115
      %s117 = ssub.s32 %s16, %s28
      %s118 = ssub.s32 %s17, %s24
      %s119 = sor.u32 %s117, %s118
      %p120 = scmp.eq.s32.totalorder %s119, 0
      %s122 = sadd.s32 %s121, 1
      %s123 = scalar_select %p120, %s121, %s122
      %p126 = pneg %p120
      %p127 = scmp.eq.s32.totalorder %s9, 1
      %p128 = por %p126, %p127
      %p129 = scmp.ne.s32.totalorder %s121, %s124
      %p130 = scmp.eq.s32.totalorder %s9, 0
      %p131 = por %p129, %p130
      %p132 = scmp.ne.s32.totalorder %s121, %s124
      %p133 = scmp.eq.s32.totalorder %s14, 1
      %p134 = por %p132, %p133
      %p135 = scmp.ne.s32.totalorder %s124, %s125
      %p136 = scmp.eq.s32.totalorder %s14, 0
      %p137 = por %p135, %p136
      %p138 = scmp.ne.s32.totalorder %s124, %s125
      %p139 = scmp.eq.s32.totalorder %s15, 1
      %p140 = por %p138, %p139
      %p142 = scmp.ne.s32.totalorder %s125, %s141
      %p143 = scmp.eq.s32.totalorder %s15, 0
      %p144 = por %p142, %p143
      %p145 = scmp.le.s32.totalorder 1, %s9
      %p146 = scmp.lt.s32.totalorder %s9, 3
      %p147 = pnand %p145, %p146
      %p148 = pneg %p147
      // Predicated region
      $region9: #{image_encoder_forward.14} parent=5 // pred_check
        _
      $region10: #{image_encoder_forward.14} parent=5 // pred_check_branch
        %150 = sbr.rel (%p147) target = $region12
      $region11: #{image_encoder_forward.14} parent=5 // pred_region
        %s151 = ssub.s32 %s9, 1
      $region12: #{image_encoder_forward.14} parent=5 // pred_fallthru
        _
      %p152 = scmp.lt.s32.totalorder %s9, 2
      // Predicated region
      $region13: #{image_encoder_forward.14} parent=5 // pred_check
        %p153 = pneg %p152
      $region14: #{image_encoder_forward.14} parent=5 // pred_check_branch
        %155 = sbr.rel (%p153) target = $region16
      $region15: #{image_encoder_forward.14} parent=5 // pred_region
        // Predicated region
        $region17: #{image_encoder_forward.14} parent=15 // pred_check
          %p156 = pneg %p43
        $region18: #{image_encoder_forward.14} parent=15 // pred_check_branch
          %158 = sbr.rel (%p156) target = $region20
        $region19: #{image_encoder_forward.14} parent=15 // pred_region
          %s159 = sand.u32 %s33, 1
          %s160 = sand.u32 %s33, 1
          %s161 = smul.addr %s160, 8
          %s162 = scalar_lea.vmem [#allocation2], %s161
          %s163 = smul.u32 2, %s16
          %s164 = smul.addr %s163, 3
          %s165 = sadd.s32 %s17, %s164
          %s166 = smul.addr %s165, 4
          %s167 = scalar_lea.vmem %s0, %s166
          // Predicated region
          $region21: #{image_encoder_forward.14} parent=19 // pred_check
            _
          $region22: #{image_encoder_forward.14} parent=19 // pred_check_branch
            %169 = sbr.rel (0) target = $region24
          $region23: #{image_encoder_forward.14} parent=19 // pred_region
            // Predicated region
            $region25: #{image_encoder_forward.14} parent=23 // pred_check
              _
            $region26: #{image_encoder_forward.14} parent=23 // pred_check_branch
              %171 = sbr.rel target = $region28
            $region27: #{image_encoder_forward.14} parent=23 // pred_region
              // Predicated region
              $region40: #{image_encoder_forward.14} parent=27 // pred_check
                _
              $region41: #{image_encoder_forward.14} parent=27 // pred_check_branch
                %189 = sbr.rel (0) target = $region43
              $region42: #{image_encoder_forward.14} parent=27 // pred_region
                loop: start=0, step=1, limit=1
                $region44: #{image_encoder_forward.14} parent=42 // loop_pre_header
                  _
                $region45: #{image_encoder_forward.14} parent=42 // loop_header
                  %s191 = sphi 0, %s195
                  %p192 = scmp.ge.s32.totalorder %s191, 1
                  %s196 = sphi %s167, %s167
                  %s197 = sphi %s162, %s162
                $region46: #{image_encoder_forward.14} parent=42 // loop_header_branch
                  %194 = sbr.rel (%p192) target = $region50
                $region47: #{image_encoder_forward.14} parent=42 // loop_body
                  _
                $region48: #{image_encoder_forward.14} parent=42 // loop_footer
                  %s195 = sadd.s32 1, %s191
                $region49: #{image_encoder_forward.14} parent=42 // loop_footer_branch
                  %190 = sbr.rel target = $region45
                $region50: #{image_encoder_forward.14} parent=42 // loop_exit
                  _
                %s199 = ssub.s32 16, 1
                loop: start=0, step=1, limit=1
                $region51: #{image_encoder_forward.14} parent=42 // loop_pre_header
                  _
                $region52: #{image_encoder_forward.14} parent=42 // loop_header
                  %s201 = sphi 0, %s205
                  %p202 = scmp.ge.s32.totalorder %s201, 1
                  %s206 = sphi %s167, %s167
                  %s207 = sphi %s162, %s162
                $region53: #{image_encoder_forward.14} parent=42 // loop_header_branch
                  %204 = sbr.rel (%p202) target = $region57
                $region54: #{image_encoder_forward.14} parent=42 // loop_body
                  %v208 = vld [vmem:[%s206] sm:%s199]
                  %209 = vst [vmem:[%s207] sm:%s199] %v208
                  %v210 = vld [vmem:[%s206 + $0xc] sm:%s199]
                  %211 = vst [vmem:[%s207 + $0x4] sm:%s199] %v210
                $region55: #{image_encoder_forward.14} parent=42 // loop_footer
                  %s205 = sadd.s32 1, %s201
                $region56: #{image_encoder_forward.14} parent=42 // loop_footer_branch
                  %200 = sbr.rel target = $region52
                $region57: #{image_encoder_forward.14} parent=42 // loop_exit
                  _
              $region43: #{image_encoder_forward.14} parent=27 // pred_fallthru
                _
            $region28: #{image_encoder_forward.14} parent=23 // pred_fallthru
              _
            // Predicated region
            $region29: #{image_encoder_forward.14} parent=23 // pred_check
              _
            $region30: #{image_encoder_forward.14} parent=23 // pred_check_branch
              %173 = sbr.rel (0) target = $region32
            $region31: #{image_encoder_forward.14} parent=23 // pred_region
              %s175 = ssub.s32 16, 1
              loop: start=0, step=1, limit=1
              $region33: #{image_encoder_forward.14} parent=31 // loop_pre_header
                _
              $region34: #{image_encoder_forward.14} parent=31 // loop_header
                %s177 = sphi 0, %s181
                %p178 = scmp.ge.s32.totalorder %s177, 1
                %s182 = sphi %s167, %s167
                %s183 = sphi %s162, %s162
              $region35: #{image_encoder_forward.14} parent=31 // loop_header_branch
                %180 = sbr.rel (%p178) target = $region39
              $region36: #{image_encoder_forward.14} parent=31 // loop_body
                %v184 = vld [vmem:[%s182] sm:%s175]
                %185 = vst [vmem:[%s183] sm:%s175] %v184
                %v186 = vld [vmem:[%s182 + $0xc] sm:%s175]
                %187 = vst [vmem:[%s183 + $0x4] sm:%s175] %v186
              $region37: #{image_encoder_forward.14} parent=31 // loop_footer
                %s181 = sadd.s32 1, %s177
              $region38: #{image_encoder_forward.14} parent=31 // loop_footer_branch
                %176 = sbr.rel target = $region34
              $region39: #{image_encoder_forward.14} parent=31 // loop_exit
                _
            $region32: #{image_encoder_forward.14} parent=23 // pred_fallthru
              _
          $region24: #{image_encoder_forward.14} parent=19 // pred_fallthru
            _
          %212 = vnop
        $region20: #{image_encoder_forward.14} parent=15 // pred_fallthru
          _
        // Predicated region
        $region58: #{image_encoder_forward.14} parent=15 // pred_check
          %p213 = pneg %p73
        $region59: #{image_encoder_forward.14} parent=15 // pred_check_branch
          %215 = sbr.rel (%p213) target = $region61
        $region60: #{image_encoder_forward.14} parent=15 // pred_region
          %s216 = sand.u32 %s63, 1
          %s217 = sand.u32 %s63, 1
          %s218 = smul.addr %s217, 8
          %s219 = scalar_lea.vmem [#allocation3], %s218
          %s220 = sadd.s32 %s17, 1
          %s221 = smul.u32 2, %s16
          %s222 = smul.addr %s221, 3
          %s223 = sadd.s32 %s220, %s222
          %s224 = smul.addr %s223, 4
          %s225 = scalar_lea.vmem %s1, %s224
          // Predicated region
          $region62: #{image_encoder_forward.14} parent=60 // pred_check
            _
          $region63: #{image_encoder_forward.14} parent=60 // pred_check_branch
            %227 = sbr.rel (0) target = $region65
          $region64: #{image_encoder_forward.14} parent=60 // pred_region
            // Predicated region
            $region66: #{image_encoder_forward.14} parent=64 // pred_check
              _
            $region67: #{image_encoder_forward.14} parent=64 // pred_check_branch
              %229 = sbr.rel target = $region69
            $region68: #{image_encoder_forward.14} parent=64 // pred_region
              // Predicated region
              $region81: #{image_encoder_forward.14} parent=68 // pred_check
                _
              $region82: #{image_encoder_forward.14} parent=68 // pred_check_branch
                %247 = sbr.rel (0) target = $region84
              $region83: #{image_encoder_forward.14} parent=68 // pred_region
                loop: start=0, step=1, limit=1
                $region85: #{image_encoder_forward.14} parent=83 // loop_pre_header
                  _
                $region86: #{image_encoder_forward.14} parent=83 // loop_header
                  %s249 = sphi 0, %s253
                  %p250 = scmp.ge.s32.totalorder %s249, 1
                  %s254 = sphi %s225, %s225
                  %s255 = sphi %s219, %s219
                $region87: #{image_encoder_forward.14} parent=83 // loop_header_branch
                  %252 = sbr.rel (%p250) target = $region91
                $region88: #{image_encoder_forward.14} parent=83 // loop_body
                  _
                $region89: #{image_encoder_forward.14} parent=83 // loop_footer
                  %s253 = sadd.s32 1, %s249
                $region90: #{image_encoder_forward.14} parent=83 // loop_footer_branch
                  %248 = sbr.rel target = $region86
                $region91: #{image_encoder_forward.14} parent=83 // loop_exit
                  _
                %s257 = ssub.s32 16, 1
                loop: start=0, step=1, limit=1
                $region92: #{image_encoder_forward.14} parent=83 // loop_pre_header
                  _
                $region93: #{image_encoder_forward.14} parent=83 // loop_header
                  %s259 = sphi 0, %s263
                  %p260 = scmp.ge.s32.totalorder %s259, 1
                  %s264 = sphi %s225, %s225
                  %s265 = sphi %s219, %s219
                $region94: #{image_encoder_forward.14} parent=83 // loop_header_branch
                  %262 = sbr.rel (%p260) target = $region98
                $region95: #{image_encoder_forward.14} parent=83 // loop_body
                  %v266 = vld [vmem:[%s264] sm:%s257]
                  %267 = vst [vmem:[%s265] sm:%s257] %v266
                  %v268 = vld [vmem:[%s264 + $0xc] sm:%s257]
                  %269 = vst [vmem:[%s265 + $0x4] sm:%s257] %v268
                $region96: #{image_encoder_forward.14} parent=83 // loop_footer
                  %s263 = sadd.s32 1, %s259
                $region97: #{image_encoder_forward.14} parent=83 // loop_footer_branch
                  %258 = sbr.rel target = $region93
                $region98: #{image_encoder_forward.14} parent=83 // loop_exit
                  _
              $region84: #{image_encoder_forward.14} parent=68 // pred_fallthru
                _
            $region69: #{image_encoder_forward.14} parent=64 // pred_fallthru
              _
            // Predicated region
            $region70: #{image_encoder_forward.14} parent=64 // pred_check
              _
            $region71: #{image_encoder_forward.14} parent=64 // pred_check_branch
              %231 = sbr.rel (0) target = $region73
            $region72: #{image_encoder_forward.14} parent=64 // pred_region
              %s233 = ssub.s32 16, 1
              loop: start=0, step=1, limit=1
              $region74: #{image_encoder_forward.14} parent=72 // loop_pre_header
                _
              $region75: #{image_encoder_forward.14} parent=72 // loop_header
                %s235 = sphi 0, %s239
                %p236 = scmp.ge.s32.totalorder %s235, 1
                %s240 = sphi %s225, %s225
                %s241 = sphi %s219, %s219
              $region76: #{image_encoder_forward.14} parent=72 // loop_header_branch
                %238 = sbr.rel (%p236) target = $region80
              $region77: #{image_encoder_forward.14} parent=72 // loop_body
                %v242 = vld [vmem:[%s240] sm:%s233]
                %243 = vst [vmem:[%s241] sm:%s233] %v242
                %v244 = vld [vmem:[%s240 + $0xc] sm:%s233]
                %245 = vst [vmem:[%s241 + $0x4] sm:%s233] %v244
              $region78: #{image_encoder_forward.14} parent=72 // loop_footer
                %s239 = sadd.s32 1, %s235
              $region79: #{image_encoder_forward.14} parent=72 // loop_footer_branch
                %234 = sbr.rel target = $region75
              $region80: #{image_encoder_forward.14} parent=72 // loop_exit
                _
            $region73: #{image_encoder_forward.14} parent=64 // pred_fallthru
              _
          $region65: #{image_encoder_forward.14} parent=60 // pred_fallthru
            _
          %270 = vnop
        $region61: #{image_encoder_forward.14} parent=15 // pred_fallthru
          _
        // Predicated region
        $region99: #{image_encoder_forward.14} parent=15 // pred_check
          %p271 = pneg %p103
        $region100: #{image_encoder_forward.14} parent=15 // pred_check_branch
          %273 = sbr.rel (%p271) target = $region102
        $region101: #{image_encoder_forward.14} parent=15 // pred_region
          %s274 = sand.u32 %s93, 1
          %s275 = sand.u32 %s93, 1
          %s276 = smul.addr %s275, 8
          %s277 = scalar_lea.vmem [#allocation4], %s276
          %s278 = sadd.s32 %s17, 2
          %s279 = smul.u32 2, %s16
          %s280 = smul.addr %s279, 3
          %s281 = sadd.s32 %s278, %s280
          %s282 = smul.addr %s281, 4
          %s283 = scalar_lea.vmem %s2, %s282
          // Predicated region
          $region103: #{image_encoder_forward.14} parent=101 // pred_check
            _
          $region104: #{image_encoder_forward.14} parent=101 // pred_check_branch
            %285 = sbr.rel (0) target = $region106
          $region105: #{image_encoder_forward.14} parent=101 // pred_region
            // Predicated region
            $region107: #{image_encoder_forward.14} parent=105 // pred_check
              _
            $region108: #{image_encoder_forward.14} parent=105 // pred_check_branch
              %287 = sbr.rel target = $region110
            $region109: #{image_encoder_forward.14} parent=105 // pred_region
              // Predicated region
              $region122: #{image_encoder_forward.14} parent=109 // pred_check
                _
              $region123: #{image_encoder_forward.14} parent=109 // pred_check_branch
                %305 = sbr.rel (0) target = $region125
              $region124: #{image_encoder_forward.14} parent=109 // pred_region
                loop: start=0, step=1, limit=1
                $region126: #{image_encoder_forward.14} parent=124 // loop_pre_header
                  _
                $region127: #{image_encoder_forward.14} parent=124 // loop_header
                  %s307 = sphi 0, %s311
                  %p308 = scmp.ge.s32.totalorder %s307, 1
                  %s312 = sphi %s283, %s283
                  %s313 = sphi %s277, %s277
                $region128: #{image_encoder_forward.14} parent=124 // loop_header_branch
                  %310 = sbr.rel (%p308) target = $region132
                $region129: #{image_encoder_forward.14} parent=124 // loop_body
                  _
                $region130: #{image_encoder_forward.14} parent=124 // loop_footer
                  %s311 = sadd.s32 1, %s307
                $region131: #{image_encoder_forward.14} parent=124 // loop_footer_branch
                  %306 = sbr.rel target = $region127
                $region132: #{image_encoder_forward.14} parent=124 // loop_exit
                  _
                %s315 = ssub.s32 16, 1
                loop: start=0, step=1, limit=1
                $region133: #{image_encoder_forward.14} parent=124 // loop_pre_header
                  _
                $region134: #{image_encoder_forward.14} parent=124 // loop_header
                  %s317 = sphi 0, %s321
                  %p318 = scmp.ge.s32.totalorder %s317, 1
                  %s322 = sphi %s283, %s283
                  %s323 = sphi %s277, %s277
                $region135: #{image_encoder_forward.14} parent=124 // loop_header_branch
                  %320 = sbr.rel (%p318) target = $region139
                $region136: #{image_encoder_forward.14} parent=124 // loop_body
                  %v324 = vld [vmem:[%s322] sm:%s315]
                  %325 = vst [vmem:[%s323] sm:%s315] %v324
                  %v326 = vld [vmem:[%s322 + $0xc] sm:%s315]
                  %327 = vst [vmem:[%s323 + $0x4] sm:%s315] %v326
                $region137: #{image_encoder_forward.14} parent=124 // loop_footer
                  %s321 = sadd.s32 1, %s317
                $region138: #{image_encoder_forward.14} parent=124 // loop_footer_branch
                  %316 = sbr.rel target = $region134
                $region139: #{image_encoder_forward.14} parent=124 // loop_exit
                  _
              $region125: #{image_encoder_forward.14} parent=109 // pred_fallthru
                _
            $region110: #{image_encoder_forward.14} parent=105 // pred_fallthru
              _
            // Predicated region
            $region111: #{image_encoder_forward.14} parent=105 // pred_check
              _
            $region112: #{image_encoder_forward.14} parent=105 // pred_check_branch
              %289 = sbr.rel (0) target = $region114
            $region113: #{image_encoder_forward.14} parent=105 // pred_region
              %s291 = ssub.s32 16, 1
              loop: start=0, step=1, limit=1
              $region115: #{image_encoder_forward.14} parent=113 // loop_pre_header
                _
              $region116: #{image_encoder_forward.14} parent=113 // loop_header
                %s293 = sphi 0, %s297
                %p294 = scmp.ge.s32.totalorder %s293, 1
                %s298 = sphi %s283, %s283
                %s299 = sphi %s277, %s277
              $region117: #{image_encoder_forward.14} parent=113 // loop_header_branch
                %296 = sbr.rel (%p294) target = $region121
              $region118: #{image_encoder_forward.14} parent=113 // loop_body
                %v300 = vld [vmem:[%s298] sm:%s291]
                %301 = vst [vmem:[%s299] sm:%s291] %v300
                %v302 = vld [vmem:[%s298 + $0xc] sm:%s291]
                %303 = vst [vmem:[%s299 + $0x4] sm:%s291] %v302
              $region119: #{image_encoder_forward.14} parent=113 // loop_footer
                %s297 = sadd.s32 1, %s293
              $region120: #{image_encoder_forward.14} parent=113 // loop_footer_branch
                %292 = sbr.rel target = $region116
              $region121: #{image_encoder_forward.14} parent=113 // loop_exit
                _
            $region114: #{image_encoder_forward.14} parent=105 // pred_fallthru
              _
          $region106: #{image_encoder_forward.14} parent=101 // pred_fallthru
            _
          %328 = vnop
        $region102: #{image_encoder_forward.14} parent=15 // pred_fallthru
          _
      $region16: #{image_encoder_forward.14} parent=5 // pred_fallthru
        _
      %p329 = scmp.le.s32.totalorder 1, %s9
      %p330 = scmp.lt.s32.totalorder %s9, 3
      %p331 = pnand %p329, %p330
      %p332 = pneg %p331
      // Predicated region
      $region140: #{image_encoder_forward.14} parent=5 // pred_check
        _
      $region141: #{image_encoder_forward.14} parent=5 // pred_check_branch
        %334 = sbr.rel (%p331) target = $region143
      $region142: #{image_encoder_forward.14} parent=5 // pred_region
        %s335 = ssub.s32 %s9, 1
        %s336 = sand.u32 %s36, 1
        %s337 = sand.u32 %s36, 1
        %s338 = smul.addr %s337, 8
        %s339 = scalar_lea.vmem [#allocation2], %s338
        // Predicated region
        $region144: #{image_encoder_forward.14} parent=142 // pred_check
          %p340 = pneg %p49
        $region145: #{image_encoder_forward.14} parent=142 // pred_check_branch
          %342 = sbr.rel (%p340) target = $region147
        $region146: #{image_encoder_forward.14} parent=142 // pred_region
          _
        $region147: #{image_encoder_forward.14} parent=142 // pred_fallthru
          _
        %s343 = sand.u32 %s66, 1
        %s344 = sand.u32 %s66, 1
        %s345 = smul.addr %s344, 8
        %s346 = scalar_lea.vmem [#allocation3], %s345
        // Predicated region
        $region148: #{image_encoder_forward.14} parent=142 // pred_check
          %p347 = pneg %p79
        $region149: #{image_encoder_forward.14} parent=142 // pred_check_branch
          %349 = sbr.rel (%p347) target = $region151
        $region150: #{image_encoder_forward.14} parent=142 // pred_region
          _
        $region151: #{image_encoder_forward.14} parent=142 // pred_fallthru
          _
        %s350 = sand.u32 %s96, 1
        %s351 = sand.u32 %s96, 1
        %s352 = smul.addr %s351, 8
        %s353 = scalar_lea.vmem [#allocation4], %s352
        // Predicated region
        $region152: #{image_encoder_forward.14} parent=142 // pred_check
          %p354 = pneg %p109
        $region153: #{image_encoder_forward.14} parent=142 // pred_check_branch
          %356 = sbr.rel (%p354) target = $region155
        $region154: #{image_encoder_forward.14} parent=142 // pred_region
          _
        $region155: #{image_encoder_forward.14} parent=142 // pred_fallthru
          _
        %s357 = sand.u32 %s36, 1
        %s358 = sand.u32 %s36, 1
        %s359 = smul.addr %s358, 8
        %s360 = scalar_lea.vmem [#allocation2], %s359
        %p361 = pneg %p49
        %p362 = pneg %p46
        %s363 = sand.u32 %s66, 1
        %s364 = sand.u32 %s66, 1
        %s365 = smul.addr %s364, 8
        %s366 = scalar_lea.vmem [#allocation3], %s365
        %p367 = pneg %p79
        %p368 = pneg %p76
        %s369 = sand.u32 %s96, 1
        %s370 = sand.u32 %s96, 1
        %s371 = smul.addr %s370, 8
        %s372 = scalar_lea.vmem [#allocation4], %s371
        %p373 = pneg %p109
        %p374 = pneg %p106
        %p375 = pneg %p137
        %p376 = pneg %p134
        %s377 = smul.u32 2, %s18
        %p378 = scmp.lt.s32.totalorder %s377, 3
        %s379 = scalar_select %p378, %s377, 3
        %p380 = scmp.lt.s32.totalorder %s19, 0
        %s381 = scalar_select %p380, %s19, 0
        %s382 = sadd.s32 %s381, %s379
        %s383 = smul.addr %s382, 4
        %s384 = scalar_lea.vmem %s3, %s383
        %s385 = smul.u32 2, %s18
        %s386 = sadd.s32 %s19, 1
        %s387 = smul.u32 2, %s18
        %s388 = sadd.s32 %s19, 2
        %s389 = smul.u32 2, %s18
        %s390 = smul.u32 2, %s18
        %p391 = scmp.lt.s32.totalorder %s390, 3
        %s392 = scalar_select %p391, %s390, 3
        %p393 = scmp.lt.s32.totalorder %s19, 0
        %s394 = scalar_select %p393, %s19, 0
        %s395 = sadd.s32 %s394, %s392
        %s396 = smul.addr %s395, 4
        %s397 = scalar_lea.vmem %s3, %s396
        %s398 = smul.u32 2, %s18
        %v400 = vld [vmem:[%s339] sm:$0xf]
        %v401 = vld [vmem:[%s339 + $0x4] sm:$0xf]
        %v402 = vld [vmem:[%s346] sm:$0xf]
        %v403 = vld [vmem:[%s346 + $0x4] sm:$0xf]
        %v404 = vld [vmem:[%s353] sm:$0xf]
        %v405 = vld [vmem:[%s353 + $0x4] sm:$0xf]
        %v406 = vlaneseq
        %v407 = vand.u32 %v406, 127
        %vm408 = vcmp.lt.s32.totalorder %v407, 5
        %v411 = vunpack.c.l.b16 %v400
        %v412 = vunpack.c.l.b16 %v401
        %v413 = vpack.c.b16 %v412, %v411
        %v416 = vunpack.c.l.b16 %v402
        %v417 = vunpack.c.l.b16 %v403
        %v418 = vpack.c.b16 %v417, %v416
        %vm419 = vcmask 261120
        %v421 = vsel %vm419, %v413, 0
        %v424 = vsel %vm419, %v418, 0
        %426 = vmatprep.subr.bf16.mxu0 0
        %427 = vmatpush1.bf16.xpose.msra.mxu0 0
        %428 = vmatprep.subr.bf16.mxu0 0
        %429 = vmatpush1.bf16.xpose.msra.mxu0 0
        %430 = vmatprep.subr.bf16.mxu0 0
        %431 = vmatpush1.bf16.xpose.msra.mxu0 0
        %432 = vmatprep.subr.bf16.mxu0 0
        %433 = vmatpush1.bf16.xpose.msra.mxu0 0
        %434 = vmatprep.subr.bf16.mxu0 0
        %435 = vmatpush1.bf16.xpose.msra.mxu0 0
        %436 = vmatprep.subr.bf16.mxu0 0
        %437 = vmatpush1.bf16.xpose.msra.mxu0 0
        %438 = vmatprep.subr.bf16.mxu0 0
        %439 = vmatpush1.bf16.xpose.msra.mxu0 0
        %440 = vmatprep.subr.bf16.mxu0 0
        %441 = vmatpush1.bf16.xpose.msra.mxu0 %v424
        %442 = vmatprep.subr.bf16.mxu0 0
        %443 = vmatpush2.bf16.xpose.msra.mxu0 0
        %444 = vmatprep.subr.bf16.mxu0 0
        %445 = vmatpush2.bf16.xpose.msra.mxu0 0
        %446 = vmatprep.subr.bf16.mxu0 0
        %447 = vmatpush2.bf16.xpose.msra.mxu0 0
        %448 = vmatprep.subr.bf16.mxu0 0
        %449 = vmatpush2.bf16.xpose.msra.mxu0 0
        %450 = vmatprep.subr.bf16.mxu0 0
        %451 = vmatpush2.bf16.xpose.msra.mxu0 0
        %452 = vmatprep.subr.bf16.mxu0 0
        %453 = vmatpush2.bf16.xpose.msra.mxu0 0
        %454 = vmatprep.subr.bf16.mxu0 0
        %455 = vmatpush2.bf16.xpose.msra.mxu0 0
        %456 = vmatprep.subr.bf16.mxu0 0
        %457 = vmatpush2.bf16.xpose.msra.mxu0 0
        %458 = vmatprep.mubr.bf16.mxu0 0
        %459 = vmatmul.mubr.bf16.gmra.mxu0 %v421
        %v460 = vpop.f32.mrf.mxu0
        %v461 = vadd.f32 0.0, %v460
        %v462 = vpop.f32.mrf.mxu0
        %v463 = vpop.f32.mrf.mxu0
        %v464 = vadd.f32 0.0, %v463
        %v465 = vpop.f32.mrf.mxu0
        %466 = vdwg.mxu0
        %v467 = vmul.f32 %v461, 0.17677669
        %v468 = vmul.f32 %v464, 0.17677669
        %v469 = vsel %vm408, %v467, -1e+30
        %v470 = vsel %vm408, %v468, -1e+30
        %vm471 = vcmask 130048
        %v472 = vsel %vm471, %v469, -inf
        %473 = vmax.xlane.f32.xlu0 %v472
        %v474 = vpop.xlane.xlu0 %473
        %v475 = vsel %vm471, %v470, -inf
        %476 = vmax.xlane.f32.xlu0 %v475
        %v477 = vpop.xlane.xlu0 %476
        %v478 = vsub.f32 %v469, %v474
        %v479 = vsub.f32 %v470, %v477
        %v480 = vmul.f32 %v478, 1.442695
        %v481 = vpow.pop %v480
        %v482 = vmul.f32 %v479, 1.442695
        %v483 = vpow.pop %v482
        %v484 = vsel %vm471, %v481, 0.0
        %485 = vadd.xlane.f32.xlu0 %v484
        %v486 = vpop.xlane.xlu0 %485
        %v487 = vsel %vm471, %v483, 0.0
        %488 = vadd.xlane.f32.xlu0 %v487
        %v489 = vpop.xlane.xlu0 %488
        %v490 = vrcp.pop %v486
        %v491 = vmul.f32 %v481, %v490
        %v492 = vrcp.pop %v489
        %v493 = vmul.f32 %v483, %v492
        %v494 = vpack.c.bf16 %v493, %v491
        %v497 = vunpack.c.l.b16 %v404
        %v498 = vunpack.c.l.b16 %v405
        %v499 = vpack.c.b16 %v498, %v497
        %v502 = vsel %vm471, %v494, 0
        %504 = vmatprep.subr.bf16.mxu0 0
        %505 = vmatpush1.bf16.msra.mxu0 0
        %506 = vmatprep.subr.bf16.mxu0 0
        %507 = vmatpush1.bf16.msra.mxu0 0
        %508 = vmatprep.subr.bf16.mxu0 0
        %509 = vmatpush1.bf16.msra.mxu0 0
        %510 = vmatprep.subr.bf16.mxu0 0
        %511 = vmatpush1.bf16.msra.mxu0 0
        %512 = vmatprep.subr.bf16.mxu0 0
        %513 = vmatpush1.bf16.msra.mxu0 0
        %514 = vmatprep.subr.bf16.mxu0 0
        %515 = vmatpush1.bf16.msra.mxu0 0
        %516 = vmatprep.subr.bf16.mxu0 0
        %517 = vmatpush1.bf16.msra.mxu0 0
        %518 = vmatprep.subr.bf16.mxu0 0
        %519 = vmatpush1.bf16.msra.mxu0 %v499
        %520 = vmatprep.subr.bf16.mxu0 0
        %521 = vmatpush2.bf16.msra.mxu0 0
        %522 = vmatprep.subr.bf16.mxu0 0
        %523 = vmatpush2.bf16.msra.mxu0 0
        %524 = vmatprep.subr.bf16.mxu0 0
        %525 = vmatpush2.bf16.msra.mxu0 0
        %526 = vmatprep.subr.bf16.mxu0 0
        %527 = vmatpush2.bf16.msra.mxu0 0
        %528 = vmatprep.subr.bf16.mxu0 0
        %529 = vmatpush2.bf16.msra.mxu0 0
        %530 = vmatprep.subr.bf16.mxu0 0
        %531 = vmatpush2.bf16.msra.mxu0 0
        %532 = vmatprep.subr.bf16.mxu0 0
        %533 = vmatpush2.bf16.msra.mxu0 0
        %534 = vmatprep.subr.bf16.mxu0 0
        %535 = vmatpush2.bf16.msra.mxu0 0
        %536 = vmatprep.mubr.bf16.mxu0 0
        %537 = vmatmul.mubr.bf16.gmra.mxu0 %v502
        %v538 = vpop.f32.mrf.mxu0
        %v539 = vadd.f32 0.0, %v538
        %v540 = vpop.f32.mrf.mxu0
        %v541 = vpop.f32.mrf.mxu0
        %v542 = vadd.f32 0.0, %v541
        %v543 = vpop.f32.mrf.mxu0
        %544 = vdwg.mxu0
        %545 = vrot.lane.b32.xlu0 %v413, 96
        %v546 = vpop.permute.xlu0 %545
        %547 = vrot.lane.b32.xlu0 %v418, 96
        %v548 = vpop.permute.xlu0 %547
        %v550 = vsel %vm419, %v546, 0
        %v553 = vsel %vm419, %v548, 0
        %555 = vmatprep.subr.bf16.mxu0 0
        %556 = vmatpush1.bf16.xpose.msra.mxu0 0
        %557 = vmatprep.subr.bf16.mxu0 0
        %558 = vmatpush1.bf16.xpose.msra.mxu0 0
        %559 = vmatprep.subr.bf16.mxu0 0
        %560 = vmatpush1.bf16.xpose.msra.mxu0 0
        %561 = vmatprep.subr.bf16.mxu0 0
        %562 = vmatpush1.bf16.xpose.msra.mxu0 0
        %563 = vmatprep.subr.bf16.mxu0 0
        %564 = vmatpush1.bf16.xpose.msra.mxu0 0
        %565 = vmatprep.subr.bf16.mxu0 0
        %566 = vmatpush1.bf16.xpose.msra.mxu0 0
        %567 = vmatprep.subr.bf16.mxu0 0
        %568 = vmatpush1.bf16.xpose.msra.mxu0 0
        %569 = vmatprep.subr.bf16.mxu0 0
        %570 = vmatpush1.bf16.xpose.msra.mxu0 %v553
        %571 = vmatprep.subr.bf16.mxu0 0
        %572 = vmatpush2.bf16.xpose.msra.mxu0 0
        %573 = vmatprep.subr.bf16.mxu0 0
        %574 = vmatpush2.bf16.xpose.msra.mxu0 0
        %575 = vmatprep.subr.bf16.mxu0 0
        %576 = vmatpush2.bf16.xpose.msra.mxu0 0
        %577 = vmatprep.subr.bf16.mxu0 0
        %578 = vmatpush2.bf16.xpose.msra.mxu0 0
        %579 = vmatprep.subr.bf16.mxu0 0
        %580 = vmatpush2.bf16.xpose.msra.mxu0 0
        %581 = vmatprep.subr.bf16.mxu0 0
        %582 = vmatpush2.bf16.xpose.msra.mxu0 0
        %583 = vmatprep.subr.bf16.mxu0 0
        %584 = vmatpush2.bf16.xpose.msra.mxu0 0
        %585 = vmatprep.subr.bf16.mxu0 0
        %586 = vmatpush2.bf16.xpose.msra.mxu0 0
        %587 = vmatprep.mubr.bf16.mxu0 0
        %588 = vmatmul.mubr.bf16.gmra.mxu0 %v550
        %v589 = vpop.f32.mrf.mxu0
        %v590 = vadd.f32 0.0, %v589
        %v591 = vpop.f32.mrf.mxu0
        %v592 = vpop.f32.mrf.mxu0
        %v593 = vadd.f32 0.0, %v592
        %v594 = vpop.f32.mrf.mxu0
        %595 = vdwg.mxu0
        %v596 = vmul.f32 %v590, 0.17677669
        %v597 = vmul.f32 %v593, 0.17677669
        %v598 = vsel %vm408, %v596, -1e+30
        %v599 = vsel %vm408, %v597, -1e+30
        %v600 = vsel %vm471, %v598, -inf
        %601 = vmax.xlane.f32.xlu0 %v600
        %v602 = vpop.xlane.xlu0 %601
        %v603 = vsel %vm471, %v599, -inf
        %604 = vmax.xlane.f32.xlu0 %v603
        %v605 = vpop.xlane.xlu0 %604
        %v606 = vsub.f32 %v598, %v602
        %v607 = vsub.f32 %v599, %v605
        %v608 = vmul.f32 %v606, 1.442695
        %v609 = vpow.pop %v608
        %v610 = vmul.f32 %v607, 1.442695
        %v611 = vpow.pop %v610
        %v612 = vsel %vm471, %v609, 0.0
        %613 = vadd.xlane.f32.xlu0 %v612
        %v614 = vpop.xlane.xlu0 %613
        %v615 = vsel %vm471, %v611, 0.0
        %616 = vadd.xlane.f32.xlu0 %v615
        %v617 = vpop.xlane.xlu0 %616
        %v618 = vrcp.pop %v614
        %v619 = vmul.f32 %v609, %v618
        %v620 = vrcp.pop %v617
        %v621 = vmul.f32 %v611, %v620
        %v622 = vpack.c.bf16 %v621, %v619
        %623 = vrot.lane.b32.xlu0 %v499, 96
        %v624 = vpop.permute.xlu0 %623
        %v627 = vsel %vm471, %v622, 0
        %629 = vmatprep.subr.bf16.mxu0 0
        %630 = vmatpush1.bf16.msra.mxu0 0
        %631 = vmatprep.subr.bf16.mxu0 0
        %632 = vmatpush1.bf16.msra.mxu0 0
        %633 = vmatprep.subr.bf16.mxu0 0
        %634 = vmatpush1.bf16.msra.mxu0 0
        %635 = vmatprep.subr.bf16.mxu0 0
        %636 = vmatpush1.bf16.msra.mxu0 0
        %637 = vmatprep.subr.bf16.mxu0 0
        %638 = vmatpush1.bf16.msra.mxu0 0
        %639 = vmatprep.subr.bf16.mxu0 0
        %640 = vmatpush1.bf16.msra.mxu0 0
        %641 = vmatprep.subr.bf16.mxu0 0
        %642 = vmatpush1.bf16.msra.mxu0 0
        %643 = vmatprep.subr.bf16.mxu0 0
        %644 = vmatpush1.bf16.msra.mxu0 %v624
        %645 = vmatprep.subr.bf16.mxu0 0
        %646 = vmatpush2.bf16.msra.mxu0 0
        %647 = vmatprep.subr.bf16.mxu0 0
        %648 = vmatpush2.bf16.msra.mxu0 0
        %649 = vmatprep.subr.bf16.mxu0 0
        %650 = vmatpush2.bf16.msra.mxu0 0
        %651 = vmatprep.subr.bf16.mxu0 0
        %652 = vmatpush2.bf16.msra.mxu0 0
        %653 = vmatprep.subr.bf16.mxu0 0
        %654 = vmatpush2.bf16.msra.mxu0 0
        %655 = vmatprep.subr.bf16.mxu0 0
        %656 = vmatpush2.bf16.msra.mxu0 0
        %657 = vmatprep.subr.bf16.mxu0 0
        %658 = vmatpush2.bf16.msra.mxu0 0
        %659 = vmatprep.subr.bf16.mxu0 0
        %660 = vmatpush2.bf16.msra.mxu0 0
        %661 = vmatprep.mubr.bf16.mxu0 0
        %662 = vmatmul.mubr.bf16.gmra.mxu0 %v627
        %v663 = vpop.f32.mrf.mxu0
        %v664 = vadd.f32 0.0, %v663
        %v665 = vpop.f32.mrf.mxu0
        %v666 = vpop.f32.mrf.mxu0
        %v667 = vadd.f32 0.0, %v666
        %v668 = vpop.f32.mrf.mxu0
        %669 = vdwg.mxu0
        %670 = vrot.lane.b32.xlu0 %v413, 64
        %v671 = vpop.permute.xlu0 %670
        %672 = vrot.lane.b32.xlu0 %v418, 64
        %v673 = vpop.permute.xlu0 %672
        %v675 = vsel %vm419, %v671, 0
        %v678 = vsel %vm419, %v673, 0
        %680 = vmatprep.subr.bf16.mxu0 0
        %681 = vmatpush1.bf16.xpose.msra.mxu0 0
        %682 = vmatprep.subr.bf16.mxu0 0
        %683 = vmatpush1.bf16.xpose.msra.mxu0 0
        %684 = vmatprep.subr.bf16.mxu0 0
        %685 = vmatpush1.bf16.xpose.msra.mxu0 0
        %686 = vmatprep.subr.bf16.mxu0 0
        %687 = vmatpush1.bf16.xpose.msra.mxu0 0
        %688 = vmatprep.subr.bf16.mxu0 0
        %689 = vmatpush1.bf16.xpose.msra.mxu0 0
        %690 = vmatprep.subr.bf16.mxu0 0
        %691 = vmatpush1.bf16.xpose.msra.mxu0 0
        %692 = vmatprep.subr.bf16.mxu0 0
        %693 = vmatpush1.bf16.xpose.msra.mxu0 0
        %694 = vmatprep.subr.bf16.mxu0 0
        %695 = vmatpush1.bf16.xpose.msra.mxu0 %v678
        %696 = vmatprep.subr.bf16.mxu0 0
        %697 = vmatpush2.bf16.xpose.msra.mxu0 0
        %698 = vmatprep.subr.bf16.mxu0 0
        %699 = vmatpush2.bf16.xpose.msra.mxu0 0
        %700 = vmatprep.subr.bf16.mxu0 0
        %701 = vmatpush2.bf16.xpose.msra.mxu0 0
        %702 = vmatprep.subr.bf16.mxu0 0
        %703 = vmatpush2.bf16.xpose.msra.mxu0 0
        %704 = vmatprep.subr.bf16.mxu0 0
        %705 = vmatpush2.bf16.xpose.msra.mxu0 0
        %706 = vmatprep.subr.bf16.mxu0 0
        %707 = vmatpush2.bf16.xpose.msra.mxu0 0
        %708 = vmatprep.subr.bf16.mxu0 0
        %709 = vmatpush2.bf16.xpose.msra.mxu0 0
        %710 = vmatprep.subr.bf16.mxu0 0
        %711 = vmatpush2.bf16.xpose.msra.mxu0 0
        %712 = vmatprep.mubr.bf16.mxu0 0
        %713 = vmatmul.mubr.bf16.gmra.mxu0 %v675
        %v714 = vpop.f32.mrf.mxu0
        %v715 = vadd.f32 0.0, %v714
        %v716 = vpop.f32.mrf.mxu0
        %v717 = vpop.f32.mrf.mxu0
        %v718 = vadd.f32 0.0, %v717
        %v719 = vpop.f32.mrf.mxu0
        %720 = vdwg.mxu0
        %v721 = vmul.f32 %v715, 0.17677669
        %v722 = vmul.f32 %v718, 0.17677669
        %v723 = vsel %vm408, %v721, -1e+30
        %v724 = vsel %vm408, %v722, -1e+30
        %v725 = vsel %vm471, %v723, -inf
        %726 = vmax.xlane.f32.xlu0 %v725
        %v727 = vpop.xlane.xlu0 %726
        %v728 = vsel %vm471, %v724, -inf
        %729 = vmax.xlane.f32.xlu0 %v728
        %v730 = vpop.xlane.xlu0 %729
        %v731 = vsub.f32 %v723, %v727
        %v732 = vsub.f32 %v724, %v730
        %v733 = vmul.f32 %v731, 1.442695
        %v734 = vpow.pop %v733
        %v735 = vmul.f32 %v732, 1.442695
        %v736 = vpow.pop %v735
        %v737 = vsel %vm471, %v734, 0.0
        %738 = vadd.xlane.f32.xlu0 %v737
        %v739 = vpop.xlane.xlu0 %738
        %v740 = vsel %vm471, %v736, 0.0
        %741 = vadd.xlane.f32.xlu0 %v740
        %v742 = vpop.xlane.xlu0 %741
        %v743 = vrcp.pop %v739
        %v744 = vmul.f32 %v734, %v743
        %v745 = vrcp.pop %v742
        %v746 = vmul.f32 %v736, %v745
        %v747 = vpack.c.bf16 %v746, %v744
        %748 = vrot.lane.b32.xlu0 %v499, 64
        %v749 = vpop.permute.xlu0 %748
        %v752 = vsel %vm471, %v747, 0
        %754 = vmatprep.subr.bf16.mxu0 0
        %755 = vmatpush1.bf16.msra.mxu0 0
        %756 = vmatprep.subr.bf16.mxu0 0
        %757 = vmatpush1.bf16.msra.mxu0 0
        %758 = vmatprep.subr.bf16.mxu0 0
        %759 = vmatpush1.bf16.msra.mxu0 0
        %760 = vmatprep.subr.bf16.mxu0 0
        %761 = vmatpush1.bf16.msra.mxu0 0
        %762 = vmatprep.subr.bf16.mxu0 0
        %763 = vmatpush1.bf16.msra.mxu0 0
        %764 = vmatprep.subr.bf16.mxu0 0
        %765 = vmatpush1.bf16.msra.mxu0 0
        %766 = vmatprep.subr.bf16.mxu0 0
        %767 = vmatpush1.bf16.msra.mxu0 0
        %768 = vmatprep.subr.bf16.mxu0 0
        %769 = vmatpush1.bf16.msra.mxu0 %v749
        %770 = vmatprep.subr.bf16.mxu0 0
        %771 = vmatpush2.bf16.msra.mxu0 0
        %772 = vmatprep.subr.bf16.mxu0 0
        %773 = vmatpush2.bf16.msra.mxu0 0
        %774 = vmatprep.subr.bf16.mxu0 0
        %775 = vmatpush2.bf16.msra.mxu0 0
        %776 = vmatprep.subr.bf16.mxu0 0
        %777 = vmatpush2.bf16.msra.mxu0 0
        %778 = vmatprep.subr.bf16.mxu0 0
        %779 = vmatpush2.bf16.msra.mxu0 0
        %780 = vmatprep.subr.bf16.mxu0 0
        %781 = vmatpush2.bf16.msra.mxu0 0
        %782 = vmatprep.subr.bf16.mxu0 0
        %783 = vmatpush2.bf16.msra.mxu0 0
        %784 = vmatprep.subr.bf16.mxu0 0
        %785 = vmatpush2.bf16.msra.mxu0 0
        %786 = vmatprep.mubr.bf16.mxu0 0
        %787 = vmatmul.mubr.bf16.gmra.mxu0 %v752
        %v788 = vpop.f32.mrf.mxu0
        %v789 = vadd.f32 0.0, %v788
        %v790 = vpop.f32.mrf.mxu0
        %v791 = vpop.f32.mrf.mxu0
        %v792 = vadd.f32 0.0, %v791
        %v793 = vpop.f32.mrf.mxu0
        %794 = vdwg.mxu0
        %795 = vrot.lane.b32.xlu0 %v413, 32
        %v796 = vpop.permute.xlu0 %795
        %797 = vrot.lane.b32.xlu0 %v418, 32
        %v798 = vpop.permute.xlu0 %797
        %v800 = vsel %vm419, %v796, 0
        %v803 = vsel %vm419, %v798, 0
        %805 = vmatprep.subr.bf16.mxu0 0
        %806 = vmatpush1.bf16.xpose.msra.mxu0 0
        %807 = vmatprep.subr.bf16.mxu0 0
        %808 = vmatpush1.bf16.xpose.msra.mxu0 0
        %809 = vmatprep.subr.bf16.mxu0 0
        %810 = vmatpush1.bf16.xpose.msra.mxu0 0
        %811 = vmatprep.subr.bf16.mxu0 0
        %812 = vmatpush1.bf16.xpose.msra.mxu0 0
        %813 = vmatprep.subr.bf16.mxu0 0
        %814 = vmatpush1.bf16.xpose.msra.mxu0 0
        %815 = vmatprep.subr.bf16.mxu0 0
        %816 = vmatpush1.bf16.xpose.msra.mxu0 0
        %817 = vmatprep.subr.bf16.mxu0 0
        %818 = vmatpush1.bf16.xpose.msra.mxu0 0
        %819 = vmatprep.subr.bf16.mxu0 0
        %820 = vmatpush1.bf16.xpose.msra.mxu0 %v803
        %821 = vmatprep.subr.bf16.mxu0 0
        %822 = vmatpush2.bf16.xpose.msra.mxu0 0
        %823 = vmatprep.subr.bf16.mxu0 0
        %824 = vmatpush2.bf16.xpose.msra.mxu0 0
        %825 = vmatprep.subr.bf16.mxu0 0
        %826 = vmatpush2.bf16.xpose.msra.mxu0 0
        %827 = vmatprep.subr.bf16.mxu0 0
        %828 = vmatpush2.bf16.xpose.msra.mxu0 0
        %829 = vmatprep.subr.bf16.mxu0 0
        %830 = vmatpush2.bf16.xpose.msra.mxu0 0
        %831 = vmatprep.subr.bf16.mxu0 0
        %832 = vmatpush2.bf16.xpose.msra.mxu0 0
        %833 = vmatprep.subr.bf16.mxu0 0
        %834 = vmatpush2.bf16.xpose.msra.mxu0 0
        %835 = vmatprep.subr.bf16.mxu0 0
        %836 = vmatpush2.bf16.xpose.msra.mxu0 0
        %837 = vmatprep.mubr.bf16.mxu0 0
        %838 = vmatmul.mubr.bf16.gmra.mxu0 %v800
        %v839 = vpop.f32.mrf.mxu0
        %v840 = vadd.f32 0.0, %v839
        %v841 = vpop.f32.mrf.mxu0
        %v842 = vpop.f32.mrf.mxu0
        %v843 = vadd.f32 0.0, %v842
        %v844 = vpop.f32.mrf.mxu0
        %845 = vdwg.mxu0
        %v846 = vmul.f32 %v840, 0.17677669
        %v847 = vmul.f32 %v843, 0.17677669
        %v848 = vsel %vm408, %v846, -1e+30
        %v849 = vsel %vm408, %v847, -1e+30
        %v850 = vsel %vm471, %v848, -inf
        %851 = vmax.xlane.f32.xlu0 %v850
        %v852 = vpop.xlane.xlu0 %851
        %v853 = vsel %vm471, %v849, -inf
        %854 = vmax.xlane.f32.xlu0 %v853
        %v855 = vpop.xlane.xlu0 %854
        %v856 = vsub.f32 %v848, %v852
        %v857 = vsub.f32 %v849, %v855
        %v858 = vmul.f32 %v856, 1.442695
        %v859 = vpow.pop %v858
        %v860 = vmul.f32 %v857, 1.442695
        %v861 = vpow.pop %v860
        %v862 = vsel %vm471, %v859, 0.0
        %863 = vadd.xlane.f32.xlu0 %v862
        %v864 = vpop.xlane.xlu0 %863
        %v865 = vsel %vm471, %v861, 0.0
        %866 = vadd.xlane.f32.xlu0 %v865
        %v867 = vpop.xlane.xlu0 %866
        %v868 = vrcp.pop %v864
        %v869 = vmul.f32 %v859, %v868
        %v870 = vrcp.pop %v867
        %v871 = vmul.f32 %v861, %v870
        %v872 = vpack.c.bf16 %v871, %v869
        %873 = vrot.lane.b32.xlu0 %v499, 32
        %v874 = vpop.permute.xlu0 %873
        %v877 = vsel %vm471, %v872, 0
        %879 = vmatprep.subr.bf16.mxu0 0
        %880 = vmatpush1.bf16.msra.mxu0 0
        %881 = vmatprep.subr.bf16.mxu0 0
        %882 = vmatpush1.bf16.msra.mxu0 0
        %883 = vmatprep.subr.bf16.mxu0 0
        %884 = vmatpush1.bf16.msra.mxu0 0
        %885 = vmatprep.subr.bf16.mxu0 0
        %886 = vmatpush1.bf16.msra.mxu0 0
        %887 = vmatprep.subr.bf16.mxu0 0
        %888 = vmatpush1.bf16.msra.mxu0 0
        %889 = vmatprep.subr.bf16.mxu0 0
        %890 = vmatpush1.bf16.msra.mxu0 0
        %891 = vmatprep.subr.bf16.mxu0 0
        %892 = vmatpush1.bf16.msra.mxu0 0
        %893 = vmatprep.subr.bf16.mxu0 0
        %894 = vmatpush1.bf16.msra.mxu0 %v874
        %895 = vmatprep.subr.bf16.mxu0 0
        %896 = vmatpush2.bf16.msra.mxu0 0
        %897 = vmatprep.subr.bf16.mxu0 0
        %898 = vmatpush2.bf16.msra.mxu0 0
        %899 = vmatprep.subr.bf16.mxu0 0
        %900 = vmatpush2.bf16.msra.mxu0 0
        %901 = vmatprep.subr.bf16.mxu0 0
        %902 = vmatpush2.bf16.msra.mxu0 0
        %903 = vmatprep.subr.bf16.mxu0 0
        %904 = vmatpush2.bf16.msra.mxu0 0
        %905 = vmatprep.subr.bf16.mxu0 0
        %906 = vmatpush2.bf16.msra.mxu0 0
        %907 = vmatprep.subr.bf16.mxu0 0
        %908 = vmatpush2.bf16.msra.mxu0 0
        %909 = vmatprep.subr.bf16.mxu0 0
        %910 = vmatpush2.bf16.msra.mxu0 0
        %911 = vmatprep.mubr.bf16.mxu0 0
        %912 = vmatmul.mubr.bf16.gmra.mxu0 %v877
        %v913 = vpop.f32.mrf.mxu0
        %v914 = vadd.f32 0.0, %v913
        %v915 = vpop.f32.mrf.mxu0
        %v916 = vpop.f32.mrf.mxu0
        %v917 = vadd.f32 0.0, %v916
        %v918 = vpop.f32.mrf.mxu0
        %919 = vdwg.mxu0
        %922 = vrot.lane.b32.xlu0 %v664, 32
        %v923 = vpop.permute.xlu0 %922
        %924 = vrot.lane.b32.xlu0 %v667, 32
        %v925 = vpop.permute.xlu0 %924
        %930 = vrot.lane.b32.xlu0 %v789, 64
        %v931 = vpop.permute.xlu0 %930
        %932 = vrot.lane.b32.xlu0 %v792, 64
        %v933 = vpop.permute.xlu0 %932
        %938 = vrot.lane.b32.xlu0 %v914, 96
        %v939 = vpop.permute.xlu0 %938
        %940 = vrot.lane.b32.xlu0 %v917, 96
        %v941 = vpop.permute.xlu0 %940
        %v944 = vsel %vm419, %v539, %v923
        %v945 = vsel %vm419, %v542, %v925
        %vm946 = vcmask 523264
        %v947 = vsel %vm946, %v944, %v931
        %v948 = vsel %vm946, %v945, %v933
        %vm949 = vcmask 785408
        %v950 = vsel %vm949, %v947, %v939
        %v951 = vsel %vm949, %v948, %v941
        %v952 = vpack.c.bf16 %v951, %v950
        %v954 = vunpack.c.l.b16 %v952
        %v955 = vunpack.c.h.b16 %v952
        %v956 = vpack.c.b16 %v954, %v954
        %v957 = vpack.c.b16 %v955, %v955
        %960 = vst [vmem:[%s397] sm:$0xf] %v956
        %961 = vst [vmem:[%s397 + $0x4] sm:$0xf] %v957
        %s962 = smul.u32 2, %s18
        %p963 = scmp.lt.s32.totalorder %s962, 3
        %s964 = scalar_select %p963, %s962, 3
        %p965 = scmp.lt.s32.totalorder %s19, 0
        %s966 = scalar_select %p965, %s19, 0
        %s967 = sadd.s32 %s966, %s964
        %s968 = smul.addr %s967, 4
        %s969 = scalar_lea.vmem %s3, %s968
        // Predicated region
        $region156: #{image_encoder_forward.14} parent=142 // pred_check
          %p970 = pneg %p134
        $region157: #{image_encoder_forward.14} parent=142 // pred_check_branch
          %972 = sbr.rel (%p970) target = $region159
        $region158: #{image_encoder_forward.14} parent=142 // pred_region
          %s973 = smul.u32 2, %s18
        $region159: #{image_encoder_forward.14} parent=142 // pred_fallthru
          _
      $region143: #{image_encoder_forward.14} parent=5 // pred_fallthru
        _
      %p974 = scmp.le.s32.totalorder 2, %s9
      // Predicated region
      $region160: #{image_encoder_forward.14} parent=5 // pred_check
        %p975 = pneg %p974
      $region161: #{image_encoder_forward.14} parent=5 // pred_check_branch
        %977 = sbr.rel (%p975) target = $region163
      $region162: #{image_encoder_forward.14} parent=5 // pred_region
        %s978 = ssub.s32 %s9, 2
        // Predicated region
        $region164: #{image_encoder_forward.14} parent=162 // pred_check
          %p979 = pneg %p140
        $region165: #{image_encoder_forward.14} parent=162 // pred_check_branch
          %981 = sbr.rel (%p979) target = $region167
        $region166: #{image_encoder_forward.14} parent=162 // pred_region
          %s982 = smul.u32 2, %s20
          %p983 = scmp.lt.s32.totalorder %s982, 3
          %s984 = scalar_select %p983, %s982, 3
          %p985 = scmp.lt.s32.totalorder %s21, 0
          %s986 = scalar_select %p985, %s21, 0
          %s987 = sadd.s32 %s986, %s984
          %s988 = smul.addr %s987, 4
          %s989 = scalar_lea.vmem %s3, %s988
        $region167: #{image_encoder_forward.14} parent=162 // pred_fallthru
          _
      $region163: #{image_encoder_forward.14} parent=5 // pred_fallthru
        _
    $region6: #{image_encoder_forward.14} parent=1 // loop_footer
      %s13 = sadd.s32 1, %s9
    $region7: #{image_encoder_forward.14} parent=1 // loop_footer_branch
      %8 = sbr.rel target = $region3
    $region8: #{image_encoder_forward.14} parent=1 // loop_exit
      _

// kernel: image_encoder_forward.15
$region0: #{image_encoder_forward.15}
  #allocation0 [shape = 'u32[]', space=smem, size = 0x4, offset = 0x4, fixed_abs, tag = 'smem constant byte address 0x4 - core index']
  #allocation1 [shape = 'u32[144,128]{1,0:T(1,128)}', space=vmem, size = 0x12000, scoped, tag = 'internal scratch']
  %s0 = inlined_call_operand.vmem [shape: bf16[32,128], index: 0, kind: input, shape index: {}]
  %s1 = inlined_call_operand.vmem [shape: bf16[128,128], index: 1, kind: input, shape index: {}]
  %s2 = inlined_call_operand.vmem [shape: f32[1,128], index: 2, kind: input, shape index: {}]
  %s3 = inlined_call_operand.vmem [shape: bf16[32,128], index: 3, kind: input, shape index: {}]
  %s4 = inlined_call_operand.vmem [shape: bf16[32,128], index: 4, kind: output, shape index: {}]
  %s5 = sld [smem:[#allocation0]]
  $region26: #{image_encoder_forward.15} parent=0
    _
  %s7 = ssub.s32 1, %s5
  %s8 = scalar_select 0, %s7, %s5
  // Predicated region
  $region2: #{image_encoder_forward.15} parent=0 // pred_check
    _
  $region3: #{image_encoder_forward.15} parent=0 // pred_check_branch
    %10 = sbr.rel (0) target = $region5
  $region4: #{image_encoder_forward.15} parent=0 // pred_region
    _
  $region5: #{image_encoder_forward.15} parent=0 // pred_fallthru
    _
  // Predicated region
  $region6: #{image_encoder_forward.15} parent=0 // pred_check
    _
  $region7: #{image_encoder_forward.15} parent=0 // pred_check_branch
    %12 = sbr.rel (0) target = $region9
  $region8: #{image_encoder_forward.15} parent=0 // pred_region
    _
  $region9: #{image_encoder_forward.15} parent=0 // pred_fallthru
    _
  // Predicated region
  $region10: #{image_encoder_forward.15} parent=0 // pred_check
    _
  $region11: #{image_encoder_forward.15} parent=0 // pred_check_branch
    %14 = sbr.rel (0) target = $region13
  $region12: #{image_encoder_forward.15} parent=0 // pred_region
    _
  $region13: #{image_encoder_forward.15} parent=0 // pred_fallthru
    _
  // Predicated region
  $region14: #{image_encoder_forward.15} parent=0 // pred_check
    _
  $region15: #{image_encoder_forward.15} parent=0 // pred_check_branch
    %16 = sbr.rel (0) target = $region17
  $region16: #{image_encoder_forward.15} parent=0 // pred_region
    _
  $region17: #{image_encoder_forward.15} parent=0 // pred_fallthru
    _
  %v18 = vld [vmem:[%s0] sm:$0xf]
  %v19 = vld [vmem:[%s0 + $0x4] sm:$0xf]
  %v20 = vld [vmem:[%s0 + $0x8] sm:$0xf]
  %v21 = vld [vmem:[%s0 + $0xc] sm:$0xf]
  %v22 = vld [vmem:[%s1] sm:$0xf]
  %v23 = vld [vmem:[%s1 + $0x4] sm:$0xf]
  %v24 = vld [vmem:[%s1 + $0x8] sm:$0xf]
  %v25 = vld [vmem:[%s1 + $0xc] sm:$0xf]
  %v26 = vld [vmem:[%s1 + $0x10] sm:$0xf]
  %v27 = vld [vmem:[%s1 + $0x14] sm:$0xf]
  %v28 = vld [vmem:[%s1 + $0x18] sm:$0xf]
  %v29 = vld [vmem:[%s1 + $0x1c] sm:$0xf]
  %v30 = vld [vmem:[%s1 + $0x20] sm:$0xf]
  %v31 = vld [vmem:[%s1 + $0x24] sm:$0xf]
  %v32 = vld [vmem:[%s1 + $0x28] sm:$0xf]
  %v33 = vld [vmem:[%s1 + $0x2c] sm:$0xf]
  %v34 = vld [vmem:[%s1 + $0x30] sm:$0xf]
  %v35 = vld [vmem:[%s1 + $0x34] sm:$0xf]
  %v36 = vld [vmem:[%s1 + $0x38] sm:$0xf]
  %v37 = vld [vmem:[%s1 + $0x3c] sm:$0xf]
  %v38 = vld [vmem:[%s2] sm:$0x1]
  %v40 = vlaneseq
  %v41 = vshrl.u32 %v40, 7
  %v42 = vsub.s32 0, %v41
  %v43 = vrot.slane %v38, %v42
  %v49 = vunpack.c.l.b16 %v18
  %v50 = vunpack.c.l.b16 %v19
  %v51 = vunpack.c.l.b16 %v20
  %v52 = vunpack.c.l.b16 %v21
  %v53 = vpack.c.b16 %v50, %v49
  %v54 = vpack.c.b16 %v52, %v51
  %v73 = vunpack.c.l.b16 %v22
  %v74 = vunpack.c.l.b16 %v23
  %v75 = vunpack.c.l.b16 %v24
  %v76 = vunpack.c.l.b16 %v25
  %v77 = vunpack.c.l.b16 %v26
  %v78 = vunpack.c.l.b16 %v27
  %v79 = vunpack.c.l.b16 %v28
  %v80 = vunpack.c.l.b16 %v29
  %v81 = vunpack.c.l.b16 %v30
  %v82 = vunpack.c.l.b16 %v31
  %v83 = vunpack.c.l.b16 %v32
  %v84 = vunpack.c.l.b16 %v33
  %v85 = vunpack.c.l.b16 %v34
  %v86 = vunpack.c.l.b16 %v35
  %v87 = vunpack.c.l.b16 %v36
  %v88 = vunpack.c.l.b16 %v37
  %v89 = vpack.c.b16 %v74, %v73
  %v90 = vpack.c.b16 %v76, %v75
  %v91 = vpack.c.b16 %v78, %v77
  %v92 = vpack.c.b16 %v80, %v79
  %v93 = vpack.c.b16 %v82, %v81
  %v94 = vpack.c.b16 %v84, %v83
  %v95 = vpack.c.b16 %v86, %v85
  %v96 = vpack.c.b16 %v88, %v87
  %105 = vmatprep.subr.bf16.mxu0 0
  %106 = vmatpush1.bf16.msra.mxu0 %v96
  %107 = vmatprep.subr.bf16.mxu0 0
  %108 = vmatpush1.bf16.msra.mxu0 %v95
  %109 = vmatprep.subr.bf16.mxu0 0
  %110 = vmatpush1.bf16.msra.mxu0 %v94
  %111 = vmatprep.subr.bf16.mxu0 0
  %112 = vmatpush1.bf16.msra.mxu0 %v93
  %113 = vmatprep.subr.bf16.mxu0 0
  %114 = vmatpush1.bf16.msra.mxu0 %v92
  %115 = vmatprep.subr.bf16.mxu0 0
  %116 = vmatpush1.bf16.msra.mxu0 %v91
  %117 = vmatprep.subr.bf16.mxu0 0
  %118 = vmatpush1.bf16.msra.mxu0 %v90
  %119 = vmatprep.subr.bf16.mxu0 0
  %120 = vmatpush1.bf16.msra.mxu0 %v89
  %121 = vmatprep.subr.bf16.mxu0 0
  %122 = vmatpush2.bf16.msra.mxu0 0
  %123 = vmatprep.subr.bf16.mxu0 0
  %124 = vmatpush2.bf16.msra.mxu0 0
  %125 = vmatprep.subr.bf16.mxu0 0
  %126 = vmatpush2.bf16.msra.mxu0 0
  %127 = vmatprep.subr.bf16.mxu0 0
  %128 = vmatpush2.bf16.msra.mxu0 0
  %129 = vmatprep.subr.bf16.mxu0 0
  %130 = vmatpush2.bf16.msra.mxu0 0
  %131 = vmatprep.subr.bf16.mxu0 0
  %132 = vmatpush2.bf16.msra.mxu0 0
  %133 = vmatprep.subr.bf16.mxu0 0
  %134 = vmatpush2.bf16.msra.mxu0 0
  %135 = vmatprep.subr.bf16.mxu0 0
  %136 = vmatpush2.bf16.msra.mxu0 0
  %137 = vmatprep.mubr.bf16.mxu0 0
  %138 = vmatmul.mubr.bf16.gmra.mxu0 %v53
  %v139 = vpop.f32.mrf.mxu0
  %v140 = vadd.f32 %v43, %v139
  %v141 = vpop.f32.mrf.mxu0
  %v142 = vpop.f32.mrf.mxu0
  %v143 = vadd.f32 %v43, %v142
  %v144 = vpop.f32.mrf.mxu0
  %145 = vmatprep.mubr.bf16.mxu0 0
  %146 = vmatmul.mubr.bf16.gmra.mxu0 %v54
  %v147 = vpop.f32.mrf.mxu0
  %v148 = vadd.f32 %v43, %v147
  %v149 = vpop.f32.mrf.mxu0
  %v150 = vpop.f32.mrf.mxu0
  %v151 = vadd.f32 %v43, %v150
  %v152 = vpop.f32.mrf.mxu0
  %153 = vdwg.mxu0
  %v154 = vld [vmem:[%s3] sm:$0xf]
  %v155 = vld [vmem:[%s3 + $0x4] sm:$0xf]
  %v156 = vld [vmem:[%s3 + $0x8] sm:$0xf]
  %v157 = vld [vmem:[%s3 + $0xc] sm:$0xf]
  %v158 = vunpack.c.l.bf16 %v154
  %v159 = vunpack.c.l.bf16 %v155
  %v160 = vunpack.c.l.bf16 %v156
  %v161 = vunpack.c.l.bf16 %v157
  %v162 = vadd.f32 %v140, %v158
  %v163 = vadd.f32 %v143, %v159
  %v164 = vadd.f32 %v148, %v160
  %v165 = vadd.f32 %v151, %v161
  %v166 = vpack.c.bf16 %v163, %v162
  %v167 = vpack.c.bf16 %v165, %v164
  %v170 = vunpack.c.l.b16 %v166
  %v171 = vunpack.c.h.b16 %v166
  %v172 = vunpack.c.l.b16 %v167
  %v173 = vunpack.c.h.b16 %v167
  %v174 = vpack.c.b16 %v170, %v170
  %v175 = vpack.c.b16 %v171, %v171
  %v176 = vpack.c.b16 %v172, %v172
  %v177 = vpack.c.b16 %v173, %v173
  %182 = vst [vmem:[%s4] sm:$0xf] %v174
  %183 = vst [vmem:[%s4 + $0x4] sm:$0xf] %v175
  %184 = vst [vmem:[%s4 + $0x8] sm:$0xf] %v176
  %185 = vst [vmem:[%s4 + $0xc] sm:$0xf] %v177
  // Predicated region
  $region18: #{image_encoder_forward.15} parent=0 // pred_check
    _
  $region19: #{image_encoder_forward.15} parent=0 // pred_check_branch
    %187 = sbr.rel (0) target = $region21
  $region20: #{image_encoder_forward.15} parent=0 // pred_region
    _
  $region21: #{image_encoder_forward.15} parent=0 // pred_fallthru
    _
  // Predicated region
  $region22: #{image_encoder_forward.15} parent=0 // pred_check
    _
  $region23: #{image_encoder_forward.15} parent=0 // pred_check_branch
    %189 = sbr.rel (0) target = $region25
  $region24: #{image_encoder_forward.15} parent=0 // pred_region
    _
  $region25: #{image_encoder_forward.15} parent=0 // pred_fallthru
    _

// kernel: image_encoder_forward.21
$region0: #{image_encoder_forward.21}
  #allocation0 [shape = 'u32[]', space=smem, size = 0x4, offset = 0x4, fixed_abs, tag = 'smem constant byte address 0x4 - core index']
  #allocation1 [shape = 'u32[144,128]{1,0:T(1,128)}', space=vmem, size = 0x12000, scoped, tag = 'internal scratch']
  %s0 = inlined_call_operand.vmem [shape: bf16[32,128], index: 0, kind: input, shape index: {}]
  %s1 = inlined_call_operand.vmem [shape: f32[1,128], index: 1, kind: input, shape index: {}]
  %s2 = inlined_call_operand.vmem [shape: f32[1,128], index: 2, kind: input, shape index: {}]
  %s3 = inlined_call_operand.vmem [shape: f32[32,128], index: 3, kind: output, shape index: {}]
  %s4 = sld [smem:[#allocation0]]
  $region22: #{image_encoder_forward.21} parent=0
    _
  %s6 = ssub.s32 1, %s4
  %s7 = scalar_select 0, %s6, %s4
  // Predicated region
  $region2: #{image_encoder_forward.21} parent=0 // pred_check
    _
  $region3: #{image_encoder_forward.21} parent=0 // pred_check_branch
    %9 = sbr.rel (0) target = $region5
  $region4: #{image_encoder_forward.21} parent=0 // pred_region
    _
  $region5: #{image_encoder_forward.21} parent=0 // pred_fallthru
    _
  // Predicated region
  $region6: #{image_encoder_forward.21} parent=0 // pred_check
    _
  $region7: #{image_encoder_forward.21} parent=0 // pred_check_branch
    %11 = sbr.rel (0) target = $region9
  $region8: #{image_encoder_forward.21} parent=0 // pred_region
    _
  $region9: #{image_encoder_forward.21} parent=0 // pred_fallthru
    _
  // Predicated region
  $region10: #{image_encoder_forward.21} parent=0 // pred_check
    _
  $region11: #{image_encoder_forward.21} parent=0 // pred_check_branch
    %13 = sbr.rel (0) target = $region13
  $region12: #{image_encoder_forward.21} parent=0 // pred_region
    _
  $region13: #{image_encoder_forward.21} parent=0 // pred_fallthru
    _
  %v14 = vld [vmem:[%s0] sm:$0xf]
  %v15 = vld [vmem:[%s0 + $0x4] sm:$0xf]
  %v16 = vld [vmem:[%s0 + $0x8] sm:$0xf]
  %v17 = vld [vmem:[%s0 + $0xc] sm:$0xf]
  %v18 = vunpack.c.l.bf16 %v14
  %v19 = vunpack.c.l.bf16 %v15
  %v20 = vunpack.c.l.bf16 %v16
  %v21 = vunpack.c.l.bf16 %v17
  %22 = vadd.xlane.f32.xlu0 %v18
  %v23 = vpop.xlane.xlu0 %22
  %24 = vadd.xlane.f32.xlu0 %v19
  %v25 = vpop.xlane.xlu0 %24
  %26 = vadd.xlane.f32.xlu0 %v20
  %v27 = vpop.xlane.xlu0 %26
  %28 = vadd.xlane.f32.xlu0 %v21
  %v29 = vpop.xlane.xlu0 %28
  %v30 = vrcp.pop 128.0
  %v31 = vmul.f32 %v23, %v30
  %v32 = vmul.f32 %v25, %v30
  %v33 = vmul.f32 %v27, %v30
  %v34 = vmul.f32 %v29, %v30
  %v35 = vsub.f32 %v18, %v31
  %v36 = vsub.f32 %v19, %v32
  %v37 = vsub.f32 %v20, %v33
  %v38 = vsub.f32 %v21, %v34
  %v39 = vmul.f32 %v35, %v35
  %v40 = vmul.f32 %v36, %v36
  %v41 = vmul.f32 %v37, %v37
  %v42 = vmul.f32 %v38, %v38
  %43 = vadd.xlane.f32.xlu0 %v39
  %v44 = vpop.xlane.xlu0 %43
  %45 = vadd.xlane.f32.xlu0 %v40
  %v46 = vpop.xlane.xlu0 %45
  %47 = vadd.xlane.f32.xlu0 %v41
  %v48 = vpop.xlane.xlu0 %47
  %49 = vadd.xlane.f32.xlu0 %v42
  %v50 = vpop.xlane.xlu0 %49
  %v51 = vmul.f32 %v44, %v30
  %v52 = vmul.f32 %v46, %v30
  %v53 = vmul.f32 %v48, %v30
  %v54 = vmul.f32 %v50, %v30
  %v55 = vadd.f32 %v51, 1e-05
  %v56 = vadd.f32 %v52, 1e-05
  %v57 = vadd.f32 %v53, 1e-05
  %v58 = vadd.f32 %v54, 1e-05
  %v59 = vrsqrt.pop %v55
  %v60 = vrsqrt.pop %v56
  %v61 = vrsqrt.pop %v57
  %v62 = vrsqrt.pop %v58
  %v63 = vmul.f32 %v35, %v59
  %v64 = vmul.f32 %v36, %v60
  %v65 = vmul.f32 %v37, %v61
  %v66 = vmul.f32 %v38, %v62
  %v67 = vld [vmem:[%s1] sm:$0x1]
  %v69 = vlaneseq
  %v70 = vshrl.u32 %v69, 7
  %v71 = vsub.s32 0, %v70
  %v72 = vrot.slane %v67, %v71
  %v74 = vmul.f32 %v63, %v72
  %v75 = vmul.f32 %v64, %v72
  %v76 = vmul.f32 %v65, %v72
  %v77 = vmul.f32 %v66, %v72
  %v78 = vld [vmem:[%s2] sm:$0x1]
  %v80 = vlaneseq
  %v81 = vshrl.u32 %v80, 7
  %v82 = vsub.s32 0, %v81
  %v83 = vrot.slane %v78, %v82
  %v85 = vadd.f32 %v74, %v83
  %v86 = vadd.f32 %v75, %v83
  %v87 = vadd.f32 %v76, %v83
  %v88 = vadd.f32 %v77, %v83
  %89 = vst [vmem:[%s3] sm:$0xff] %v85
  %90 = vst [vmem:[%s3 + $0x8] sm:$0xff] %v86
  %91 = vst [vmem:[%s3 + $0x10] sm:$0xff] %v87
  %92 = vst [vmem:[%s3 + $0x18] sm:$0xff] %v88
  // Predicated region
  $region14: #{image_encoder_forward.21} parent=0 // pred_check
    _
  $region15: #{image_encoder_forward.21} parent=0 // pred_check_branch
    %94 = sbr.rel (0) target = $region17
  $region16: #{image_encoder_forward.21} parent=0 // pred_region
    _
  $region17: #{image_encoder_forward.21} parent=0 // pred_fallthru
    _
  // Predicated region
  $region18: #{image_encoder_forward.21} parent=0 // pred_check
    _
  $region19: #{image_encoder_forward.21} parent=0 // pred_check_branch
    %96 = sbr.rel (0) target = $region21
  $region20: #{image_encoder_forward.21} parent=0 // pred_region
    _
  $region21: #{image_encoder_forward.21} parent=0 // pred_fallthru
    _

// kernel: image_encoder_forward.16
$region0: #{image_encoder_forward.16}
  #allocation0 [shape = 'u32[]', space=smem, size = 0x4, offset = 0x4, fixed_abs, tag = 'smem constant byte address 0x4 - core index']
  #allocation1 [shape = 'u32[144,128]{1,0:T(1,128)}', space=vmem, size = 0x12000, scoped, tag = 'internal scratch']
  #allocation2 [shape = 'f32[32,128]{1,0:T(8,128)}', space=vmem, size = 0x4000, scoped, tag = 'scratch operand']
  %s0 = inlined_call_operand.vmem [shape: bf16[32,128], index: 0, kind: input, shape index: {}]
  %s1 = inlined_call_operand.vmem [shape: f32[1,128], index: 1, kind: input, shape index: {}]
  %s2 = inlined_call_operand.vmem [shape: f32[1,128], index: 2, kind: input, shape index: {}]
  %s3 = inlined_call_operand.vmem [shape: bf16[128,512], index: 3, kind: input, shape index: {}]
  %s4 = inlined_call_operand.vmem [shape: f32[1,512], index: 4, kind: input, shape index: {}]
  %s5 = inlined_call_operand.vmem [shape: bf16[512,128], index: 5, kind: input, shape index: {}]
  %s6 = inlined_call_operand.vmem [shape: f32[1,128], index: 6, kind: input, shape index: {}]
  %s7 = inlined_call_operand.vmem [shape: bf16[32,128], index: 7, kind: output, shape index: {}]
  %s8 = sld [smem:[#allocation0]]
  $region46: #{image_encoder_forward.16} parent=0
    _
  %s10 = ssub.s32 1, %s8
  %s11 = scalar_select 0, %s10, %s8
  // Predicated region
  $region2: #{image_encoder_forward.16} parent=0 // pred_check
    _
  $region3: #{image_encoder_forward.16} parent=0 // pred_check_branch
    %13 = sbr.rel (0) target = $region5
  $region4: #{image_encoder_forward.16} parent=0 // pred_region
    _
  $region5: #{image_encoder_forward.16} parent=0 // pred_fallthru
    _
  // Predicated region
  $region6: #{image_encoder_forward.16} parent=0 // pred_check
    _
  $region7: #{image_encoder_forward.16} parent=0 // pred_check_branch
    %15 = sbr.rel (0) target = $region9
  $region8: #{image_encoder_forward.16} parent=0 // pred_region
    _
  $region9: #{image_encoder_forward.16} parent=0 // pred_fallthru
    _
  // Predicated region
  $region10: #{image_encoder_forward.16} parent=0 // pred_check
    _
  $region11: #{image_encoder_forward.16} parent=0 // pred_check_branch
    %17 = sbr.rel (0) target = $region13
  $region12: #{image_encoder_forward.16} parent=0 // pred_region
    _
  $region13: #{image_encoder_forward.16} parent=0 // pred_fallthru
    _
  // Predicated region
  $region14: #{image_encoder_forward.16} parent=0 // pred_check
    _
  $region15: #{image_encoder_forward.16} parent=0 // pred_check_branch
    %19 = sbr.rel (0) target = $region17
  $region16: #{image_encoder_forward.16} parent=0 // pred_region
    _
  $region17: #{image_encoder_forward.16} parent=0 // pred_fallthru
    _
  // Predicated region
  $region18: #{image_encoder_forward.16} parent=0 // pred_check
    _
  $region19: #{image_encoder_forward.16} parent=0 // pred_check_branch
    %21 = sbr.rel (0) target = $region21
  $region20: #{image_encoder_forward.16} parent=0 // pred_region
    _
  $region21: #{image_encoder_forward.16} parent=0 // pred_fallthru
    _
  // Predicated region
  $region22: #{image_encoder_forward.16} parent=0 // pred_check
    _
  $region23: #{image_encoder_forward.16} parent=0 // pred_check_branch
    %23 = sbr.rel (0) target = $region25
  $region24: #{image_encoder_forward.16} parent=0 // pred_region
    _
  $region25: #{image_encoder_forward.16} parent=0 // pred_fallthru
    _
  // Predicated region
  $region26: #{image_encoder_forward.16} parent=0 // pred_check
    _
  $region27: #{image_encoder_forward.16} parent=0 // pred_check_branch
    %25 = sbr.rel (0) target = $region29
  $region28: #{image_encoder_forward.16} parent=0 // pred_region
    _
  $region29: #{image_encoder_forward.16} parent=0 // pred_fallthru
    _
  %p27 = scmp.eq.s32.totalorder 0, 0
  // Predicated region
  $region30: #{image_encoder_forward.16} parent=0 // pred_check
    %p28 = pneg %p27
  $region31: #{image_encoder_forward.16} parent=0 // pred_check_branch
    %30 = sbr.rel (%p28) target = $region33
  $region32: #{image_encoder_forward.16} parent=0 // pred_region
    %31 = vst [vmem:[#allocation2] sm:$0xff] 0.0
    %32 = vst [vmem:[#allocation2 + $0x8] sm:$0xff] 0.0
    %33 = vst [vmem:[#allocation2 + $0x10] sm:$0xff] 0.0
    %34 = vst [vmem:[#allocation2 + $0x18] sm:$0xff] 0.0
  $region33: #{image_encoder_forward.16} parent=0 // pred_fallthru
    _
  %v35 = vld [vmem:[%s0] sm:$0xf]
  %v36 = vld [vmem:[%s0 + $0x4] sm:$0xf]
  %v37 = vld [vmem:[%s0 + $0x8] sm:$0xf]
  %v38 = vld [vmem:[%s0 + $0xc] sm:$0xf]
  %v39 = vunpack.c.l.bf16 %v35
  %v40 = vunpack.c.l.bf16 %v36
  %v41 = vunpack.c.l.bf16 %v37
  %v42 = vunpack.c.l.bf16 %v38
  %43 = vadd.xlane.f32.xlu0 %v39
  %v44 = vpop.xlane.xlu0 %43
  %45 = vadd.xlane.f32.xlu0 %v40
  %v46 = vpop.xlane.xlu0 %45
  %47 = vadd.xlane.f32.xlu0 %v41
  %v48 = vpop.xlane.xlu0 %47
  %49 = vadd.xlane.f32.xlu0 %v42
  %v50 = vpop.xlane.xlu0 %49
  %v51 = vrcp.pop 128.0
  %v52 = vmul.f32 %v44, %v51
  %v53 = vmul.f32 %v46, %v51
  %v54 = vmul.f32 %v48, %v51
  %v55 = vmul.f32 %v50, %v51
  %v56 = vsub.f32 %v39, %v52
  %v57 = vsub.f32 %v40, %v53
  %v58 = vsub.f32 %v41, %v54
  %v59 = vsub.f32 %v42, %v55
  %v60 = vmul.f32 %v56, %v56
  %v61 = vmul.f32 %v57, %v57
  %v62 = vmul.f32 %v58, %v58
  %v63 = vmul.f32 %v59, %v59
  %64 = vadd.xlane.f32.xlu0 %v60
  %v65 = vpop.xlane.xlu0 %64
  %66 = vadd.xlane.f32.xlu0 %v61
  %v67 = vpop.xlane.xlu0 %66
  %68 = vadd.xlane.f32.xlu0 %v62
  %v69 = vpop.xlane.xlu0 %68
  %70 = vadd.xlane.f32.xlu0 %v63
  %v71 = vpop.xlane.xlu0 %70
  %v72 = vmul.f32 %v65, %v51
  %v73 = vmul.f32 %v67, %v51
  %v74 = vmul.f32 %v69, %v51
  %v75 = vmul.f32 %v71, %v51
  %v76 = vadd.f32 %v72, 1e-05
  %v77 = vadd.f32 %v73, 1e-05
  %v78 = vadd.f32 %v74, 1e-05
  %v79 = vadd.f32 %v75, 1e-05
  %v80 = vrsqrt.pop %v76
  %v81 = vrsqrt.pop %v77
  %v82 = vrsqrt.pop %v78
  %v83 = vrsqrt.pop %v79
  %v84 = vmul.f32 %v56, %v80
  %v85 = vmul.f32 %v57, %v81
  %v86 = vmul.f32 %v58, %v82
  %v87 = vmul.f32 %v59, %v83
  %v88 = vld [vmem:[%s1] sm:$0x1]
  %v90 = vlaneseq
  %v91 = vshrl.u32 %v90, 7
  %v92 = vsub.s32 0, %v91
  %v93 = vrot.slane %v88, %v92
  %v95 = vmul.f32 %v84, %v93
  %v96 = vmul.f32 %v85, %v93
  %v97 = vmul.f32 %v86, %v93
  %v98 = vmul.f32 %v87, %v93
  %v99 = vld [vmem:[%s2] sm:$0x1]
  %v101 = vlaneseq
  %v102 = vshrl.u32 %v101, 7
  %v103 = vsub.s32 0, %v102
  %v104 = vrot.slane %v99, %v103
  %v106 = vadd.f32 %v95, %v104
  %v107 = vadd.f32 %v96, %v104
  %v108 = vadd.f32 %v97, %v104
  %v109 = vadd.f32 %v98, %v104
  %v110 = vpack.c.bf16 %v107, %v106
  %v111 = vpack.c.bf16 %v109, %v108
  %v112 = vld [vmem:[%s3] sm:$0xff]
  %v113 = vld [vmem:[%s3 + $0x8] sm:$0xff]
  %v114 = vld [vmem:[%s3 + $0x10] sm:$0xff]
  %v115 = vld [vmem:[%s3 + $0x18] sm:$0xff]
  %v116 = vld [vmem:[%s3 + $0x20] sm:$0xff]
  %v117 = vld [vmem:[%s3 + $0x28] sm:$0xff]
  %v118 = vld [vmem:[%s3 + $0x30] sm:$0xff]
  %v119 = vld [vmem:[%s3 + $0x38] sm:$0xff]
  %v120 = vld [vmem:[%s3 + $0x40] sm:$0xff]
  %v121 = vld [vmem:[%s3 + $0x48] sm:$0xff]
  %v122 = vld [vmem:[%s3 + $0x50] sm:$0xff]
  %v123 = vld [vmem:[%s3 + $0x58] sm:$0xff]
  %v124 = vld [vmem:[%s3 + $0x60] sm:$0xff]
  %v125 = vld [vmem:[%s3 + $0x68] sm:$0xff]
  %v126 = vld [vmem:[%s3 + $0x70] sm:$0xff]
  %v127 = vld [vmem:[%s3 + $0x78] sm:$0xff]
  %v128 = vld [vmem:[%s3 + $0x80] sm:$0xff]
  %v129 = vld [vmem:[%s3 + $0x88] sm:$0xff]
  %v130 = vld [vmem:[%s3 + $0x90] sm:$0xff]
  %v131 = vld [vmem:[%s3 + $0x98] sm:$0xff]
  %v132 = vld [vmem:[%s3 + $0xa0] sm:$0xff]
  %v133 = vld [vmem:[%s3 + $0xa8] sm:$0xff]
  %v134 = vld [vmem:[%s3 + $0xb0] sm:$0xff]
  %v135 = vld [vmem:[%s3 + $0xb8] sm:$0xff]
  %v136 = vld [vmem:[%s3 + $0xc0] sm:$0xff]
  %v137 = vld [vmem:[%s3 + $0xc8] sm:$0xff]
  %v138 = vld [vmem:[%s3 + $0xd0] sm:$0xff]
  %v139 = vld [vmem:[%s3 + $0xd8] sm:$0xff]
  %v140 = vld [vmem:[%s3 + $0xe0] sm:$0xff]
  %v141 = vld [vmem:[%s3 + $0xe8] sm:$0xff]
  %v142 = vld [vmem:[%s3 + $0xf0] sm:$0xff]
  %v143 = vld [vmem:[%s3 + $0xf8] sm:$0xff]
  %v144 = vld [vmem:[%s4] sm:$0xf]
  %v146 = vlaneseq
  %v147 = vshrl.u32 %v146, 7
  %v148 = vsub.s32 0, %v147
  %v149 = vrot.slane %v144, %v148
  %v150 = vlaneseq
  %v151 = vshrl.u32 %v150, 7
  %v152 = vsub.s32 1, %v151
  %v153 = vrot.slane %v144, %v152
  %v154 = vlaneseq
  %v155 = vshrl.u32 %v154, 7
  %v156 = vsub.s32 2, %v155
  %v157 = vrot.slane %v144, %v156
  %v158 = vlaneseq
  %v159 = vshrl.u32 %v158, 7
  %v160 = vsub.s32 3, %v159
  %v161 = vrot.slane %v144, %v160
  %v198 = vunpack.c.l.b16 %v112
  %v199 = vunpack.c.h.b16 %v112
  %v200 = vunpack.c.l.b16 %v113
  %v201 = vunpack.c.h.b16 %v113
  %v202 = vunpack.c.l.b16 %v114
  %v203 = vunpack.c.h.b16 %v114
  %v204 = vunpack.c.l.b16 %v115
  %v205 = vunpack.c.h.b16 %v115
  %v206 = vunpack.c.l.b16 %v116
  %v207 = vunpack.c.h.b16 %v116
  %v208 = vunpack.c.l.b16 %v117
  %v209 = vunpack.c.h.b16 %v117
  %v210 = vunpack.c.l.b16 %v118
  %v211 = vunpack.c.h.b16 %v118
  %v212 = vunpack.c.l.b16 %v119
  %v213 = vunpack.c.h.b16 %v119
  %v214 = vunpack.c.l.b16 %v120
  %v215 = vunpack.c.h.b16 %v120
  %v216 = vunpack.c.l.b16 %v121
  %v217 = vunpack.c.h.b16 %v121
  %v218 = vunpack.c.l.b16 %v122
  %v219 = vunpack.c.h.b16 %v122
  %v220 = vunpack.c.l.b16 %v123
  %v221 = vunpack.c.h.b16 %v123
  %v222 = vunpack.c.l.b16 %v124
  %v223 = vunpack.c.h.b16 %v124
  %v224 = vunpack.c.l.b16 %v125
  %v225 = vunpack.c.h.b16 %v125
  %v226 = vunpack.c.l.b16 %v126
  %v227 = vunpack.c.h.b16 %v126
  %v228 = vunpack.c.l.b16 %v127
  %v229 = vunpack.c.h.b16 %v127
  %v230 = vunpack.c.l.b16 %v128
  %v231 = vunpack.c.h.b16 %v128
  %v232 = vunpack.c.l.b16 %v129
  %v233 = vunpack.c.h.b16 %v129
  %v234 = vunpack.c.l.b16 %v130
  %v235 = vunpack.c.h.b16 %v130
  %v236 = vunpack.c.l.b16 %v131
  %v237 = vunpack.c.h.b16 %v131
  %v238 = vunpack.c.l.b16 %v132
  %v239 = vunpack.c.h.b16 %v132
  %v240 = vunpack.c.l.b16 %v133
  %v241 = vunpack.c.h.b16 %v133
  %v242 = vunpack.c.l.b16 %v134
  %v243 = vunpack.c.h.b16 %v134
  %v244 = vunpack.c.l.b16 %v135
  %v245 = vunpack.c.h.b16 %v135
  %v246 = vunpack.c.l.b16 %v136
  %v247 = vunpack.c.h.b16 %v136
  %v248 = vunpack.c.l.b16 %v137
  %v249 = vunpack.c.h.b16 %v137
  %v250 = vunpack.c.l.b16 %v138
  %v251 = vunpack.c.h.b16 %v138
  %v252 = vunpack.c.l.b16 %v139
  %v253 = vunpack.c.h.b16 %v139
  %v254 = vunpack.c.l.b16 %v140
  %v255 = vunpack.c.h.b16 %v140
  %v256 = vunpack.c.l.b16 %v141
  %v257 = vunpack.c.h.b16 %v141
  %v258 = vunpack.c.l.b16 %v142
  %v259 = vunpack.c.h.b16 %v142
  %v260 = vunpack.c.l.b16 %v143
  %v261 = vunpack.c.h.b16 %v143
  %v262 = vpack.c.b16 %v202, %v198
  %v263 = vpack.c.b16 %v203, %v199
  %v264 = vpack.c.b16 %v204, %v200
  %v265 = vpack.c.b16 %v205, %v201
  %v266 = vpack.c.b16 %v210, %v206
  %v267 = vpack.c.b16 %v211, %v207
  %v268 = vpack.c.b16 %v212, %v208
  %v269 = vpack.c.b16 %v213, %v209
  %v270 = vpack.c.b16 %v218, %v214
  %v271 = vpack.c.b16 %v219, %v215
  %v272 = vpack.c.b16 %v220, %v216
  %v273 = vpack.c.b16 %v221, %v217
  %v274 = vpack.c.b16 %v226, %v222
  %v275 = vpack.c.b16 %v227, %v223
  %v276 = vpack.c.b16 %v228, %v224
  %v277 = vpack.c.b16 %v229, %v225
  %v278 = vpack.c.b16 %v234, %v230
  %v279 = vpack.c.b16 %v235, %v231
  %v280 = vpack.c.b16 %v236, %v232
  %v281 = vpack.c.b16 %v237, %v233
  %v282 = vpack.c.b16 %v242, %v238
  %v283 = vpack.c.b16 %v243, %v239
  %v284 = vpack.c.b16 %v244, %v240
  %v285 = vpack.c.b16 %v245, %v241
  %v286 = vpack.c.b16 %v250, %v246
  %v287 = vpack.c.b16 %v251, %v247
  %v288 = vpack.c.b16 %v252, %v248
  %v289 = vpack.c.b16 %v253, %v249
  %v290 = vpack.c.b16 %v258, %v254
  %v291 = vpack.c.b16 %v259, %v255
  %v292 = vpack.c.b16 %v260, %v256
  %v293 = vpack.c.b16 %v261, %v257
  %326 = vmatprep.subr.bf16.mxu0 %v291
  %327 = vmatpush1.bf16.msra.mxu0 %v290
  %328 = vmatprep.subr.bf16.mxu0 %v287
  %329 = vmatpush1.bf16.msra.mxu0 %v286
  %330 = vmatprep.subr.bf16.mxu0 %v283
  %331 = vmatpush1.bf16.msra.mxu0 %v282
  %332 = vmatprep.subr.bf16.mxu0 %v279
  %333 = vmatpush1.bf16.msra.mxu0 %v278
  %334 = vmatprep.subr.bf16.mxu0 %v275
  %335 = vmatpush1.bf16.msra.mxu0 %v274
  %336 = vmatprep.subr.bf16.mxu0 %v271
  %337 = vmatpush1.bf16.msra.mxu0 %v270
  %338 = vmatprep.subr.bf16.mxu0 %v267
  %339 = vmatpush1.bf16.msra.mxu0 %v266
  %340 = vmatprep.subr.bf16.mxu0 %v263
  %341 = vmatpush1.bf16.msra.mxu0 %v262
  %342 = vmatprep.subr.bf16.mxu0 0
  %343 = vmatpush2.bf16.msra.mxu0 0
  %344 = vmatprep.subr.bf16.mxu0 0
  %345 = vmatpush2.bf16.msra.mxu0 0
  %346 = vmatprep.subr.bf16.mxu0 0
  %347 = vmatpush2.bf16.msra.mxu0 0
  %348 = vmatprep.subr.bf16.mxu0 0
  %349 = vmatpush2.bf16.msra.mxu0 0
  %350 = vmatprep.subr.bf16.mxu0 0
  %351 = vmatpush2.bf16.msra.mxu0 0
  %352 = vmatprep.subr.bf16.mxu0 0
  %353 = vmatpush2.bf16.msra.mxu0 0
  %354 = vmatprep.subr.bf16.mxu0 0
  %355 = vmatpush2.bf16.msra.mxu0 0
  %356 = vmatprep.subr.bf16.mxu0 0
  %357 = vmatpush2.bf16.msra.mxu0 0
  %358 = vmatprep.mubr.bf16.mxu0 0
  %359 = vmatmul.mubr.bf16.gmra.mxu0 %v110
  %v360 = vpop.f32.mrf.mxu0
  %v361 = vadd.f32 %v149, %v360
  %v362 = vpop.f32.mrf.mxu0
  %v363 = vadd.f32 %v153, %v362
  %v364 = vpop.f32.mrf.mxu0
  %v365 = vadd.f32 %v149, %v364
  %v366 = vpop.f32.mrf.mxu0
  %v367 = vadd.f32 %v153, %v366
  %368 = vmatprep.mubr.bf16.mxu0 0
  %369 = vmatmul.mubr.bf16.gmra.mxu0 %v111
  %v370 = vpop.f32.mrf.mxu0
  %v371 = vadd.f32 %v149, %v370
  %v372 = vpop.f32.mrf.mxu0
  %v373 = vadd.f32 %v153, %v372
  %v374 = vpop.f32.mrf.mxu0
  %v375 = vadd.f32 %v149, %v374
  %v376 = vpop.f32.mrf.mxu0
  %v377 = vadd.f32 %v153, %v376
  %378 = vdwg.mxu0
  %379 = vmatprep.subr.bf16.mxu0 %v293
  %380 = vmatpush1.bf16.msra.mxu0 %v292
  %381 = vmatprep.subr.bf16.mxu0 %v289
  %382 = vmatpush1.bf16.msra.mxu0 %v288
  %383 = vmatprep.subr.bf16.mxu0 %v285
  %384 = vmatpush1.bf16.msra.mxu0 %v284
  %385 = vmatprep.subr.bf16.mxu0 %v281
  %386 = vmatpush1.bf16.msra.mxu0 %v280
  %387 = vmatprep.subr.bf16.mxu0 %v277
  %388 = vmatpush1.bf16.msra.mxu0 %v276
  %389 = vmatprep.subr.bf16.mxu0 %v273
  %390 = vmatpush1.bf16.msra.mxu0 %v272
  %391 = vmatprep.subr.bf16.mxu0 %v269
  %392 = vmatpush1.bf16.msra.mxu0 %v268
  %393 = vmatprep.subr.bf16.mxu0 %v265
  %394 = vmatpush1.bf16.msra.mxu0 %v264
  %395 = vmatprep.subr.bf16.mxu0 0
  %396 = vmatpush2.bf16.msra.mxu0 0
  %397 = vmatprep.subr.bf16.mxu0 0
  %398 = vmatpush2.bf16.msra.mxu0 0
  %399 = vmatprep.subr.bf16.mxu0 0
  %400 = vmatpush2.bf16.msra.mxu0 0
  %401 = vmatprep.subr.bf16.mxu0 0
  %402 = vmatpush2.bf16.msra.mxu0 0
  %403 = vmatprep.subr.bf16.mxu0 0
  %404 = vmatpush2.bf16.msra.mxu0 0
  %405 = vmatprep.subr.bf16.mxu0 0
  %406 = vmatpush2.bf16.msra.mxu0 0
  %407 = vmatprep.subr.bf16.mxu0 0
  %408 = vmatpush2.bf16.msra.mxu0 0
  %409 = vmatprep.subr.bf16.mxu0 0
  %410 = vmatpush2.bf16.msra.mxu0 0
  %411 = vmatprep.mubr.bf16.mxu0 0
  %412 = vmatmul.mubr.bf16.gmra.mxu0 %v110
  %v413 = vpop.f32.mrf.mxu0
  %v414 = vadd.f32 %v157, %v413
  %v415 = vpop.f32.mrf.mxu0
  %v416 = vadd.f32 %v161, %v415
  %v417 = vpop.f32.mrf.mxu0
  %v418 = vadd.f32 %v157, %v417
  %v419 = vpop.f32.mrf.mxu0
  %v420 = vadd.f32 %v161, %v419
  %421 = vmatprep.mubr.bf16.mxu0 0
  %422 = vmatmul.mubr.bf16.gmra.mxu0 %v111
  %v423 = vpop.f32.mrf.mxu0
  %v424 = vadd.f32 %v157, %v423
  %v425 = vpop.f32.mrf.mxu0
  %v426 = vadd.f32 %v161, %v425
  %v427 = vpop.f32.mrf.mxu0
  %v428 = vadd.f32 %v157, %v427
  %v429 = vpop.f32.mrf.mxu0
  %v430 = vadd.f32 %v161, %v429
  %431 = vdwg.mxu0
  %v432 = vmul.f32 %v361, 1.702
  %v433 = vmul.f32 %v363, 1.702
  %v434 = vmul.f32 %v414, 1.702
  %v435 = vmul.f32 %v416, 1.702
  %v436 = vmul.f32 %v365, 1.702
  %v437 = vmul.f32 %v367, 1.702
  %v438 = vmul.f32 %v418, 1.702
  %v439 = vmul.f32 %v420, 1.702
  %v440 = vmul.f32 %v371, 1.702
  %v441 = vmul.f32 %v373, 1.702
  %v442 = vmul.f32 %v424, 1.702
  %v443 = vmul.f32 %v426, 1.702
  %v444 = vmul.f32 %v375, 1.702
  %v445 = vmul.f32 %v377, 1.702
  %v446 = vmul.f32 %v428, 1.702
  %v447 = vmul.f32 %v430, 1.702
  %v448 = vxor.u32 %v432, 2147483648
  %v449 = vxor.u32 %v433, 2147483648
  %v450 = vxor.u32 %v434, 2147483648
  %v451 = vxor.u32 %v435, 2147483648
  %v452 = vxor.u32 %v436, 2147483648
  %v453 = vxor.u32 %v437, 2147483648
  %v454 = vxor.u32 %v438, 2147483648
  %v455 = vxor.u32 %v439, 2147483648
  %v456 = vxor.u32 %v440, 2147483648
  %v457 = vxor.u32 %v441, 2147483648
  %v458 = vxor.u32 %v442, 2147483648
  %v459 = vxor.u32 %v443, 2147483648
  %v460 = vxor.u32 %v444, 2147483648
  %v461 = vxor.u32 %v445, 2147483648
  %v462 = vxor.u32 %v446, 2147483648
  %v463 = vxor.u32 %v447, 2147483648
  %v464 = vmul.f32 %v448, 1.442695
  %v465 = vpow.pop %v464
  %v466 = vmul.f32 %v449, 1.442695
  %v467 = vpow.pop %v466
  %v468 = vmul.f32 %v450, 1.442695
  %v469 = vpow.pop %v468
  %v470 = vmul.f32 %v451, 1.442695
  %v471 = vpow.pop %v470
  %v472 = vmul.f32 %v452, 1.442695
  %v473 = vpow.pop %v472
  %v474 = vmul.f32 %v453, 1.442695
  %v475 = vpow.pop %v474
  %v476 = vmul.f32 %v454, 1.442695
  %v477 = vpow.pop %v476
  %v478 = vmul.f32 %v455, 1.442695
  %v479 = vpow.pop %v478
  %v480 = vmul.f32 %v456, 1.442695
  %v481 = vpow.pop %v480
  %v482 = vmul.f32 %v457, 1.442695
  %v483 = vpow.pop %v482
  %v484 = vmul.f32 %v458, 1.442695
  %v485 = vpow.pop %v484
  %v486 = vmul.f32 %v459, 1.442695
  %v487 = vpow.pop %v486
  %v488 = vmul.f32 %v460, 1.442695
  %v489 = vpow.pop %v488
  %v490 = vmul.f32 %v461, 1.442695
  %v491 = vpow.pop %v490
  %v492 = vmul.f32 %v462, 1.442695
  %v493 = vpow.pop %v492
  %v494 = vmul.f32 %v463, 1.442695
  %v495 = vpow.pop %v494
  %v496 = vadd.f32 %v465, 1.0
  %v497 = vadd.f32 %v467, 1.0
  %v498 = vadd.f32 %v469, 1.0
  %v499 = vadd.f32 %v471, 1.0
  %v500 = vadd.f32 %v473, 1.0
  %v501 = vadd.f32 %v475, 1.0
  %v502 = vadd.f32 %v477, 1.0
  %v503 = vadd.f32 %v479, 1.0
  %v504 = vadd.f32 %v481, 1.0
  %v505 = vadd.f32 %v483, 1.0
  %v506 = vadd.f32 %v485, 1.0
  %v507 = vadd.f32 %v487, 1.0
  %v508 = vadd.f32 %v489, 1.0
  %v509 = vadd.f32 %v491, 1.0
  %v510 = vadd.f32 %v493, 1.0
  %v511 = vadd.f32 %v495, 1.0
  %v512 = vrcp.pop %v496
  %v513 = vmul.f32 1.0, %v512
  %v514 = vrcp.pop %v497
  %v515 = vmul.f32 1.0, %v514
  %v516 = vrcp.pop %v498
  %v517 = vmul.f32 1.0, %v516
  %v518 = vrcp.pop %v499
  %v519 = vmul.f32 1.0, %v518
  %v520 = vrcp.pop %v500
  %v521 = vmul.f32 1.0, %v520
  %v522 = vrcp.pop %v501
  %v523 = vmul.f32 1.0, %v522
  %v524 = vrcp.pop %v502
  %v525 = vmul.f32 1.0, %v524
  %v526 = vrcp.pop %v503
  %v527 = vmul.f32 1.0, %v526
  %v528 = vrcp.pop %v504
  %v529 = vmul.f32 1.0, %v528
  %v530 = vrcp.pop %v505
  %v531 = vmul.f32 1.0, %v530
  %v532 = vrcp.pop %v506
  %v533 = vmul.f32 1.0, %v532
  %v534 = vrcp.pop %v507
  %v535 = vmul.f32 1.0, %v534
  %v536 = vrcp.pop %v508
  %v537 = vmul.f32 1.0, %v536
  %v538 = vrcp.pop %v509
  %v539 = vmul.f32 1.0, %v538
  %v540 = vrcp.pop %v510
  %v541 = vmul.f32 1.0, %v540
  %v542 = vrcp.pop %v511
  %v543 = vmul.f32 1.0, %v542
  %v544 = vmul.f32 %v361, %v513
  %v545 = vmul.f32 %v363, %v515
  %v546 = vmul.f32 %v414, %v517
  %v547 = vmul.f32 %v416, %v519
  %v548 = vmul.f32 %v365, %v521
  %v549 = vmul.f32 %v367, %v523
  %v550 = vmul.f32 %v418, %v525
  %v551 = vmul.f32 %v420, %v527
  %v552 = vmul.f32 %v371, %v529
  %v553 = vmul.f32 %v373, %v531
  %v554 = vmul.f32 %v424, %v533
  %v555 = vmul.f32 %v426, %v535
  %v556 = vmul.f32 %v375, %v537
  %v557 = vmul.f32 %v377, %v539
  %v558 = vmul.f32 %v428, %v541
  %v559 = vmul.f32 %v430, %v543
  %v560 = vld [vmem:[#allocation2] sm:$0xff]
  %v561 = vld [vmem:[#allocation2 + $0x8] sm:$0xff]
  %v562 = vld [vmem:[#allocation2 + $0x10] sm:$0xff]
  %v563 = vld [vmem:[#allocation2 + $0x18] sm:$0xff]
  %v564 = vpack.c.bf16 %v548, %v544
  %v565 = vpack.c.bf16 %v549, %v545
  %v566 = vpack.c.bf16 %v550, %v546
  %v567 = vpack.c.bf16 %v551, %v547
  %v568 = vpack.c.bf16 %v556, %v552
  %v569 = vpack.c.bf16 %v557, %v553
  %v570 = vpack.c.bf16 %v558, %v554
  %v571 = vpack.c.bf16 %v559, %v555
  %v572 = vld [vmem:[%s5] sm:$0xf]
  %v573 = vld [vmem:[%s5 + $0x4] sm:$0xf]
  %v574 = vld [vmem:[%s5 + $0x8] sm:$0xf]
  %v575 = vld [vmem:[%s5 + $0xc] sm:$0xf]
  %v576 = vld [vmem:[%s5 + $0x10] sm:$0xf]
  %v577 = vld [vmem:[%s5 + $0x14] sm:$0xf]
  %v578 = vld [vmem:[%s5 + $0x18] sm:$0xf]
  %v579 = vld [vmem:[%s5 + $0x1c] sm:$0xf]
  %v580 = vld [vmem:[%s5 + $0x20] sm:$0xf]
  %v581 = vld [vmem:[%s5 + $0x24] sm:$0xf]
  %v582 = vld [vmem:[%s5 + $0x28] sm:$0xf]
  %v583 = vld [vmem:[%s5 + $0x2c] sm:$0xf]
  %v584 = vld [vmem:[%s5 + $0x30] sm:$0xf]
  %v585 = vld [vmem:[%s5 + $0x34] sm:$0xf]
  %v586 = vld [vmem:[%s5 + $0x38] sm:$0xf]
  %v587 = vld [vmem:[%s5 + $0x3c] sm:$0xf]
  %v588 = vld [vmem:[%s5 + $0x40] sm:$0xf]
  %v589 = vld [vmem:[%s5 + $0x44] sm:$0xf]
  %v590 = vld [vmem:[%s5 + $0x48] sm:$0xf]
  %v591 = vld [vmem:[%s5 + $0x4c] sm:$0xf]
  %v592 = vld [vmem:[%s5 + $0x50] sm:$0xf]
  %v593 = vld [vmem:[%s5 + $0x54] sm:$0xf]
  %v594 = vld [vmem:[%s5 + $0x58] sm:$0xf]
  %v595 = vld [vmem:[%s5 + $0x5c] sm:$0xf]
  %v596 = vld [vmem:[%s5 + $0x60] sm:$0xf]
  %v597 = vld [vmem:[%s5 + $0x64] sm:$0xf]
  %v598 = vld [vmem:[%s5 + $0x68] sm:$0xf]
  %v599 = vld [vmem:[%s5 + $0x6c] sm:$0xf]
  %v600 = vld [vmem:[%s5 + $0x70] sm:$0xf]
  %v601 = vld [vmem:[%s5 + $0x74] sm:$0xf]
  %v602 = vld [vmem:[%s5 + $0x78] sm:$0xf]
  %v603 = vld [vmem:[%s5 + $0x7c] sm:$0xf]
  %v604 = vld [vmem:[%s5 + $0x80] sm:$0xf]
  %v605 = vld [vmem:[%s5 + $0x84] sm:$0xf]
  %v606 = vld [vmem:[%s5 + $0x88] sm:$0xf]
  %v607 = vld [vmem:[%s5 + $0x8c] sm:$0xf]
  %v608 = vld [vmem:[%s5 + $0x90] sm:$0xf]
  %v609 = vld [vmem:[%s5 + $0x94] sm:$0xf]
  %v610 = vld [vmem:[%s5 + $0x98] sm:$0xf]
  %v611 = vld [vmem:[%s5 + $0x9c] sm:$0xf]
  %v612 = vld [vmem:[%s5 + $0xa0] sm:$0xf]
  %v613 = vld [vmem:[%s5 + $0xa4] sm:$0xf]
  %v614 = vld [vmem:[%s5 + $0xa8] sm:$0xf]
  %v615 = vld [vmem:[%s5 + $0xac] sm:$0xf]
  %v616 = vld [vmem:[%s5 + $0xb0] sm:$0xf]
  %v617 = vld [vmem:[%s5 + $0xb4] sm:$0xf]
  %v618 = vld [vmem:[%s5 + $0xb8] sm:$0xf]
  %v619 = vld [vmem:[%s5 + $0xbc] sm:$0xf]
  %v620 = vld [vmem:[%s5 + $0xc0] sm:$0xf]
  %v621 = vld [vmem:[%s5 + $0xc4] sm:$0xf]
  %v622 = vld [vmem:[%s5 + $0xc8] sm:$0xf]
  %v623 = vld [vmem:[%s5 + $0xcc] sm:$0xf]
  %v624 = vld [vmem:[%s5 + $0xd0] sm:$0xf]
  %v625 = vld [vmem:[%s5 + $0xd4] sm:$0xf]
  %v626 = vld [vmem:[%s5 + $0xd8] sm:$0xf]
  %v627 = vld [vmem:[%s5 + $0xdc] sm:$0xf]
  %v628 = vld [vmem:[%s5 + $0xe0] sm:$0xf]
  %v629 = vld [vmem:[%s5 + $0xe4] sm:$0xf]
  %v630 = vld [vmem:[%s5 + $0xe8] sm:$0xf]
  %v631 = vld [vmem:[%s5 + $0xec] sm:$0xf]
  %v632 = vld [vmem:[%s5 + $0xf0] sm:$0xf]
  %v633 = vld [vmem:[%s5 + $0xf4] sm:$0xf]
  %v634 = vld [vmem:[%s5 + $0xf8] sm:$0xf]
  %v635 = vld [vmem:[%s5 + $0xfc] sm:$0xf]
  %v700 = vunpack.c.l.b16 %v572
  %v701 = vunpack.c.l.b16 %v573
  %v702 = vunpack.c.l.b16 %v574
  %v703 = vunpack.c.l.b16 %v575
  %v704 = vunpack.c.l.b16 %v576
  %v705 = vunpack.c.l.b16 %v577
  %v706 = vunpack.c.l.b16 %v578
  %v707 = vunpack.c.l.b16 %v579
  %v708 = vunpack.c.l.b16 %v580
  %v709 = vunpack.c.l.b16 %v581
  %v710 = vunpack.c.l.b16 %v582
  %v711 = vunpack.c.l.b16 %v583
  %v712 = vunpack.c.l.b16 %v584
  %v713 = vunpack.c.l.b16 %v585
  %v714 = vunpack.c.l.b16 %v586
  %v715 = vunpack.c.l.b16 %v587
  %v716 = vunpack.c.l.b16 %v588
  %v717 = vunpack.c.l.b16 %v589
  %v718 = vunpack.c.l.b16 %v590
  %v719 = vunpack.c.l.b16 %v591
  %v720 = vunpack.c.l.b16 %v592
  %v721 = vunpack.c.l.b16 %v593
  %v722 = vunpack.c.l.b16 %v594
  %v723 = vunpack.c.l.b16 %v595
  %v724 = vunpack.c.l.b16 %v596
  %v725 = vunpack.c.l.b16 %v597
  %v726 = vunpack.c.l.b16 %v598
  %v727 = vunpack.c.l.b16 %v599
  %v728 = vunpack.c.l.b16 %v600
  %v729 = vunpack.c.l.b16 %v601
  %v730 = vunpack.c.l.b16 %v602
  %v731 = vunpack.c.l.b16 %v603
  %v732 = vunpack.c.l.b16 %v604
  %v733 = vunpack.c.l.b16 %v605
  %v734 = vunpack.c.l.b16 %v606
  %v735 = vunpack.c.l.b16 %v607
  %v736 = vunpack.c.l.b16 %v608
  %v737 = vunpack.c.l.b16 %v609
  %v738 = vunpack.c.l.b16 %v610
  %v739 = vunpack.c.l.b16 %v611
  %v740 = vunpack.c.l.b16 %v612
  %v741 = vunpack.c.l.b16 %v613
  %v742 = vunpack.c.l.b16 %v614
  %v743 = vunpack.c.l.b16 %v615
  %v744 = vunpack.c.l.b16 %v616
  %v745 = vunpack.c.l.b16 %v617
  %v746 = vunpack.c.l.b16 %v618
  %v747 = vunpack.c.l.b16 %v619
  %v748 = vunpack.c.l.b16 %v620
  %v749 = vunpack.c.l.b16 %v621
  %v750 = vunpack.c.l.b16 %v622
  %v751 = vunpack.c.l.b16 %v623
  %v752 = vunpack.c.l.b16 %v624
  %v753 = vunpack.c.l.b16 %v625
  %v754 = vunpack.c.l.b16 %v626
  %v755 = vunpack.c.l.b16 %v627
  %v756 = vunpack.c.l.b16 %v628
  %v757 = vunpack.c.l.b16 %v629
  %v758 = vunpack.c.l.b16 %v630
  %v759 = vunpack.c.l.b16 %v631
  %v760 = vunpack.c.l.b16 %v632
  %v761 = vunpack.c.l.b16 %v633
  %v762 = vunpack.c.l.b16 %v634
  %v763 = vunpack.c.l.b16 %v635
  %v764 = vpack.c.b16 %v701, %v700
  %v765 = vpack.c.b16 %v703, %v702
  %v766 = vpack.c.b16 %v705, %v704
  %v767 = vpack.c.b16 %v707, %v706
  %v768 = vpack.c.b16 %v709, %v708
  %v769 = vpack.c.b16 %v711, %v710
  %v770 = vpack.c.b16 %v713, %v712
  %v771 = vpack.c.b16 %v715, %v714
  %v772 = vpack.c.b16 %v717, %v716
  %v773 = vpack.c.b16 %v719, %v718
  %v774 = vpack.c.b16 %v721, %v720
  %v775 = vpack.c.b16 %v723, %v722
  %v776 = vpack.c.b16 %v725, %v724
  %v777 = vpack.c.b16 %v727, %v726
  %v778 = vpack.c.b16 %v729, %v728
  %v779 = vpack.c.b16 %v731, %v730
  %v780 = vpack.c.b16 %v733, %v732
  %v781 = vpack.c.b16 %v735, %v734
  %v782 = vpack.c.b16 %v737, %v736
  %v783 = vpack.c.b16 %v739, %v738
  %v784 = vpack.c.b16 %v741, %v740
  %v785 = vpack.c.b16 %v743, %v742
  %v786 = vpack.c.b16 %v745, %v744
  %v787 = vpack.c.b16 %v747, %v746
  %v788 = vpack.c.b16 %v749, %v748
  %v789 = vpack.c.b16 %v751, %v750
  %v790 = vpack.c.b16 %v753, %v752
  %v791 = vpack.c.b16 %v755, %v754
  %v792 = vpack.c.b16 %v757, %v756
  %v793 = vpack.c.b16 %v759, %v758
  %v794 = vpack.c.b16 %v761, %v760
  %v795 = vpack.c.b16 %v763, %v762
  %828 = vmatprep.subr.bf16.mxu0 0
  %829 = vmatpush1.bf16.msra.mxu0 %v771
  %830 = vmatprep.subr.bf16.mxu0 0
  %831 = vmatpush1.bf16.msra.mxu0 %v770
  %832 = vmatprep.subr.bf16.mxu0 0
  %833 = vmatpush1.bf16.msra.mxu0 %v769
  %834 = vmatprep.subr.bf16.mxu0 0
  %835 = vmatpush1.bf16.msra.mxu0 %v768
  %836 = vmatprep.subr.bf16.mxu0 0
  %837 = vmatpush1.bf16.msra.mxu0 %v767
  %838 = vmatprep.subr.bf16.mxu0 0
  %839 = vmatpush1.bf16.msra.mxu0 %v766
  %840 = vmatprep.subr.bf16.mxu0 0
  %841 = vmatpush1.bf16.msra.mxu0 %v765
  %842 = vmatprep.subr.bf16.mxu0 0
  %843 = vmatpush1.bf16.msra.mxu0 %v764
  %844 = vmatprep.subr.bf16.mxu0 0
  %845 = vmatpush2.bf16.msra.mxu0 %v779
  %846 = vmatprep.subr.bf16.mxu0 0
  %847 = vmatpush2.bf16.msra.mxu0 %v778
  %848 = vmatprep.subr.bf16.mxu0 0
  %849 = vmatpush2.bf16.msra.mxu0 %v777
  %850 = vmatprep.subr.bf16.mxu0 0
  %851 = vmatpush2.bf16.msra.mxu0 %v776
  %852 = vmatprep.subr.bf16.mxu0 0
  %853 = vmatpush2.bf16.msra.mxu0 %v775
  %854 = vmatprep.subr.bf16.mxu0 0
  %855 = vmatpush2.bf16.msra.mxu0 %v774
  %856 = vmatprep.subr.bf16.mxu0 0
  %857 = vmatpush2.bf16.msra.mxu0 %v773
  %858 = vmatprep.subr.bf16.mxu0 0
  %859 = vmatpush2.bf16.msra.mxu0 %v772
  %860 = vmatprep.mubr.bf16.mxu0 %v565
  %861 = vmatmul.mubr.bf16.gmra.mxu0 %v564
  %v862 = vpop.f32.mrf.mxu0
  %v863 = vadd.f32 0.0, %v862
  %v864 = vpop.f32.mrf.mxu0
  %v865 = vpop.f32.mrf.mxu0
  %v866 = vadd.f32 0.0, %v865
  %v867 = vpop.f32.mrf.mxu0
  %868 = vmatprep.mubr.bf16.mxu0 %v569
  %869 = vmatmul.mubr.bf16.gmra.mxu0 %v568
  %v870 = vpop.f32.mrf.mxu0
  %v871 = vadd.f32 0.0, %v870
  %v872 = vpop.f32.mrf.mxu0
  %v873 = vpop.f32.mrf.mxu0
  %v874 = vadd.f32 0.0, %v873
  %v875 = vpop.f32.mrf.mxu0
  %876 = vdwg.mxu0
  %877 = vmatprep.subr.bf16.mxu0 0
  %878 = vmatpush1.bf16.msra.mxu0 %v787
  %879 = vmatprep.subr.bf16.mxu0 0
  %880 = vmatpush1.bf16.msra.mxu0 %v786
  %881 = vmatprep.subr.bf16.mxu0 0
  %882 = vmatpush1.bf16.msra.mxu0 %v785
  %883 = vmatprep.subr.bf16.mxu0 0
  %884 = vmatpush1.bf16.msra.mxu0 %v784
  %885 = vmatprep.subr.bf16.mxu0 0
  %886 = vmatpush1.bf16.msra.mxu0 %v783
  %887 = vmatprep.subr.bf16.mxu0 0
  %888 = vmatpush1.bf16.msra.mxu0 %v782
  %889 = vmatprep.subr.bf16.mxu0 0
  %890 = vmatpush1.bf16.msra.mxu0 %v781
  %891 = vmatprep.subr.bf16.mxu0 0
  %892 = vmatpush1.bf16.msra.mxu0 %v780
  %893 = vmatprep.subr.bf16.mxu0 0
  %894 = vmatpush2.bf16.msra.mxu0 %v795
  %895 = vmatprep.subr.bf16.mxu0 0
  %896 = vmatpush2.bf16.msra.mxu0 %v794
  %897 = vmatprep.subr.bf16.mxu0 0
  %898 = vmatpush2.bf16.msra.mxu0 %v793
  %899 = vmatprep.subr.bf16.mxu0 0
  %900 = vmatpush2.bf16.msra.mxu0 %v792
  %901 = vmatprep.subr.bf16.mxu0 0
  %902 = vmatpush2.bf16.msra.mxu0 %v791
  %903 = vmatprep.subr.bf16.mxu0 0
  %904 = vmatpush2.bf16.msra.mxu0 %v790
  %905 = vmatprep.subr.bf16.mxu0 0
  %906 = vmatpush2.bf16.msra.mxu0 %v789
  %907 = vmatprep.subr.bf16.mxu0 0
  %908 = vmatpush2.bf16.msra.mxu0 %v788
  %909 = vmatprep.mubr.bf16.mxu0 %v567
  %910 = vmatmul.mubr.bf16.gmra.mxu0 %v566
  %v911 = vpop.f32.mrf.mxu0
  %v912 = vadd.f32 %v863, %v911
  %v913 = vpop.f32.mrf.mxu0
  %v914 = vpop.f32.mrf.mxu0
  %v915 = vadd.f32 %v866, %v914
  %v916 = vpop.f32.mrf.mxu0
  %917 = vmatprep.mubr.bf16.mxu0 %v571
  %918 = vmatmul.mubr.bf16.gmra.mxu0 %v570
  %v919 = vpop.f32.mrf.mxu0
  %v920 = vadd.f32 %v871, %v919
  %v921 = vpop.f32.mrf.mxu0
  %v922 = vpop.f32.mrf.mxu0
  %v923 = vadd.f32 %v874, %v922
  %v924 = vpop.f32.mrf.mxu0
  %925 = vdwg.mxu0
  %v926 = vadd.f32 %v560, %v912
  %v927 = vadd.f32 %v561, %v915
  %v928 = vadd.f32 %v562, %v920
  %v929 = vadd.f32 %v563, %v923
  %930 = vst [vmem:[#allocation2] sm:$0xff] %v926
  %931 = vst [vmem:[#allocation2 + $0x8] sm:$0xff] %v927
  %932 = vst [vmem:[#allocation2 + $0x10] sm:$0xff] %v928
  %933 = vst [vmem:[#allocation2 + $0x18] sm:$0xff] %v929
  // Predicated region
  $region34: #{image_encoder_forward.16} parent=0 // pred_check
    %p934 = pneg %p27
  $region35: #{image_encoder_forward.16} parent=0 // pred_check_branch
    %936 = sbr.rel (%p934) target = $region37
  $region36: #{image_encoder_forward.16} parent=0 // pred_region
    %v937 = vld [vmem:[#allocation2] sm:$0xff]
    %v938 = vld [vmem:[#allocation2 + $0x8] sm:$0xff]
    %v939 = vld [vmem:[#allocation2 + $0x10] sm:$0xff]
    %v940 = vld [vmem:[#allocation2 + $0x18] sm:$0xff]
    %v941 = vadd.f32 %v39, %v937
    %v942 = vadd.f32 %v40, %v938
    %v943 = vadd.f32 %v41, %v939
    %v944 = vadd.f32 %v42, %v940
    %v945 = vld [vmem:[%s6] sm:$0x1]
    %v947 = vlaneseq
    %v948 = vshrl.u32 %v947, 7
    %v949 = vsub.s32 0, %v948
    %v950 = vrot.slane %v945, %v949
    %v952 = vadd.f32 %v941, %v950
    %v953 = vadd.f32 %v942, %v950
    %v954 = vadd.f32 %v943, %v950
    %v955 = vadd.f32 %v944, %v950
    %v956 = vpack.c.bf16 %v953, %v952
    %v957 = vpack.c.bf16 %v955, %v954
    %v960 = vunpack.c.l.b16 %v956
    %v961 = vunpack.c.h.b16 %v956
    %v962 = vunpack.c.l.b16 %v957
    %v963 = vunpack.c.h.b16 %v957
    %v964 = vpack.c.b16 %v960, %v960
    %v965 = vpack.c.b16 %v961, %v961
    %v966 = vpack.c.b16 %v962, %v962
    %v967 = vpack.c.b16 %v963, %v963
    %972 = vst [vmem:[%s7] sm:$0xf] %v964
    %973 = vst [vmem:[%s7 + $0x4] sm:$0xf] %v965
    %974 = vst [vmem:[%s7 + $0x8] sm:$0xf] %v966
    %975 = vst [vmem:[%s7 + $0xc] sm:$0xf] %v967
  $region37: #{image_encoder_forward.16} parent=0 // pred_fallthru
    _
  // Predicated region
  $region38: #{image_encoder_forward.16} parent=0 // pred_check
    _
  $region39: #{image_encoder_forward.16} parent=0 // pred_check_branch
    %977 = sbr.rel (0) target = $region41
  $region40: #{image_encoder_forward.16} parent=0 // pred_region
    _
  $region41: #{image_encoder_forward.16} parent=0 // pred_fallthru
    _
  // Predicated region
  $region42: #{image_encoder_forward.16} parent=0 // pred_check
    _
  $region43: #{image_encoder_forward.16} parent=0 // pred_check_branch
    %979 = sbr.rel (0) target = $region45
  $region44: #{image_encoder_forward.16} parent=0 // pred_region
    _
  $region45: #{image_encoder_forward.16} parent=0 // pred_fallthru
    _

</llo_original>
